<compile_context>
chip_gen: v7x
topology: tpu7x:2x2x1
jax: 0.10.0
libtpu: 0.0.40
codegen_flags: <defaults>
</compile_context>

<pallas_src>
import functools

import jax
import jax.numpy as jnp
from jax import lax
from jax.experimental import pallas as pl
from jax.experimental.pallas import tpu as pltpu


def _round_up(x, m):
    return ((x + m - 1) // m) * m


def _pad_last(a, target):
    pad = target - a.shape[-1]
    if pad == 0:
        return a
    return jnp.pad(a, [(0, 0)] * (a.ndim - 1) + [(0, pad)])


# ---------------------------------------------------------------------------
# Kernel 1: tiled fused matmul   y = act((x @ w) * scale + bias)
#   (1x1 Conv + folded BN + optional ReLU / bias)
# ---------------------------------------------------------------------------

def _matmul_scale_bias_kernel(x_ref, w_ref, s_ref, b_ref, o_ref, acc_ref, *, relu):
    k = pl.program_id(2)

    @pl.when(k == 0)
    def _init():
        acc_ref[...] = jnp.zeros_like(acc_ref)

    acc_ref[...] += jnp.dot(x_ref[...], w_ref[...],
                            preferred_element_type=jnp.float32)

    # Epilogue (scale/bias/ReLU) only on the last K step: inner loop stays
    # purely MXU-bound.
    @pl.when(k == pl.num_programs(2) - 1)
    def _epilogue():
        acc = acc_ref[...] * s_ref[...] + b_ref[...]
        if relu:
            acc = jnp.maximum(acc, 0.0)
        o_ref[...] = acc.astype(o_ref.dtype)


def fused_matmul(x, w, scale, bias, *, relu=True, out_dtype=jnp.float32,
                 tm_max=256, tn_max=256, tk_max=512,
                 compute_dtype=jnp.bfloat16):
    """x: (M, K), w: (K, N), scale/bias: (1, N) -> (M, N)."""
    M, K = x.shape
    N = w.shape[1]
    tm = _round_up(min(tm_max, M), 8)
    tn = _round_up(min(tn_max, N), 128)
    tk = _round_up(min(tk_max, K), 128)
    Mp, Np, Kp = _round_up(M, tm), _round_up(N, tn), _round_up(K, tk)

    xp = jnp.pad(x, ((0, Mp - M), (0, Kp - K))).astype(compute_dtype)
    wp = jnp.pad(w, ((0, Kp - K), (0, Np - N))).astype(compute_dtype)
    sp = jnp.pad(scale.astype(jnp.float32), ((0, 0), (0, Np - N)))
    bp = jnp.pad(bias.astype(jnp.float32), ((0, 0), (0, Np - N)))

    out = pl.pallas_call(
        functools.partial(_matmul_scale_bias_kernel, relu=relu),
        out_shape=jax.ShapeDtypeStruct((Mp, Np), out_dtype),
        grid=(Mp // tm, Np // tn, Kp // tk),
        in_specs=[
            pl.BlockSpec((tm, tk), lambda i, j, k: (i, k)),
            pl.BlockSpec((tk, tn), lambda i, j, k: (k, j)),
            pl.BlockSpec((1, tn), lambda i, j, k: (0, j)),
            pl.BlockSpec((1, tn), lambda i, j, k: (0, j)),
        ],
        out_specs=pl.BlockSpec((tm, tn), lambda i, j, k: (i, j)),
        scratch_shapes=[pltpu.VMEM((tm, tn), jnp.float32)],
        compiler_params=pltpu.CompilerParams(
            dimension_semantics=("parallel", "parallel", "arbitrary")),
    )(xp, wp, sp, bp)
    return out[:M, :N]


# ---------------------------------------------------------------------------
# Kernel 2: fused PSA branch attention (both branches batched on grid axis 0)
#   hidden = ReLU((red_q @ W0) * s0 + b0)        (attention_0: 1x1+BN+ReLU)
#   logits = hidden @ W1                         (attention_1: 1x1, no bias)
#   p      = softmax(logits, axis=-1)            (== torch softmax over dim=1)
#   out    = p @ red_full                        (== torch.bmm, spatial-major)
# Tiled over query rows; (N, N) logits never touch HBM.
# ---------------------------------------------------------------------------

def _psa_branch_kernel(redq_ref, w0_ref, s0_ref, b0_ref, w1_ref, redf_ref, o_ref):
    redq = redq_ref[0, 0]                                           # (tq, Cp)
    h = jnp.dot(redq, w0_ref[0], preferred_element_type=jnp.float32)
    h = jnp.maximum(h * s0_ref[0] + b0_ref[0], 0.0)
    logits = jnp.dot(h.astype(w1_ref.dtype), w1_ref[0],
                     preferred_element_type=jnp.float32)            # (tq, N)
    m = jnp.max(logits, axis=-1, keepdims=True)
    e = jnp.exp(logits - m)
    inv = pl.reciprocal(jnp.sum(e, axis=-1, keepdims=True), approx=True)
    p = (e * inv).astype(redf_ref.dtype)
    o_ref[0, 0] = jnp.dot(p, redf_ref[0, 0],
                          preferred_element_type=jnp.float32).astype(o_ref.dtype)


def psa_branch_attention(red_stacked, w0, s0, b0, w1, *, tq_max=256):
    """red_stacked: (2, B, N, C); w0: (2, C, C); s0/b0: (2, 1, C);
    w1: (2, C, N_attn) -> (2, B, N, C) float32."""
    R, B, N, C = red_stacked.shape
    n_attn = w1.shape[-1]

    # Pad the inner-channel dim to a multiple of 128 (lane-dense stores);
    # padded channels stay exactly zero through the whole chain.
    Cp = _round_up(C, 128)
    red_p = _pad_last(red_stacked, Cp).astype(jnp.bfloat16)         # (2,B,N,Cp)
    w0_p = jnp.pad(w0, ((0, 0), (0, Cp - C), (0, Cp - C))).astype(jnp.bfloat16)
    s0_p = _pad_last(s0.astype(jnp.float32), Cp)
    b0_p = _pad_last(b0.astype(jnp.float32), Cp)
    w1_p = jnp.pad(w1, ((0, 0), (0, Cp - C), (0, 0))).astype(jnp.bfloat16)

    tq = _round_up(min(tq_max, N), 8)
    Nq = _round_up(N, tq)
    redq = red_p if Nq == N else jnp.pad(
        red_p, ((0, 0), (0, 0), (0, Nq - N), (0, 0)))

    out = pl.pallas_call(
        _psa_branch_kernel,
        out_shape=jax.ShapeDtypeStruct((R, B, Nq, Cp), jnp.float32),
        grid=(R, B, Nq // tq),
        in_specs=[
            pl.BlockSpec((1, 1, tq, Cp), lambda r, b, q: (r, b, q, 0)),
            pl.BlockSpec((1, Cp, Cp), lambda r, b, q: (r, 0, 0)),
            pl.BlockSpec((1, 1, Cp), lambda r, b, q: (r, 0, 0)),
            pl.BlockSpec((1, 1, Cp), lambda r, b, q: (r, 0, 0)),
            pl.BlockSpec((1, Cp, n_attn), lambda r, b, q: (r, 0, 0)),
            pl.BlockSpec((1, 1, N, Cp), lambda r, b, q: (r, b, 0, 0)),  # resident
        ],
        out_specs=pl.BlockSpec((1, 1, tq, Cp), lambda r, b, q: (r, b, q, 0)),
        compiler_params=pltpu.CompilerParams(
            dimension_semantics=("parallel", "parallel", "parallel")),
    )(redq, w0_p, s0_p, b0_p, w1_p, red_p)
    return out[:, :, :N, :C]


# ---------------------------------------------------------------------------
# Kernel 3: 3x3 Conv + folded BN + ReLU, NHWC, stride 1, pad 1.
# No im2col: the 9 taps are accumulated in-kernel from the spatially padded
# map; the input-channel axis is the tiled reduction grid axis.
# ---------------------------------------------------------------------------

def _conv3x3_kernel(x_ref, w_ref, s_ref, b_ref, o_ref, acc_ref, *, relu):
    k = pl.program_id(1)
    H, W = o_ref.shape[1], o_ref.shape[2]

    @pl.when(k == 0)
    def _init():
        acc_ref[...] = jnp.zeros_like(acc_ref)

    xb = x_ref[0]                                    # (H+2, W+2, tkc)
    total = None
    for dh in range(3):
        for dw in range(3):
            contrib = lax.dot_general(
                xb[dh:dh + H, dw:dw + W, :], w_ref[dh, dw],
                (((2,), (0,)), ((), ())),
                preferred_element_type=jnp.float32)  # (H, W, Coutp)
            total = contrib if total is None else total + contrib
    acc_ref[...] += total

    @pl.when(k == pl.num_programs(1) - 1)
    def _epilogue():
        acc = acc_ref[...] * s_ref[0] + b_ref[0]
        if relu:
            acc = jnp.maximum(acc, 0.0)
        o_ref[0] = acc.astype(o_ref.dtype)


def conv3x3_bn_relu(x_nhwc, w, scale, bias, *, relu=True, tkc_max=512,
                    out_dtype=jnp.float32):
    """x: (B, H, W, Cin), w: (3, 3, Cin, Cout), scale/bias: (1, Cout)."""
    B, H, W, Cin = x_nhwc.shape
    Cout = w.shape[-1]
    tkc = _round_up(min(tkc_max, Cin), 128)
    Cinp = _round_up(Cin, tkc)
    Coutp = _round_up(Cout, 128)

    xp = jnp.pad(x_nhwc, ((0, 0), (1, 1), (1, 1),
                          (0, Cinp - Cin))).astype(jnp.bfloat16)
    wp = jnp.pad(w, ((0, 0), (0, 0), (0, Cinp - Cin),
                     (0, Coutp - Cout))).astype(jnp.bfloat16)
    sp = jnp.pad(scale.astype(jnp.float32), ((0, 0), (0, Coutp - Cout)))
    bp = jnp.pad(bias.astype(jnp.float32), ((0, 0), (0, Coutp - Cout)))
    Kc = Cinp // tkc

    out = pl.pallas_call(
        functools.partial(_conv3x3_kernel, relu=relu),
        out_shape=jax.ShapeDtypeStruct((B, H, W, Coutp), out_dtype),
        grid=(B, Kc),
        in_specs=[
            pl.BlockSpec((1, H + 2, W + 2, tkc), lambda b, k: (b, 0, 0, k)),
            pl.BlockSpec((3, 3, tkc, Coutp), lambda b, k: (0, 0, k, 0)),
            pl.BlockSpec((1, Coutp), lambda b, k: (0, 0)),
            pl.BlockSpec((1, Coutp), lambda b, k: (0, 0)),
        ],
        out_specs=pl.BlockSpec((1, H, W, Coutp), lambda b, k: (b, 0, 0, 0)),
        scratch_shapes=[pltpu.VMEM((H, W, Coutp), jnp.float32)],
        compiler_params=pltpu.CompilerParams(
            dimension_semantics=("parallel", "arbitrary")),
    )(xp, wp, sp, bp)
    return out[..., :Cout]


# ---------------------------------------------------------------------------
# Parameter construction (deterministic synthetic; BN folded to scale/bias)
# ---------------------------------------------------------------------------

def _fold_bn(gamma, beta, mean, var, eps=1e-5):
    scale = gamma / jnp.sqrt(var + eps)
    bias = beta - mean * scale
    return scale[None, :], bias[None, :]


def init_params(key, fc_dim, inner, n_attn, out_planes):
    kit = iter(jax.random.split(key, 48))

    def dense(k_in, k_out):
        return jax.random.normal(next(kit), (k_in, k_out),
                                 jnp.float32) / jnp.sqrt(jnp.float32(k_in))

    def bn(k_out):
        gamma = 1.0 + 0.1 * jax.random.normal(next(kit), (k_out,), jnp.float32)
        beta = 0.1 * jax.random.normal(next(kit), (k_out,), jnp.float32)
        mean = 0.1 * jax.random.normal(next(kit), (k_out,), jnp.float32)
        var = 1.0 + 0.1 * jnp.abs(jax.random.normal(next(kit), (k_out,), jnp.float32))
        return _fold_bn(gamma, beta, mean, var)

    mid = inner                         # stand-in for 512 in conv6's first layer
    conv6_in = fc_dim + 4 * inner

    # collect/distribute reductions concatenated along output channels.
    red_w = jnp.concatenate([dense(fc_dim, inner), dense(fc_dim, inner)], axis=1)
    sc, bc = bn(inner)
    sd, bd = bn(inner)
    red_s = jnp.concatenate([sc, sd], axis=1)
    red_b = jnp.concatenate([bc, bd], axis=1)

    # attention_0 / attention_1 stacked over the branch axis (collect, distribute).
    att0_w = jnp.stack([dense(inner, inner), dense(inner, inner)], axis=0)
    s0c, b0c = bn(inner)
    s0d, b0d = bn(inner)
    att0_s = jnp.stack([s0c, s0d], axis=0)
    att0_b = jnp.stack([b0c, b0d], axis=0)
    att1_w = jnp.stack([dense(inner, n_attn), dense(inner, n_attn)], axis=0)

    proj_w = dense(2 * inner, 4 * inner)
    proj_s, proj_b = bn(4 * inner)

    c60_w = jax.random.normal(next(kit), (3, 3, conv6_in, mid),
                              jnp.float32) / jnp.sqrt(jnp.float32(9 * conv6_in))
    c60_s, c60_b = bn(mid)

    c62_w = dense(mid, out_planes)
    c62_s = jnp.ones((1, out_planes), jnp.float32)
    c62_b = 0.1 * jax.random.normal(next(kit), (1, out_planes), jnp.float32)

    return {
        "reduction": {"w": red_w, "scale": red_s, "bias": red_b},
        "att0_w": att0_w, "att0_scale": att0_s, "att0_bias": att0_b,
        "att1_w": att1_w,
        "proj": {"w": proj_w, "scale": proj_s, "bias": proj_b},
        "conv6_0": {"w": c60_w, "scale": c60_s, "bias": c60_b},
        "conv6_2": {"w": c62_w, "scale": c62_s, "bias": c62_b},
    }


# ---------------------------------------------------------------------------
# Forward pass
# ---------------------------------------------------------------------------

def pointwise_spatial_attention(x_nchw, params):
    B, c_in, H, W = x_nchw.shape
    N = H * W
    inner = params["att0_w"].shape[-1]

    # NCHW -> channel-last rows, same spatial order (h*W + w) as .view(b,c,-1).
    x_bnc = jnp.transpose(x_nchw, (0, 2, 3, 1)).reshape(B, N, c_in)
    xf = x_bnc.reshape(B * N, c_in)

    # ---- both branch reductions in one lane-dense matmul [collect|distribute]
    red = fused_matmul(xf, params["reduction"]["w"], params["reduction"]["scale"],
                       params["reduction"]["bias"], relu=True,
                       out_dtype=jnp.bfloat16)                    # (BN, 2*inner)
    red_stacked = jnp.moveaxis(red.reshape(B, N, 2, inner), 2, 0)  # (2, B, N, inner)

    # ---- fused attention_0 + attention_1 + softmax + bmm (both branches) ----
    fm_stacked = psa_branch_attention(
        red_stacked, params["att0_w"], params["att0_scale"],
        params["att0_bias"], params["att1_w"])                    # (2, B, N, inner)

    # ---- projection of concatenated PSA feature map ----
    psa = jnp.concatenate([fm_stacked[0], fm_stacked[1]], axis=-1)  # (B, N, 2*inner)
    psa = fused_matmul(psa.reshape(B * N, 2 * inner),
                       params["proj"]["w"], params["proj"]["scale"],
                       params["proj"]["bias"], relu=True)           # (BN, 4*inner)

    # ---- conv6: concat(x, psa) -> 3x3 Conv+BN+ReLU -> Dropout -> 1x1 Conv ----
    fm = jnp.concatenate([xf, psa], axis=-1).reshape(B, H, W, c_in + 4 * inner)
    mid = conv3x3_bn_relu(fm, params["conv6_0"]["w"], params["conv6_0"]["scale"],
                          params["conv6_0"]["bias"], relu=True)     # (B, H, W, mid)
    # TODO(synk): nn.Dropout2d(0.1) is identity in eval mode; omitted here.
    out = fused_matmul(mid.reshape(B * N, -1), params["conv6_2"]["w"],
                       params["conv6_2"]["scale"], params["conv6_2"]["bias"],
                       relu=False)                                  # (BN, out_planes)

    out_planes = out.shape[-1]
    return jnp.transpose(out.reshape(B, H, W, out_planes), (0, 3, 1, 2))


# ---------------------------------------------------------------------------

if __name__ == "__main__":
    B, fc_dim, H, W = 2, 32, 8, 8     # small stand-ins for (4096, 60, 60)
    inner = 32                        # stand-in for inner_channel = 512
    out_planes = 16
    N = H * W                         # attention channels must equal H*W

    key = jax.random.PRNGKey(0)
    kx, kp = jax.random.split(key)
    x = jax.random.normal(kx, (B, fc_dim, H, W), jnp.float32)
    params = init_params(kp, fc_dim, inner, N, out_planes)

    fwd = jax.jit(pointwise_spatial_attention)
    out = jax.block_until_ready(fwd(x, params))

    assert out.shape == (B, out_planes, H, W), out.shape
    assert bool(jnp.all(jnp.isfinite(out)))
    print("KERNEL_OK")
</pallas_src>

<mosaic_0001>
module attributes {stable_mosaic.version = 11 : i64} {
  func.func @_matmul_scale_bias_kernel(%arg0: i32, %arg1: i32, %arg2: i32, %arg3: memref<128x128xbf16, #tpu.memory_space<vmem>>, %arg4: memref<128x128xbf16, #tpu.memory_space<vmem>>, %arg5: memref<1x128xf32, #tpu.memory_space<vmem>>, %arg6: memref<1x128xf32, #tpu.memory_space<vmem>>, %arg7: memref<128x128xbf16, #tpu.memory_space<vmem>>, %arg8: memref<128x128xf32, #tpu.memory_space<vmem>>) attributes {dimension_semantics = [#tpu.dimension_semantics<parallel>, #tpu.dimension_semantics<parallel>, #tpu.dimension_semantics<arbitrary>], iteration_bounds = array<i64: 1, 1, 1>, scalar_prefetch = 0 : i64, scratch_operands = 1 : i64, tpu.core_type = #tpu.core_type<tc>, window_params = [{transform_indices = @transform_0, window_bounds = array<i64: 128, 128>}, {transform_indices = @transform_1, window_bounds = array<i64: 128, 128>}, {transform_indices = @transform_2, window_bounds = array<i64: 1, 128>}, {transform_indices = @transform_3, window_bounds = array<i64: 1, 128>}, {transform_indices = @transform_4, window_bounds = array<i64: 128, 128>}]} {
    %c0_i32 = arith.constant 0 : i32
    %0 = arith.cmpi eq, %arg2, %c0_i32 : i32
    %1 = arith.extui %0 : i1 to i32
    %c0_i32_0 = arith.constant 0 : i32
    %2 = arith.cmpi ne, %1, %c0_i32_0 : i32
    scf.if %2 {
      %cst_10 = arith.constant 0.000000e+00 : f32
      %12 = vector.broadcast %cst_10 : f32 to vector<128x128xf32>
      %c0_11 = arith.constant 0 : index
      %c0_12 = arith.constant 0 : index
      %13 = vector.load %arg8[%c0_11, %c0_12] : memref<128x128xf32, #tpu.memory_space<vmem>>, vector<128x128xf32>
      tpu.vector_store %arg8[%c0_11, %c0_12], %12 {strides = array<i32>} : memref<128x128xf32, #tpu.memory_space<vmem>>, vector<128x128xf32>,
    } else {
    }
    %c0 = arith.constant 0 : index
    %c0_1 = arith.constant 0 : index
    %3 = vector.load %arg8[%c0, %c0_1] : memref<128x128xf32, #tpu.memory_space<vmem>>, vector<128x128xf32>
    %c0_2 = arith.constant 0 : index
    %c0_3 = arith.constant 0 : index
    %4 = vector.load %arg3[%c0_2, %c0_3] : memref<128x128xbf16, #tpu.memory_space<vmem>>, vector<128x128xbf16>
    %c0_4 = arith.constant 0 : index
    %c0_5 = arith.constant 0 : index
    %5 = vector.load %arg4[%c0_4, %c0_5] : memref<128x128xbf16, #tpu.memory_space<vmem>>, vector<128x128xbf16>
    %cst = arith.constant dense<0.000000e+00> : vector<128x128xf32>
    %6 = tpu.matmul %4, %5, %cst {dimension_numbers = #tpu.dot_dimension_numbers<[1], [0], [0], [1], [0, 0, 1, 1], [], []>} : vector<128x128xbf16>, vector<128x128xbf16>, vector<128x128xf32> -> vector<128x128xf32>
    %7 = arith.addf %3, %6 : vector<128x128xf32>
    %c0_6 = arith.constant 0 : index
    %c0_7 = arith.constant 0 : index
    %8 = vector.load %arg8[%c0_6, %c0_7] : memref<128x128xf32, #tpu.memory_space<vmem>>, vector<128x128xf32>
    tpu.vector_store %arg8[%c0_6, %c0_7], %7 {strides = array<i32>} : memref<128x128xf32, #tpu.memory_space<vmem>>, vector<128x128xf32>,
    %c0_i32_8 = arith.constant 0 : i32
    %9 = arith.cmpi eq, %arg2, %c0_i32_8 : i32
    %10 = arith.extui %9 : i1 to i32
    %c0_i32_9 = arith.constant 0 : i32
    %11 = arith.cmpi ne, %10, %c0_i32_9 : i32
    scf.if %11 {
      %c0_10 = arith.constant 0 : index
      %c0_11 = arith.constant 0 : index
      %12 = vector.load %arg8[%c0_10, %c0_11] : memref<128x128xf32, #tpu.memory_space<vmem>>, vector<128x128xf32>
      %c0_12 = arith.constant 0 : index
      %c0_13 = arith.constant 0 : index
      %13 = vector.load %arg5[%c0_12, %c0_13] : memref<1x128xf32, #tpu.memory_space<vmem>>, vector<1x128xf32>
      %14 = vector.broadcast %13 : vector<1x128xf32> to vector<128x128xf32>
      %15 = arith.mulf %12, %14 : vector<128x128xf32>
      %c0_14 = arith.constant 0 : index
      %c0_15 = arith.constant 0 : index
      %16 = vector.load %arg6[%c0_14, %c0_15] : memref<1x128xf32, #tpu.memory_space<vmem>>, vector<1x128xf32>
      %17 = vector.broadcast %16 : vector<1x128xf32> to vector<128x128xf32>
      %18 = arith.addf %15, %17 : vector<128x128xf32>
      %cst_16 = arith.constant 0.000000e+00 : f32
      %19 = vector.broadcast %cst_16 : f32 to vector<128x128xf32>
      %20 = arith.maximumf %18, %19 : vector<128x128xf32>
      %21 = arith.truncf %20 : vector<128x128xf32> to vector<128x128xbf16>
      %c0_17 = arith.constant 0 : index
      %c0_18 = arith.constant 0 : index
      %22 = vector.load %arg7[%c0_17, %c0_18] : memref<128x128xbf16, #tpu.memory_space<vmem>>, vector<128x128xbf16>
      tpu.vector_store %arg7[%c0_17, %c0_18], %21 {strides = array<i32>} : memref<128x128xbf16, #tpu.memory_space<vmem>>, vector<128x128xbf16>,
    } else {
    }
    return
  }
  func.func @transform_0(%arg0: i32, %arg1: i32, %arg2: i32) -> (i32, i32) {
    %c0_i32 = arith.constant 0 : i32
    return %arg0, %arg2 : i32, i32
  }
  func.func @transform_1(%arg0: i32, %arg1: i32, %arg2: i32) -> (i32, i32) {
    %c0_i32 = arith.constant 0 : i32
    return %arg2, %arg1 : i32, i32
  }
  func.func @transform_2(%arg0: i32, %arg1: i32, %arg2: i32) -> (i32, i32) {
    %c0_i32 = arith.constant 0 : i32
    %c0_i32_0 = arith.constant 0 : i32
    return %c0_i32, %arg1 : i32, i32
  }
  func.func @transform_3(%arg0: i32, %arg1: i32, %arg2: i32) -> (i32, i32) {
    %c0_i32 = arith.constant 0 : i32
    %c0_i32_0 = arith.constant 0 : i32
    return %c0_i32, %arg1 : i32, i32
  }
  func.func @transform_4(%arg0: i32, %arg1: i32, %arg2: i32) -> (i32, i32) {
    %c0_i32 = arith.constant 0 : i32
    return %arg0, %arg1 : i32, i32
  }
}

module attributes {stable_mosaic.version = 11 : i64} {
  func.func @_psa_branch_kernel(%arg0: i32, %arg1: i32, %arg2: i32, %arg3: memref<1x1x64x128xbf16, #tpu.memory_space<vmem>>, %arg4: memref<1x128x128xbf16, #tpu.memory_space<vmem>>, %arg5: memref<1x1x128xf32, #tpu.memory_space<vmem>>, %arg6: memref<1x1x128xf32, #tpu.memory_space<vmem>>, %arg7: memref<1x128x64xbf16, #tpu.memory_space<vmem>>, %arg8: memref<1x1x64x128xbf16, #tpu.memory_space<vmem>>, %arg9: memref<1x1x64x128xf32, #tpu.memory_space<vmem>>) attributes {dimension_semantics = [#tpu.dimension_semantics<parallel>, #tpu.dimension_semantics<parallel>, #tpu.dimension_semantics<parallel>], iteration_bounds = array<i64: 2, 2, 1>, scalar_prefetch = 0 : i64, scratch_operands = 0 : i64, tpu.core_type = #tpu.core_type<tc>, window_params = [{transform_indices = @transform_0, window_bounds = array<i64: 1, 1, 64, 128>}, {transform_indices = @transform_1, window_bounds = array<i64: 1, 128, 128>}, {transform_indices = @transform_2, window_bounds = array<i64: 1, 1, 128>}, {transform_indices = @transform_3, window_bounds = array<i64: 1, 1, 128>}, {transform_indices = @transform_4, window_bounds = array<i64: 1, 128, 64>}, {transform_indices = @transform_5, window_bounds = array<i64: 1, 1, 64, 128>}, {transform_indices = @transform_6, window_bounds = array<i64: 1, 1, 64, 128>}]} {
    %c0 = arith.constant 0 : index
    %c0_0 = arith.constant 0 : index
    %c0_1 = arith.constant 0 : index
    %c0_2 = arith.constant 0 : index
    %0 = vector.load %arg3[%c0, %c0_0, %c0_1, %c0_2] : memref<1x1x64x128xbf16, #tpu.memory_space<vmem>>, vector<1x1x64x128xbf16>
    %1 = vector.shape_cast %0 : vector<1x1x64x128xbf16> to vector<64x128xbf16>
    %c0_3 = arith.constant 0 : index
    %c0_4 = arith.constant 0 : index
    %c0_5 = arith.constant 0 : index
    %2 = vector.load %arg4[%c0_3, %c0_4, %c0_5] : memref<1x128x128xbf16, #tpu.memory_space<vmem>>, vector<1x128x128xbf16>
    %3 = vector.shape_cast %2 : vector<1x128x128xbf16> to vector<128x128xbf16>
    %cst = arith.constant dense<0.000000e+00> : vector<64x128xf32>
    %4 = tpu.matmul %1, %3, %cst {dimension_numbers = #tpu.dot_dimension_numbers<[1], [0], [0], [1], [0, 0, 1, 1], [], []>} : vector<64x128xbf16>, vector<128x128xbf16>, vector<64x128xf32> -> vector<64x128xf32>
    %c0_6 = arith.constant 0 : index
    %c0_7 = arith.constant 0 : index
    %c0_8 = arith.constant 0 : index
    %5 = vector.load %arg5[%c0_6, %c0_7, %c0_8] : memref<1x1x128xf32, #tpu.memory_space<vmem>>, vector<1x1x128xf32>
    %6 = vector.shape_cast %5 : vector<1x1x128xf32> to vector<1x128xf32>
    %7 = vector.broadcast %6 : vector<1x128xf32> to vector<64x128xf32>
    %8 = arith.mulf %4, %7 : vector<64x128xf32>
    %c0_9 = arith.constant 0 : index
    %c0_10 = arith.constant 0 : index
    %c0_11 = arith.constant 0 : index
    %9 = vector.load %arg6[%c0_9, %c0_10, %c0_11] : memref<1x1x128xf32, #tpu.memory_space<vmem>>, vector<1x1x128xf32>
    %10 = vector.shape_cast %9 : vector<1x1x128xf32> to vector<1x128xf32>
    %11 = vector.broadcast %10 : vector<1x128xf32> to vector<64x128xf32>
    %12 = arith.addf %8, %11 : vector<64x128xf32>
    %cst_12 = arith.constant 0.000000e+00 : f32
    %13 = vector.broadcast %cst_12 : f32 to vector<64x128xf32>
    %14 = arith.maximumf %12, %13 : vector<64x128xf32>
    %15 = arith.truncf %14 : vector<64x128xf32> to vector<64x128xbf16>
    %c0_13 = arith.constant 0 : index
    %c0_14 = arith.constant 0 : index
    %c0_15 = arith.constant 0 : index
    %16 = vector.load %arg7[%c0_13, %c0_14, %c0_15] : memref<1x128x64xbf16, #tpu.memory_space<vmem>>, vector<1x128x64xbf16>
    %17 = vector.shape_cast %16 : vector<1x128x64xbf16> to vector<128x64xbf16>
    %cst_16 = arith.constant dense<0.000000e+00> : vector<64x64xf32>
    %18 = tpu.matmul %15, %17, %cst_16 {dimension_numbers = #tpu.dot_dimension_numbers<[1], [0], [0], [1], [0, 0, 1, 1], [], []>} : vector<64x128xbf16>, vector<128x64xbf16>, vector<64x64xf32> -> vector<64x64xf32>
    %cst_17 = arith.constant dense<0xFF800000> : vector<64xf32>
    %19 = vector.multi_reduction <maximumf>, %18, %cst_17 [1] : vector<64x64xf32> to vector<64xf32>
    %20 = vector.shape_cast %19 : vector<64xf32> to vector<64x1xf32>
    %21 = vector.broadcast %20 : vector<64x1xf32> to vector<64x64xf32>
    %22 = arith.subf %18, %21 : vector<64x64xf32>
    %23 = math.exp %22 : vector<64x64xf32>
    %cst_18 = arith.constant dense<0.000000e+00> : vector<64xf32>
    %24 = vector.multi_reduction <add>, %23, %cst_18 [1] : vector<64x64xf32> to vector<64xf32>
    %25 = vector.shape_cast %24 : vector<64xf32> to vector<64x1xf32>
    %26 = tpu.reciprocal %25 {approx = true} : vector<64x1xf32> -> vector<64x1xf32>
    %27 = vector.broadcast %26 : vector<64x1xf32> to vector<64x64xf32>
    %28 = arith.mulf %23, %27 : vector<64x64xf32>
    %29 = arith.truncf %28 : vector<64x64xf32> to vector<64x64xbf16>
    %c0_19 = arith.constant 0 : index
    %c0_20 = arith.constant 0 : index
    %c0_21 = arith.constant 0 : index
    %c0_22 = arith.constant 0 : index
    %30 = vector.load %arg8[%c0_19, %c0_20, %c0_21, %c0_22] : memref<1x1x64x128xbf16, #tpu.memory_space<vmem>>, vector<1x1x64x128xbf16>
    %31 = vector.shape_cast %30 : vector<1x1x64x128xbf16> to vector<64x128xbf16>
    %cst_23 = arith.constant dense<0.000000e+00> : vector<64x128xf32>
    %32 = tpu.matmul %29, %31, %cst_23 {dimension_numbers = #tpu.dot_dimension_numbers<[1], [0], [0], [1], [0, 0, 1, 1], [], []>} : vector<64x64xbf16>, vector<64x128xbf16>, vector<64x128xf32> -> vector<64x128xf32>
    %c0_24 = arith.constant 0 : index
    %c0_25 = arith.constant 0 : index
    %c0_26 = arith.constant 0 : index
    %c0_27 = arith.constant 0 : index
    %33 = vector.load %arg9[%c0_24, %c0_25, %c0_26, %c0_27] : memref<1x1x64x128xf32, #tpu.memory_space<vmem>>, vector<1x1x64x128xf32>
    %34 = vector.shape_cast %33 : vector<1x1x64x128xf32> to vector<64x128xf32>
    %35 = vector.shape_cast %32 : vector<64x128xf32> to vector<1x1x64x128xf32>
    tpu.vector_store %arg9[%c0_24, %c0_25, %c0_26, %c0_27], %35 {strides = array<i32>} : memref<1x1x64x128xf32, #tpu.memory_space<vmem>>, vector<1x1x64x128xf32>,
    return
  }
  func.func @transform_0(%arg0: i32, %arg1: i32, %arg2: i32) -> (i32, i32, i32, i32) {
    %c0_i32 = arith.constant 0 : i32
    %c0_i32_0 = arith.constant 0 : i32
    return %arg0, %arg1, %arg2, %c0_i32 : i32, i32, i32, i32
  }
  func.func @transform_1(%arg0: i32, %arg1: i32, %arg2: i32) -> (i32, i32, i32) {
    %c0_i32 = arith.constant 0 : i32
    %c0_i32_0 = arith.constant 0 : i32
    %c0_i32_1 = arith.constant 0 : i32
    return %arg0, %c0_i32, %c0_i32_0 : i32, i32, i32
  }
  func.func @transform_2(%arg0: i32, %arg1: i32, %arg2: i32) -> (i32, i32, i32) {
    %c0_i32 = arith.constant 0 : i32
    %c0_i32_0 = arith.constant 0 : i32
    %c0_i32_1 = arith.constant 0 : i32
    return %arg0, %c0_i32, %c0_i32_0 : i32, i32, i32
  }
  func.func @transform_3(%arg0: i32, %arg1: i32, %arg2: i32) -> (i32, i32, i32) {
    %c0_i32 = arith.constant 0 : i32
    %c0_i32_0 = arith.constant 0 : i32
    %c0_i32_1 = arith.constant 0 : i32
    return %arg0, %c0_i32, %c0_i32_0 : i32, i32, i32
  }
  func.func @transform_4(%arg0: i32, %arg1: i32, %arg2: i32) -> (i32, i32, i32) {
    %c0_i32 = arith.constant 0 : i32
    %c0_i32_0 = arith.constant 0 : i32
    %c0_i32_1 = arith.constant 0 : i32
    return %arg0, %c0_i32, %c0_i32_0 : i32, i32, i32
  }
  func.func @transform_5(%arg0: i32, %arg1: i32, %arg2: i32) -> (i32, i32, i32, i32) {
    %c0_i32 = arith.constant 0 : i32
    %c0_i32_0 = arith.constant 0 : i32
    %c0_i32_1 = arith.constant 0 : i32
    return %arg0, %arg1, %c0_i32, %c0_i32_0 : i32, i32, i32, i32
  }
  func.func @transform_6(%arg0: i32, %arg1: i32, %arg2: i32) -> (i32, i32, i32, i32) {
    %c0_i32 = arith.constant 0 : i32
    %c0_i32_0 = arith.constant 0 : i32
    return %arg0, %arg1, %arg2, %c0_i32 : i32, i32, i32, i32
  }
}

module attributes {stable_mosaic.version = 11 : i64} {
  func.func @_matmul_scale_bias_kernel(%arg0: i32, %arg1: i32, %arg2: i32, %arg3: memref<128x128xbf16, #tpu.memory_space<vmem>>, %arg4: memref<128x128xbf16, #tpu.memory_space<vmem>>, %arg5: memref<1x128xf32, #tpu.memory_space<vmem>>, %arg6: memref<1x128xf32, #tpu.memory_space<vmem>>, %arg7: memref<128x128xf32, #tpu.memory_space<vmem>>, %arg8: memref<128x128xf32, #tpu.memory_space<vmem>>) attributes {dimension_semantics = [#tpu.dimension_semantics<parallel>, #tpu.dimension_semantics<parallel>, #tpu.dimension_semantics<arbitrary>], iteration_bounds = array<i64: 1, 1, 1>, scalar_prefetch = 0 : i64, scratch_operands = 1 : i64, tpu.core_type = #tpu.core_type<tc>, window_params = [{transform_indices = @transform_0, window_bounds = array<i64: 128, 128>}, {transform_indices = @transform_1, window_bounds = array<i64: 128, 128>}, {transform_indices = @transform_2, window_bounds = array<i64: 1, 128>}, {transform_indices = @transform_3, window_bounds = array<i64: 1, 128>}, {transform_indices = @transform_4, window_bounds = array<i64: 128, 128>}]} {
    %c0_i32 = arith.constant 0 : i32
    %0 = arith.cmpi eq, %arg2, %c0_i32 : i32
    %1 = arith.extui %0 : i1 to i32
    %c0_i32_0 = arith.constant 0 : i32
    %2 = arith.cmpi ne, %1, %c0_i32_0 : i32
    scf.if %2 {
      %cst_10 = arith.constant 0.000000e+00 : f32
      %12 = vector.broadcast %cst_10 : f32 to vector<128x128xf32>
      %c0_11 = arith.constant 0 : index
      %c0_12 = arith.constant 0 : index
      %13 = vector.load %arg8[%c0_11, %c0_12] : memref<128x128xf32, #tpu.memory_space<vmem>>, vector<128x128xf32>
      tpu.vector_store %arg8[%c0_11, %c0_12], %12 {strides = array<i32>} : memref<128x128xf32, #tpu.memory_space<vmem>>, vector<128x128xf32>,
    } else {
    }
    %c0 = arith.constant 0 : index
    %c0_1 = arith.constant 0 : index
    %3 = vector.load %arg8[%c0, %c0_1] : memref<128x128xf32, #tpu.memory_space<vmem>>, vector<128x128xf32>
    %c0_2 = arith.constant 0 : index
    %c0_3 = arith.constant 0 : index
    %4 = vector.load %arg3[%c0_2, %c0_3] : memref<128x128xbf16, #tpu.memory_space<vmem>>, vector<128x128xbf16>
    %c0_4 = arith.constant 0 : index
    %c0_5 = arith.constant 0 : index
    %5 = vector.load %arg4[%c0_4, %c0_5] : memref<128x128xbf16, #tpu.memory_space<vmem>>, vector<128x128xbf16>
    %cst = arith.constant dense<0.000000e+00> : vector<128x128xf32>
    %6 = tpu.matmul %4, %5, %cst {dimension_numbers = #tpu.dot_dimension_numbers<[1], [0], [0], [1], [0, 0, 1, 1], [], []>} : vector<128x128xbf16>, vector<128x128xbf16>, vector<128x128xf32> -> vector<128x128xf32>
    %7 = arith.addf %3, %6 : vector<128x128xf32>
    %c0_6 = arith.constant 0 : index
    %c0_7 = arith.constant 0 : index
    %8 = vector.load %arg8[%c0_6, %c0_7] : memref<128x128xf32, #tpu.memory_space<vmem>>, vector<128x128xf32>
    tpu.vector_store %arg8[%c0_6, %c0_7], %7 {strides = array<i32>} : memref<128x128xf32, #tpu.memory_space<vmem>>, vector<128x128xf32>,
    %c0_i32_8 = arith.constant 0 : i32
    %9 = arith.cmpi eq, %arg2, %c0_i32_8 : i32
    %10 = arith.extui %9 : i1 to i32
    %c0_i32_9 = arith.constant 0 : i32
    %11 = arith.cmpi ne, %10, %c0_i32_9 : i32
    scf.if %11 {
      %c0_10 = arith.constant 0 : index
      %c0_11 = arith.constant 0 : index
      %12 = vector.load %arg8[%c0_10, %c0_11] : memref<128x128xf32, #tpu.memory_space<vmem>>, vector<128x128xf32>
      %c0_12 = arith.constant 0 : index
      %c0_13 = arith.constant 0 : index
      %13 = vector.load %arg5[%c0_12, %c0_13] : memref<1x128xf32, #tpu.memory_space<vmem>>, vector<1x128xf32>
      %14 = vector.broadcast %13 : vector<1x128xf32> to vector<128x128xf32>
      %15 = arith.mulf %12, %14 : vector<128x128xf32>
      %c0_14 = arith.constant 0 : index
      %c0_15 = arith.constant 0 : index
      %16 = vector.load %arg6[%c0_14, %c0_15] : memref<1x128xf32, #tpu.memory_space<vmem>>, vector<1x128xf32>
      %17 = vector.broadcast %16 : vector<1x128xf32> to vector<128x128xf32>
      %18 = arith.addf %15, %17 : vector<128x128xf32>
      %cst_16 = arith.constant 0.000000e+00 : f32
      %19 = vector.broadcast %cst_16 : f32 to vector<128x128xf32>
      %20 = arith.maximumf %18, %19 : vector<128x128xf32>
      %c0_17 = arith.constant 0 : index
      %c0_18 = arith.constant 0 : index
      %21 = vector.load %arg7[%c0_17, %c0_18] : memref<128x128xf32, #tpu.memory_space<vmem>>, vector<128x128xf32>
      tpu.vector_store %arg7[%c0_17, %c0_18], %20 {strides = array<i32>} : memref<128x128xf32, #tpu.memory_space<vmem>>, vector<128x128xf32>,
    } else {
    }
    return
  }
  func.func @transform_0(%arg0: i32, %arg1: i32, %arg2: i32) -> (i32, i32) {
    %c0_i32 = arith.constant 0 : i32
    return %arg0, %arg2 : i32, i32
  }
  func.func @transform_1(%arg0: i32, %arg1: i32, %arg2: i32) -> (i32, i32) {
    %c0_i32 = arith.constant 0 : i32
    return %arg2, %arg1 : i32, i32
  }
  func.func @transform_2(%arg0: i32, %arg1: i32, %arg2: i32) -> (i32, i32) {
    %c0_i32 = arith.constant 0 : i32
    %c0_i32_0 = arith.constant 0 : i32
    return %c0_i32, %arg1 : i32, i32
  }
  func.func @transform_3(%arg0: i32, %arg1: i32, %arg2: i32) -> (i32, i32) {
    %c0_i32 = arith.constant 0 : i32
    %c0_i32_0 = arith.constant 0 : i32
    return %c0_i32, %arg1 : i32, i32
  }
  func.func @transform_4(%arg0: i32, %arg1: i32, %arg2: i32) -> (i32, i32) {
    %c0_i32 = arith.constant 0 : i32
    return %arg0, %arg1 : i32, i32
  }
}

module attributes {stable_mosaic.version = 11 : i64} {
  func.func @_matmul_scale_bias_kernel(%arg0: i32, %arg1: i32, %arg2: i32, %arg3: memref<128x128xbf16, #tpu.memory_space<vmem>>, %arg4: memref<128x128xbf16, #tpu.memory_space<vmem>>, %arg5: memref<1x128xf32, #tpu.memory_space<vmem>>, %arg6: memref<1x128xf32, #tpu.memory_space<vmem>>, %arg7: memref<128x128xf32, #tpu.memory_space<vmem>>, %arg8: memref<128x128xf32, #tpu.memory_space<vmem>>) attributes {dimension_semantics = [#tpu.dimension_semantics<parallel>, #tpu.dimension_semantics<parallel>, #tpu.dimension_semantics<arbitrary>], iteration_bounds = array<i64: 1, 1, 1>, scalar_prefetch = 0 : i64, scratch_operands = 1 : i64, tpu.core_type = #tpu.core_type<tc>, window_params = [{transform_indices = @transform_0, window_bounds = array<i64: 128, 128>}, {transform_indices = @transform_1, window_bounds = array<i64: 128, 128>}, {transform_indices = @transform_2, window_bounds = array<i64: 1, 128>}, {transform_indices = @transform_3, window_bounds = array<i64: 1, 128>}, {transform_indices = @transform_4, window_bounds = array<i64: 128, 128>}]} {
    %c0_i32 = arith.constant 0 : i32
    %0 = arith.cmpi eq, %arg2, %c0_i32 : i32
    %1 = arith.extui %0 : i1 to i32
    %c0_i32_0 = arith.constant 0 : i32
    %2 = arith.cmpi ne, %1, %c0_i32_0 : i32
    scf.if %2 {
      %cst_10 = arith.constant 0.000000e+00 : f32
      %12 = vector.broadcast %cst_10 : f32 to vector<128x128xf32>
      %c0_11 = arith.constant 0 : index
      %c0_12 = arith.constant 0 : index
      %13 = vector.load %arg8[%c0_11, %c0_12] : memref<128x128xf32, #tpu.memory_space<vmem>>, vector<128x128xf32>
      tpu.vector_store %arg8[%c0_11, %c0_12], %12 {strides = array<i32>} : memref<128x128xf32, #tpu.memory_space<vmem>>, vector<128x128xf32>,
    } else {
    }
    %c0 = arith.constant 0 : index
    %c0_1 = arith.constant 0 : index
    %3 = vector.load %arg8[%c0, %c0_1] : memref<128x128xf32, #tpu.memory_space<vmem>>, vector<128x128xf32>
    %c0_2 = arith.constant 0 : index
    %c0_3 = arith.constant 0 : index
    %4 = vector.load %arg3[%c0_2, %c0_3] : memref<128x128xbf16, #tpu.memory_space<vmem>>, vector<128x128xbf16>
    %c0_4 = arith.constant 0 : index
    %c0_5 = arith.constant 0 : index
    %5 = vector.load %arg4[%c0_4, %c0_5] : memref<128x128xbf16, #tpu.memory_space<vmem>>, vector<128x128xbf16>
    %cst = arith.constant dense<0.000000e+00> : vector<128x128xf32>
    %6 = tpu.matmul %4, %5, %cst {dimension_numbers = #tpu.dot_dimension_numbers<[1], [0], [0], [1], [0, 0, 1, 1], [], []>} : vector<128x128xbf16>, vector<128x128xbf16>, vector<128x128xf32> -> vector<128x128xf32>
    %7 = arith.addf %3, %6 : vector<128x128xf32>
    %c0_6 = arith.constant 0 : index
    %c0_7 = arith.constant 0 : index
    %8 = vector.load %arg8[%c0_6, %c0_7] : memref<128x128xf32, #tpu.memory_space<vmem>>, vector<128x128xf32>
    tpu.vector_store %arg8[%c0_6, %c0_7], %7 {strides = array<i32>} : memref<128x128xf32, #tpu.memory_space<vmem>>, vector<128x128xf32>,
    %c0_i32_8 = arith.constant 0 : i32
    %9 = arith.cmpi eq, %arg2, %c0_i32_8 : i32
    %10 = arith.extui %9 : i1 to i32
    %c0_i32_9 = arith.constant 0 : i32
    %11 = arith.cmpi ne, %10, %c0_i32_9 : i32
    scf.if %11 {
      %c0_10 = arith.constant 0 : index
      %c0_11 = arith.constant 0 : index
      %12 = vector.load %arg8[%c0_10, %c0_11] : memref<128x128xf32, #tpu.memory_space<vmem>>, vector<128x128xf32>
      %c0_12 = arith.constant 0 : index
      %c0_13 = arith.constant 0 : index
      %13 = vector.load %arg5[%c0_12, %c0_13] : memref<1x128xf32, #tpu.memory_space<vmem>>, vector<1x128xf32>
      %14 = vector.broadcast %13 : vector<1x128xf32> to vector<128x128xf32>
      %15 = arith.mulf %12, %14 : vector<128x128xf32>
      %c0_14 = arith.constant 0 : index
      %c0_15 = arith.constant 0 : index
      %16 = vector.load %arg6[%c0_14, %c0_15] : memref<1x128xf32, #tpu.memory_space<vmem>>, vector<1x128xf32>
      %17 = vector.broadcast %16 : vector<1x128xf32> to vector<128x128xf32>
      %18 = arith.addf %15, %17 : vector<128x128xf32>
      %c0_16 = arith.constant 0 : index
      %c0_17 = arith.constant 0 : index
      %19 = vector.load %arg7[%c0_16, %c0_17] : memref<128x128xf32, #tpu.memory_space<vmem>>, vector<128x128xf32>
      tpu.vector_store %arg7[%c0_16, %c0_17], %18 {strides = array<i32>} : memref<128x128xf32, #tpu.memory_space<vmem>>, vector<128x128xf32>,
    } else {
    }
    return
  }
  func.func @transform_0(%arg0: i32, %arg1: i32, %arg2: i32) -> (i32, i32) {
    %c0_i32 = arith.constant 0 : i32
    return %arg0, %arg2 : i32, i32
  }
  func.func @transform_1(%arg0: i32, %arg1: i32, %arg2: i32) -> (i32, i32) {
    %c0_i32 = arith.constant 0 : i32
    return %arg2, %arg1 : i32, i32
  }
  func.func @transform_2(%arg0: i32, %arg1: i32, %arg2: i32) -> (i32, i32) {
    %c0_i32 = arith.constant 0 : i32
    %c0_i32_0 = arith.constant 0 : i32
    return %c0_i32, %arg1 : i32, i32
  }
  func.func @transform_3(%arg0: i32, %arg1: i32, %arg2: i32) -> (i32, i32) {
    %c0_i32 = arith.constant 0 : i32
    %c0_i32_0 = arith.constant 0 : i32
    return %c0_i32, %arg1 : i32, i32
  }
  func.func @transform_4(%arg0: i32, %arg1: i32, %arg2: i32) -> (i32, i32) {
    %c0_i32 = arith.constant 0 : i32
    return %arg0, %arg1 : i32, i32
  }
}

module attributes {stable_mosaic.version = 11 : i64} {
  func.func @_conv3x3_kernel(%arg0: i32, %arg1: i32, %arg2: memref<1x10x10x256xbf16, #tpu.memory_space<vmem>>, %arg3: memref<3x3x256x128xbf16, #tpu.memory_space<vmem>>, %arg4: memref<1x128xf32, #tpu.memory_space<vmem>>, %arg5: memref<1x128xf32, #tpu.memory_space<vmem>>, %arg6: memref<1x8x8x128xf32, #tpu.memory_space<vmem>>, %arg7: memref<8x8x128xf32, #tpu.memory_space<vmem>>) attributes {dimension_semantics = [#tpu.dimension_semantics<parallel>, #tpu.dimension_semantics<arbitrary>], iteration_bounds = array<i64: 2, 1>, scalar_prefetch = 0 : i64, scratch_operands = 1 : i64, tpu.core_type = #tpu.core_type<tc>, window_params = [{transform_indices = @transform_0, window_bounds = array<i64: 1, 10, 10, 256>}, {transform_indices = @transform_1, window_bounds = array<i64: 3, 3, 256, 128>}, {pipeline_mode = #tpu.pipeline_mode<synchronous>, transform_indices = @transform_2, window_bounds = array<i64: 1, 128>}, {pipeline_mode = #tpu.pipeline_mode<synchronous>, transform_indices = @transform_3, window_bounds = array<i64: 1, 128>}, {transform_indices = @transform_4, window_bounds = array<i64: 1, 8, 8, 128>}]} {
    %c0_i32 = arith.constant 0 : i32
    %0 = arith.cmpi eq, %arg1, %c0_i32 : i32
    %1 = arith.extui %0 : i1 to i32
    %c0_i32_0 = arith.constant 0 : i32
    %2 = arith.cmpi ne, %1, %c0_i32_0 : i32
    scf.if %2 {
      %cst_54 = arith.constant 0.000000e+00 : f32
      %55 = vector.broadcast %cst_54 : f32 to vector<8x8x128xf32>
      %c0_55 = arith.constant 0 : index
      %c0_56 = arith.constant 0 : index
      %c0_57 = arith.constant 0 : index
      %56 = vector.load %arg7[%c0_55, %c0_56, %c0_57] : memref<8x8x128xf32, #tpu.memory_space<vmem>>, vector<8x8x128xf32>
      tpu.vector_store %arg7[%c0_55, %c0_56, %c0_57], %55 {strides = array<i32>} : memref<8x8x128xf32, #tpu.memory_space<vmem>>, vector<8x8x128xf32>,
    } else {
    }
    %c0 = arith.constant 0 : index
    %c0_1 = arith.constant 0 : index
    %c0_2 = arith.constant 0 : index
    %c0_3 = arith.constant 0 : index
    %3 = vector.load %arg2[%c0, %c0_1, %c0_2, %c0_3] : memref<1x10x10x256xbf16, #tpu.memory_space<vmem>>, vector<1x10x10x256xbf16>
    %4 = vector.shape_cast %3 : vector<1x10x10x256xbf16> to vector<10x10x256xbf16>
    %5 = vector.extract_strided_slice %4 {offsets = [0, 0, 0], sizes = [8, 8, 256], strides = [1, 1, 1]} : vector<10x10x256xbf16> to vector<8x8x256xbf16>
    %c0_4 = arith.constant 0 : index
    %c0_5 = arith.constant 0 : index
    %c0_6 = arith.constant 0 : index
    %c0_7 = arith.constant 0 : index
    %6 = vector.load %arg3[%c0_4, %c0_5, %c0_6, %c0_7] : memref<3x3x256x128xbf16, #tpu.memory_space<vmem>>, vector<1x1x256x128xbf16>
    %7 = vector.shape_cast %6 : vector<1x1x256x128xbf16> to vector<256x128xbf16>
    %cst = arith.constant dense<0.000000e+00> : vector<8x8x128xf32>
    %8 = tpu.matmul %5, %7, %cst {dimension_numbers = #tpu.dot_dimension_numbers<[2], [0], [0, 1], [1], [0, 0, 0, 1, 1, 1], [], []>} : vector<8x8x256xbf16>, vector<256x128xbf16>, vector<8x8x128xf32> -> vector<8x8x128xf32>
    %9 = vector.extract_strided_slice %4 {offsets = [0, 1, 0], sizes = [8, 8, 256], strides = [1, 1, 1]} : vector<10x10x256xbf16> to vector<8x8x256xbf16>
    %c0_8 = arith.constant 0 : index
    %c1 = arith.constant 1 : index
    %c0_9 = arith.constant 0 : index
    %c0_10 = arith.constant 0 : index
    %10 = vector.load %arg3[%c0_8, %c1, %c0_9, %c0_10] : memref<3x3x256x128xbf16, #tpu.memory_space<vmem>>, vector<1x1x256x128xbf16>
    %11 = vector.shape_cast %10 : vector<1x1x256x128xbf16> to vector<256x128xbf16>
    %cst_11 = arith.constant dense<0.000000e+00> : vector<8x8x128xf32>
    %12 = tpu.matmul %9, %11, %cst_11 {dimension_numbers = #tpu.dot_dimension_numbers<[2], [0], [0, 1], [1], [0, 0, 0, 1, 1, 1], [], []>} : vector<8x8x256xbf16>, vector<256x128xbf16>, vector<8x8x128xf32> -> vector<8x8x128xf32>
    %13 = arith.addf %8, %12 : vector<8x8x128xf32>
    %14 = vector.extract_strided_slice %4 {offsets = [0, 2, 0], sizes = [8, 8, 256], strides = [1, 1, 1]} : vector<10x10x256xbf16> to vector<8x8x256xbf16>
    %c0_12 = arith.constant 0 : index
    %c2 = arith.constant 2 : index
    %c0_13 = arith.constant 0 : index
    %c0_14 = arith.constant 0 : index
    %15 = vector.load %arg3[%c0_12, %c2, %c0_13, %c0_14] : memref<3x3x256x128xbf16, #tpu.memory_space<vmem>>, vector<1x1x256x128xbf16>
    %16 = vector.shape_cast %15 : vector<1x1x256x128xbf16> to vector<256x128xbf16>
    %cst_15 = arith.constant dense<0.000000e+00> : vector<8x8x128xf32>
    %17 = tpu.matmul %14, %16, %cst_15 {dimension_numbers = #tpu.dot_dimension_numbers<[2], [0], [0, 1], [1], [0, 0, 0, 1, 1, 1], [], []>} : vector<8x8x256xbf16>, vector<256x128xbf16>, vector<8x8x128xf32> -> vector<8x8x128xf32>
    %18 = arith.addf %13, %17 : vector<8x8x128xf32>
    %19 = vector.extract_strided_slice %4 {offsets = [1, 0, 0], sizes = [8, 8, 256], strides = [1, 1, 1]} : vector<10x10x256xbf16> to vector<8x8x256xbf16>
    %c1_16 = arith.constant 1 : index
    %c0_17 = arith.constant 0 : index
    %c0_18 = arith.constant 0 : index
    %c0_19 = arith.constant 0 : index
    %20 = vector.load %arg3[%c1_16, %c0_17, %c0_18, %c0_19] : memref<3x3x256x128xbf16, #tpu.memory_space<vmem>>, vector<1x1x256x128xbf16>
    %21 = vector.shape_cast %20 : vector<1x1x256x128xbf16> to vector<256x128xbf16>
    %cst_20 = arith.constant dense<0.000000e+00> : vector<8x8x128xf32>
    %22 = tpu.matmul %19, %21, %cst_20 {dimension_numbers = #tpu.dot_dimension_numbers<[2], [0], [0, 1], [1], [0, 0, 0, 1, 1, 1], [], []>} : vector<8x8x256xbf16>, vector<256x128xbf16>, vector<8x8x128xf32> -> vector<8x8x128xf32>
    %23 = arith.addf %18, %22 : vector<8x8x128xf32>
    %24 = vector.extract_strided_slice %4 {offsets = [1, 1, 0], sizes = [8, 8, 256], strides = [1, 1, 1]} : vector<10x10x256xbf16> to vector<8x8x256xbf16>
    %c1_21 = arith.constant 1 : index
    %c1_22 = arith.constant 1 : index
    %c0_23 = arith.constant 0 : index
    %c0_24 = arith.constant 0 : index
    %25 = vector.load %arg3[%c1_21, %c1_22, %c0_23, %c0_24] : memref<3x3x256x128xbf16, #tpu.memory_space<vmem>>, vector<1x1x256x128xbf16>
    %26 = vector.shape_cast %25 : vector<1x1x256x128xbf16> to vector<256x128xbf16>
    %cst_25 = arith.constant dense<0.000000e+00> : vector<8x8x128xf32>
    %27 = tpu.matmul %24, %26, %cst_25 {dimension_numbers = #tpu.dot_dimension_numbers<[2], [0], [0, 1], [1], [0, 0, 0, 1, 1, 1], [], []>} : vector<8x8x256xbf16>, vector<256x128xbf16>, vector<8x8x128xf32> -> vector<8x8x128xf32>
    %28 = arith.addf %23, %27 : vector<8x8x128xf32>
    %29 = vector.extract_strided_slice %4 {offsets = [1, 2, 0], sizes = [8, 8, 256], strides = [1, 1, 1]} : vector<10x10x256xbf16> to vector<8x8x256xbf16>
    %c1_26 = arith.constant 1 : index
    %c2_27 = arith.constant 2 : index
    %c0_28 = arith.constant 0 : index
    %c0_29 = arith.constant 0 : index
    %30 = vector.load %arg3[%c1_26, %c2_27, %c0_28, %c0_29] : memref<3x3x256x128xbf16, #tpu.memory_space<vmem>>, vector<1x1x256x128xbf16>
    %31 = vector.shape_cast %30 : vector<1x1x256x128xbf16> to vector<256x128xbf16>
    %cst_30 = arith.constant dense<0.000000e+00> : vector<8x8x128xf32>
    %32 = tpu.matmul %29, %31, %cst_30 {dimension_numbers = #tpu.dot_dimension_numbers<[2], [0], [0, 1], [1], [0, 0, 0, 1, 1, 1], [], []>} : vector<8x8x256xbf16>, vector<256x128xbf16>, vector<8x8x128xf32> -> vector<8x8x128xf32>
    %33 = arith.addf %28, %32 : vector<8x8x128xf32>
    %34 = vector.extract_strided_slice %4 {offsets = [2, 0, 0], sizes = [8, 8, 256], strides = [1, 1, 1]} : vector<10x10x256xbf16> to vector<8x8x256xbf16>
    %c2_31 = arith.constant 2 : index
    %c0_32 = arith.constant 0 : index
    %c0_33 = arith.constant 0 : index
    %c0_34 = arith.constant 0 : index
    %35 = vector.load %arg3[%c2_31, %c0_32, %c0_33, %c0_34] : memref<3x3x256x128xbf16, #tpu.memory_space<vmem>>, vector<1x1x256x128xbf16>
    %36 = vector.shape_cast %35 : vector<1x1x256x128xbf16> to vector<256x128xbf16>
    %cst_35 = arith.constant dense<0.000000e+00> : vector<8x8x128xf32>
    %37 = tpu.matmul %34, %36, %cst_35 {dimension_numbers = #tpu.dot_dimension_numbers<[2], [0], [0, 1], [1], [0, 0, 0, 1, 1, 1], [], []>} : vector<8x8x256xbf16>, vector<256x128xbf16>, vector<8x8x128xf32> -> vector<8x8x128xf32>
    %38 = arith.addf %33, %37 : vector<8x8x128xf32>
    %39 = vector.extract_strided_slice %4 {offsets = [2, 1, 0], sizes = [8, 8, 256], strides = [1, 1, 1]} : vector<10x10x256xbf16> to vector<8x8x256xbf16>
    %c2_36 = arith.constant 2 : index
    %c1_37 = arith.constant 1 : index
    %c0_38 = arith.constant 0 : index
    %c0_39 = arith.constant 0 : index
    %40 = vector.load %arg3[%c2_36, %c1_37, %c0_38, %c0_39] : memref<3x3x256x128xbf16, #tpu.memory_space<vmem>>, vector<1x1x256x128xbf16>
    %41 = vector.shape_cast %40 : vector<1x1x256x128xbf16> to vector<256x128xbf16>
    %cst_40 = arith.constant dense<0.000000e+00> : vector<8x8x128xf32>
    %42 = tpu.matmul %39, %41, %cst_40 {dimension_numbers = #tpu.dot_dimension_numbers<[2], [0], [0, 1], [1], [0, 0, 0, 1, 1, 1], [], []>} : vector<8x8x256xbf16>, vector<256x128xbf16>, vector<8x8x128xf32> -> vector<8x8x128xf32>
    %43 = arith.addf %38, %42 : vector<8x8x128xf32>
    %44 = vector.extract_strided_slice %4 {offsets = [2, 2, 0], sizes = [8, 8, 256], strides = [1, 1, 1]} : vector<10x10x256xbf16> to vector<8x8x256xbf16>
    %c2_41 = arith.constant 2 : index
    %c2_42 = arith.constant 2 : index
    %c0_43 = arith.constant 0 : index
    %c0_44 = arith.constant 0 : index
    %45 = vector.load %arg3[%c2_41, %c2_42, %c0_43, %c0_44] : memref<3x3x256x128xbf16, #tpu.memory_space<vmem>>, vector<1x1x256x128xbf16>
    %46 = vector.shape_cast %45 : vector<1x1x256x128xbf16> to vector<256x128xbf16>
    %cst_45 = arith.constant dense<0.000000e+00> : vector<8x8x128xf32>
    %47 = tpu.matmul %44, %46, %cst_45 {dimension_numbers = #tpu.dot_dimension_numbers<[2], [0], [0, 1], [1], [0, 0, 0, 1, 1, 1], [], []>} : vector<8x8x256xbf16>, vector<256x128xbf16>, vector<8x8x128xf32> -> vector<8x8x128xf32>
    %48 = arith.addf %43, %47 : vector<8x8x128xf32>
    %c0_46 = arith.constant 0 : index
    %c0_47 = arith.constant 0 : index
    %c0_48 = arith.constant 0 : index
    %49 = vector.load %arg7[%c0_46, %c0_47, %c0_48] : memref<8x8x128xf32, #tpu.memory_space<vmem>>, vector<8x8x128xf32>
    %50 = arith.addf %49, %48 : vector<8x8x128xf32>
    %c0_49 = arith.constant 0 : index
    %c0_50 = arith.constant 0 : index
    %c0_51 = arith.constant 0 : index
    %51 = vector.load %arg7[%c0_49, %c0_50, %c0_51] : memref<8x8x128xf32, #tpu.memory_space<vmem>>, vector<8x8x128xf32>
    tpu.vector_store %arg7[%c0_49, %c0_50, %c0_51], %50 {strides = array<i32>} : memref<8x8x128xf32, #tpu.memory_space<vmem>>, vector<8x8x128xf32>,
    %c0_i32_52 = arith.constant 0 : i32
    %52 = arith.cmpi eq, %arg1, %c0_i32_52 : i32
    %53 = arith.extui %52 : i1 to i32
    %c0_i32_53 = arith.constant 0 : i32
    %54 = arith.cmpi ne, %53, %c0_i32_53 : i32
    scf.if %54 {
      %c0_54 = arith.constant 0 : index
      %c0_55 = arith.constant 0 : index
      %c0_56 = arith.constant 0 : index
      %55 = vector.load %arg7[%c0_54, %c0_55, %c0_56] : memref<8x8x128xf32, #tpu.memory_space<vmem>>, vector<8x8x128xf32>
      %c0_57 = arith.constant 0 : index
      %c0_58 = arith.constant 0 : index
      %56 = vector.load %arg4[%c0_57, %c0_58] : memref<1x128xf32, #tpu.memory_space<vmem>>, vector<1x128xf32>
      %57 = vector.shape_cast %56 : vector<1x128xf32> to vector<128xf32>
      %58 = vector.shape_cast %57 : vector<128xf32> to vector<1x1x128xf32>
      %59 = vector.broadcast %58 : vector<1x1x128xf32> to vector<8x8x128xf32>
      %60 = arith.mulf %55, %59 : vector<8x8x128xf32>
      %c0_59 = arith.constant 0 : index
      %c0_60 = arith.constant 0 : index
      %61 = vector.load %arg5[%c0_59, %c0_60] : memref<1x128xf32, #tpu.memory_space<vmem>>, vector<1x128xf32>
      %62 = vector.shape_cast %61 : vector<1x128xf32> to vector<128xf32>
      %63 = vector.shape_cast %62 : vector<128xf32> to vector<1x1x128xf32>
      %64 = vector.broadcast %63 : vector<1x1x128xf32> to vector<8x8x128xf32>
      %65 = arith.addf %60, %64 : vector<8x8x128xf32>
      %cst_61 = arith.constant 0.000000e+00 : f32
      %66 = vector.broadcast %cst_61 : f32 to vector<8x8x128xf32>
      %67 = arith.maximumf %65, %66 : vector<8x8x128xf32>
      %c0_62 = arith.constant 0 : index
      %c0_63 = arith.constant 0 : index
      %c0_64 = arith.constant 0 : index
      %c0_65 = arith.constant 0 : index
      %68 = vector.load %arg6[%c0_62, %c0_63, %c0_64, %c0_65] : memref<1x8x8x128xf32, #tpu.memory_space<vmem>>, vector<1x8x8x128xf32>
      %69 = vector.shape_cast %68 : vector<1x8x8x128xf32> to vector<8x8x128xf32>
      %70 = vector.shape_cast %67 : vector<8x8x128xf32> to vector<1x8x8x128xf32>
      tpu.vector_store %arg6[%c0_62, %c0_63, %c0_64, %c0_65], %70 {strides = array<i32>} : memref<1x8x8x128xf32, #tpu.memory_space<vmem>>, vector<1x8x8x128xf32>,
    } else {
    }
    return
  }
  func.func @transform_0(%arg0: i32, %arg1: i32) -> (i32, i32, i32, i32) {
    %c0_i32 = arith.constant 0 : i32
    %c0_i32_0 = arith.constant 0 : i32
    %c0_i32_1 = arith.constant 0 : i32
    return %arg0, %c0_i32, %c0_i32_0, %arg1 : i32, i32, i32, i32
  }
  func.func @transform_1(%arg0: i32, %arg1: i32) -> (i32, i32, i32, i32) {
    %c0_i32 = arith.constant 0 : i32
    %c0_i32_0 = arith.constant 0 : i32
    %c0_i32_1 = arith.constant 0 : i32
    %c0_i32_2 = arith.constant 0 : i32
    return %c0_i32, %c0_i32_0, %arg1, %c0_i32_1 : i32, i32, i32, i32
  }
  func.func @transform_2(%arg0: i32, %arg1: i32) -> (i32, i32) {
    %c0_i32 = arith.constant 0 : i32
    %c0_i32_0 = arith.constant 0 : i32
    %c0_i32_1 = arith.constant 0 : i32
    return %c0_i32, %c0_i32_0 : i32, i32
  }
  func.func @transform_3(%arg0: i32, %arg1: i32) -> (i32, i32) {
    %c0_i32 = arith.constant 0 : i32
    %c0_i32_0 = arith.constant 0 : i32
    %c0_i32_1 = arith.constant 0 : i32
    return %c0_i32, %c0_i32_0 : i32, i32
  }
  func.func @transform_4(%arg0: i32, %arg1: i32) -> (i32, i32, i32, i32) {
    %c0_i32 = arith.constant 0 : i32
    %c0_i32_0 = arith.constant 0 : i32
    %c0_i32_1 = arith.constant 0 : i32
    %c0_i32_2 = arith.constant 0 : i32
    return %arg0, %c0_i32, %c0_i32_0, %c0_i32_1 : i32, i32, i32, i32
  }
}

</mosaic_0001>

<llo_original>
// kernel: pointwise_spatial_attention.5
$region0: #{pointwise_spatial_attention.5}
  #allocation0 [shape = 'u32[]', space=smem, size = 0x4, offset = 0x4, fixed_abs, tag = 'smem constant byte address 0x4 - core index']
  #allocation1 [shape = 'u32[144,128]{1,0:T(1,128)}', space=vmem, size = 0x12000, scoped, tag = 'internal scratch']
  #allocation2 [shape = 'f32[128,128]{1,0:T(8,128)}', space=vmem, size = 0x10000, scoped, tag = 'scratch operand']
  %s0 = inlined_call_operand.vmem [shape: bf16[128,128], index: 0, kind: input, shape index: {}]
  %s1 = inlined_call_operand.vmem [shape: bf16[128,128], index: 1, kind: input, shape index: {}]
  %s2 = inlined_call_operand.vmem [shape: f32[1,128], index: 2, kind: input, shape index: {}]
  %s3 = inlined_call_operand.vmem [shape: f32[1,128], index: 3, kind: input, shape index: {}]
  %s4 = inlined_call_operand.vmem [shape: bf16[128,128], index: 4, kind: output, shape index: {}]
  %s5 = sld [smem:[#allocation0]]
  $region34: #{pointwise_spatial_attention.5} parent=0
    _
  %s7 = ssub.s32 1, %s5
  %s8 = scalar_select 0, %s7, %s5
  // Predicated region
  $region2: #{pointwise_spatial_attention.5} parent=0 // pred_check
    _
  $region3: #{pointwise_spatial_attention.5} parent=0 // pred_check_branch
    %10 = sbr.rel (0) target = $region5
  $region4: #{pointwise_spatial_attention.5} parent=0 // pred_region
    _
  $region5: #{pointwise_spatial_attention.5} parent=0 // pred_fallthru
    _
  // Predicated region
  $region6: #{pointwise_spatial_attention.5} parent=0 // pred_check
    _
  $region7: #{pointwise_spatial_attention.5} parent=0 // pred_check_branch
    %12 = sbr.rel (0) target = $region9
  $region8: #{pointwise_spatial_attention.5} parent=0 // pred_region
    _
  $region9: #{pointwise_spatial_attention.5} parent=0 // pred_fallthru
    _
  // Predicated region
  $region10: #{pointwise_spatial_attention.5} parent=0 // pred_check
    _
  $region11: #{pointwise_spatial_attention.5} parent=0 // pred_check_branch
    %14 = sbr.rel (0) target = $region13
  $region12: #{pointwise_spatial_attention.5} parent=0 // pred_region
    _
  $region13: #{pointwise_spatial_attention.5} parent=0 // pred_fallthru
    _
  // Predicated region
  $region14: #{pointwise_spatial_attention.5} parent=0 // pred_check
    _
  $region15: #{pointwise_spatial_attention.5} parent=0 // pred_check_branch
    %16 = sbr.rel (0) target = $region17
  $region16: #{pointwise_spatial_attention.5} parent=0 // pred_region
    _
  $region17: #{pointwise_spatial_attention.5} parent=0 // pred_fallthru
    _
  %p18 = scmp.eq.s32.totalorder 0, 0
  // Predicated region
  $region18: #{pointwise_spatial_attention.5} parent=0 // pred_check
    %p19 = pneg %p18
  $region19: #{pointwise_spatial_attention.5} parent=0 // pred_check_branch
    %21 = sbr.rel (%p19) target = $region21
  $region20: #{pointwise_spatial_attention.5} parent=0 // pred_region
    %22 = vst [vmem:[#allocation2] sm:$0xff] 0.0
    %23 = vst [vmem:[#allocation2 + $0x8] sm:$0xff] 0.0
    %24 = vst [vmem:[#allocation2 + $0x10] sm:$0xff] 0.0
    %25 = vst [vmem:[#allocation2 + $0x18] sm:$0xff] 0.0
    %26 = vst [vmem:[#allocation2 + $0x20] sm:$0xff] 0.0
    %27 = vst [vmem:[#allocation2 + $0x28] sm:$0xff] 0.0
    %28 = vst [vmem:[#allocation2 + $0x30] sm:$0xff] 0.0
    %29 = vst [vmem:[#allocation2 + $0x38] sm:$0xff] 0.0
    %30 = vst [vmem:[#allocation2 + $0x40] sm:$0xff] 0.0
    %31 = vst [vmem:[#allocation2 + $0x48] sm:$0xff] 0.0
    %32 = vst [vmem:[#allocation2 + $0x50] sm:$0xff] 0.0
    %33 = vst [vmem:[#allocation2 + $0x58] sm:$0xff] 0.0
    %34 = vst [vmem:[#allocation2 + $0x60] sm:$0xff] 0.0
    %35 = vst [vmem:[#allocation2 + $0x68] sm:$0xff] 0.0
    %36 = vst [vmem:[#allocation2 + $0x70] sm:$0xff] 0.0
    %37 = vst [vmem:[#allocation2 + $0x78] sm:$0xff] 0.0
  $region21: #{pointwise_spatial_attention.5} parent=0 // pred_fallthru
    _
  %v38 = vld [vmem:[#allocation2] sm:$0xff]
  %v39 = vld [vmem:[#allocation2 + $0x8] sm:$0xff]
  %v40 = vld [vmem:[#allocation2 + $0x10] sm:$0xff]
  %v41 = vld [vmem:[#allocation2 + $0x18] sm:$0xff]
  %v42 = vld [vmem:[#allocation2 + $0x20] sm:$0xff]
  %v43 = vld [vmem:[#allocation2 + $0x28] sm:$0xff]
  %v44 = vld [vmem:[#allocation2 + $0x30] sm:$0xff]
  %v45 = vld [vmem:[#allocation2 + $0x38] sm:$0xff]
  %v46 = vld [vmem:[#allocation2 + $0x40] sm:$0xff]
  %v47 = vld [vmem:[#allocation2 + $0x48] sm:$0xff]
  %v48 = vld [vmem:[#allocation2 + $0x50] sm:$0xff]
  %v49 = vld [vmem:[#allocation2 + $0x58] sm:$0xff]
  %v50 = vld [vmem:[#allocation2 + $0x60] sm:$0xff]
  %v51 = vld [vmem:[#allocation2 + $0x68] sm:$0xff]
  %v52 = vld [vmem:[#allocation2 + $0x70] sm:$0xff]
  %v53 = vld [vmem:[#allocation2 + $0x78] sm:$0xff]
  %v54 = vld [vmem:[%s0] sm:$0xf]
  %v55 = vld [vmem:[%s0 + $0x4] sm:$0xf]
  %v56 = vld [vmem:[%s0 + $0x8] sm:$0xf]
  %v57 = vld [vmem:[%s0 + $0xc] sm:$0xf]
  %v58 = vld [vmem:[%s0 + $0x10] sm:$0xf]
  %v59 = vld [vmem:[%s0 + $0x14] sm:$0xf]
  %v60 = vld [vmem:[%s0 + $0x18] sm:$0xf]
  %v61 = vld [vmem:[%s0 + $0x1c] sm:$0xf]
  %v62 = vld [vmem:[%s0 + $0x20] sm:$0xf]
  %v63 = vld [vmem:[%s0 + $0x24] sm:$0xf]
  %v64 = vld [vmem:[%s0 + $0x28] sm:$0xf]
  %v65 = vld [vmem:[%s0 + $0x2c] sm:$0xf]
  %v66 = vld [vmem:[%s0 + $0x30] sm:$0xf]
  %v67 = vld [vmem:[%s0 + $0x34] sm:$0xf]
  %v68 = vld [vmem:[%s0 + $0x38] sm:$0xf]
  %v69 = vld [vmem:[%s0 + $0x3c] sm:$0xf]
  %v70 = vld [vmem:[%s1] sm:$0xf]
  %v71 = vld [vmem:[%s1 + $0x4] sm:$0xf]
  %v72 = vld [vmem:[%s1 + $0x8] sm:$0xf]
  %v73 = vld [vmem:[%s1 + $0xc] sm:$0xf]
  %v74 = vld [vmem:[%s1 + $0x10] sm:$0xf]
  %v75 = vld [vmem:[%s1 + $0x14] sm:$0xf]
  %v76 = vld [vmem:[%s1 + $0x18] sm:$0xf]
  %v77 = vld [vmem:[%s1 + $0x1c] sm:$0xf]
  %v78 = vld [vmem:[%s1 + $0x20] sm:$0xf]
  %v79 = vld [vmem:[%s1 + $0x24] sm:$0xf]
  %v80 = vld [vmem:[%s1 + $0x28] sm:$0xf]
  %v81 = vld [vmem:[%s1 + $0x2c] sm:$0xf]
  %v82 = vld [vmem:[%s1 + $0x30] sm:$0xf]
  %v83 = vld [vmem:[%s1 + $0x34] sm:$0xf]
  %v84 = vld [vmem:[%s1 + $0x38] sm:$0xf]
  %v85 = vld [vmem:[%s1 + $0x3c] sm:$0xf]
  %v102 = vunpack.c.l.b16 %v54
  %v103 = vunpack.c.l.b16 %v55
  %v104 = vunpack.c.l.b16 %v56
  %v105 = vunpack.c.l.b16 %v57
  %v106 = vunpack.c.l.b16 %v58
  %v107 = vunpack.c.l.b16 %v59
  %v108 = vunpack.c.l.b16 %v60
  %v109 = vunpack.c.l.b16 %v61
  %v110 = vunpack.c.l.b16 %v62
  %v111 = vunpack.c.l.b16 %v63
  %v112 = vunpack.c.l.b16 %v64
  %v113 = vunpack.c.l.b16 %v65
  %v114 = vunpack.c.l.b16 %v66
  %v115 = vunpack.c.l.b16 %v67
  %v116 = vunpack.c.l.b16 %v68
  %v117 = vunpack.c.l.b16 %v69
  %v118 = vpack.c.b16 %v103, %v102
  %v119 = vpack.c.b16 %v105, %v104
  %v120 = vpack.c.b16 %v107, %v106
  %v121 = vpack.c.b16 %v109, %v108
  %v122 = vpack.c.b16 %v111, %v110
  %v123 = vpack.c.b16 %v113, %v112
  %v124 = vpack.c.b16 %v115, %v114
  %v125 = vpack.c.b16 %v117, %v116
  %v150 = vunpack.c.l.b16 %v70
  %v151 = vunpack.c.l.b16 %v71
  %v152 = vunpack.c.l.b16 %v72
  %v153 = vunpack.c.l.b16 %v73
  %v154 = vunpack.c.l.b16 %v74
  %v155 = vunpack.c.l.b16 %v75
  %v156 = vunpack.c.l.b16 %v76
  %v157 = vunpack.c.l.b16 %v77
  %v158 = vunpack.c.l.b16 %v78
  %v159 = vunpack.c.l.b16 %v79
  %v160 = vunpack.c.l.b16 %v80
  %v161 = vunpack.c.l.b16 %v81
  %v162 = vunpack.c.l.b16 %v82
  %v163 = vunpack.c.l.b16 %v83
  %v164 = vunpack.c.l.b16 %v84
  %v165 = vunpack.c.l.b16 %v85
  %v166 = vpack.c.b16 %v151, %v150
  %v167 = vpack.c.b16 %v153, %v152
  %v168 = vpack.c.b16 %v155, %v154
  %v169 = vpack.c.b16 %v157, %v156
  %v170 = vpack.c.b16 %v159, %v158
  %v171 = vpack.c.b16 %v161, %v160
  %v172 = vpack.c.b16 %v163, %v162
  %v173 = vpack.c.b16 %v165, %v164
  %182 = vmatprep.subr.bf16.mxu0 0
  %183 = vmatpush1.bf16.msra.mxu0 %v166
  %184 = vmatprep.subr.bf16.mxu0 0
  %185 = vmatpush1.bf16.msra.mxu0 %v167
  %186 = vmatprep.subr.bf16.mxu0 0
  %187 = vmatpush1.bf16.msra.mxu0 %v168
  %188 = vmatprep.subr.bf16.mxu0 0
  %189 = vmatpush1.bf16.msra.mxu0 %v169
  %190 = vmatprep.subr.bf16.mxu0 0
  %191 = vmatpush1.bf16.msra.mxu0 %v170
  %192 = vmatprep.subr.bf16.mxu0 0
  %193 = vmatpush1.bf16.msra.mxu0 %v171
  %194 = vmatprep.subr.bf16.mxu0 0
  %195 = vmatpush1.bf16.msra.mxu0 %v172
  %196 = vmatprep.subr.bf16.mxu0 0
  %197 = vmatpush1.bf16.msra.mxu0 %v173
  %198 = vmatprep.subr.bf16.mxu0 0
  %199 = vmatpush1.bf16.msra.mxu0 0
  %200 = vmatprep.subr.bf16.mxu0 0
  %201 = vmatpush1.bf16.msra.mxu0 0
  %202 = vmatprep.subr.bf16.mxu0 0
  %203 = vmatpush1.bf16.msra.mxu0 0
  %204 = vmatprep.subr.bf16.mxu0 0
  %205 = vmatpush1.bf16.msra.mxu0 0
  %206 = vmatprep.subr.bf16.mxu0 0
  %207 = vmatpush1.bf16.msra.mxu0 0
  %208 = vmatprep.subr.bf16.mxu0 0
  %209 = vmatpush1.bf16.msra.mxu0 0
  %210 = vmatprep.subr.bf16.mxu0 0
  %211 = vmatpush1.bf16.msra.mxu0 0
  %212 = vmatprep.subr.bf16.mxu0 0
  %213 = vmatpush1.bf16.msra.mxu0 0
  %214 = vmatprep.mubr.bf16.mxu0 0
  %215 = vmatmul.mubr.bf16.gmra.mrb[0].mxu0 %v118
  %v216 = vpop.f32.mrb[0].mxu0
  %v217 = vadd.f32 0.0, %v216
  %v218 = vpop.f32.mrb[0].mxu0
  %v219 = vpop.f32.mrb[0].mxu0
  %v220 = vadd.f32 0.0, %v219
  %v221 = vpop.f32.mrb[0].mxu0
  %222 = vmatprep.mubr.bf16.mxu0 0
  %223 = vmatmul.mubr.bf16.gmra.mrb[0].mxu0 %v119
  %v224 = vpop.f32.mrb[0].mxu0
  %v225 = vadd.f32 0.0, %v224
  %v226 = vpop.f32.mrb[0].mxu0
  %v227 = vpop.f32.mrb[0].mxu0
  %v228 = vadd.f32 0.0, %v227
  %v229 = vpop.f32.mrb[0].mxu0
  %230 = vmatprep.mubr.bf16.mxu0 0
  %231 = vmatmul.mubr.bf16.gmra.mrb[0].mxu0 %v120
  %v232 = vpop.f32.mrb[0].mxu0
  %v233 = vadd.f32 0.0, %v232
  %v234 = vpop.f32.mrb[0].mxu0
  %v235 = vpop.f32.mrb[0].mxu0
  %v236 = vadd.f32 0.0, %v235
  %v237 = vpop.f32.mrb[0].mxu0
  %238 = vmatprep.mubr.bf16.mxu0 0
  %239 = vmatmul.mubr.bf16.gmra.mrb[0].mxu0 %v121
  %v240 = vpop.f32.mrb[0].mxu0
  %v241 = vadd.f32 0.0, %v240
  %v242 = vpop.f32.mrb[0].mxu0
  %v243 = vpop.f32.mrb[0].mxu0
  %v244 = vadd.f32 0.0, %v243
  %v245 = vpop.f32.mrb[0].mxu0
  %246 = vmatprep.mubr.bf16.mxu0 0
  %247 = vmatmul.mubr.bf16.gmra.mrb[0].mxu0 %v122
  %v248 = vpop.f32.mrb[0].mxu0
  %v249 = vadd.f32 0.0, %v248
  %v250 = vpop.f32.mrb[0].mxu0
  %v251 = vpop.f32.mrb[0].mxu0
  %v252 = vadd.f32 0.0, %v251
  %v253 = vpop.f32.mrb[0].mxu0
  %254 = vmatprep.mubr.bf16.mxu0 0
  %255 = vmatmul.mubr.bf16.gmra.mrb[0].mxu0 %v123
  %v256 = vpop.f32.mrb[0].mxu0
  %v257 = vadd.f32 0.0, %v256
  %v258 = vpop.f32.mrb[0].mxu0
  %v259 = vpop.f32.mrb[0].mxu0
  %v260 = vadd.f32 0.0, %v259
  %v261 = vpop.f32.mrb[0].mxu0
  %262 = vmatprep.mubr.bf16.mxu0 0
  %263 = vmatmul.mubr.bf16.gmra.mrb[0].mxu0 %v124
  %v264 = vpop.f32.mrb[0].mxu0
  %v265 = vadd.f32 0.0, %v264
  %v266 = vpop.f32.mrb[0].mxu0
  %v267 = vpop.f32.mrb[0].mxu0
  %v268 = vadd.f32 0.0, %v267
  %v269 = vpop.f32.mrb[0].mxu0
  %270 = vmatprep.mubr.bf16.mxu0 0
  %271 = vmatmul.mubr.bf16.gmra.mrb[0].mxu0 %v125
  %v272 = vpop.f32.mrb[0].mxu0
  %v273 = vadd.f32 0.0, %v272
  %v274 = vpop.f32.mrb[0].mxu0
  %v275 = vpop.f32.mrb[0].mxu0
  %v276 = vadd.f32 0.0, %v275
  %v277 = vpop.f32.mrb[0].mxu0
  %278 = vdwg.mxu0
  %v279 = vadd.f32 %v38, %v217
  %v280 = vadd.f32 %v39, %v220
  %v281 = vadd.f32 %v40, %v225
  %v282 = vadd.f32 %v41, %v228
  %v283 = vadd.f32 %v42, %v233
  %v284 = vadd.f32 %v43, %v236
  %v285 = vadd.f32 %v44, %v241
  %v286 = vadd.f32 %v45, %v244
  %v287 = vadd.f32 %v46, %v249
  %v288 = vadd.f32 %v47, %v252
  %v289 = vadd.f32 %v48, %v257
  %v290 = vadd.f32 %v49, %v260
  %v291 = vadd.f32 %v50, %v265
  %v292 = vadd.f32 %v51, %v268
  %v293 = vadd.f32 %v52, %v273
  %v294 = vadd.f32 %v53, %v276
  %295 = vst [vmem:[#allocation2] sm:$0xff] %v279
  %296 = vst [vmem:[#allocation2 + $0x8] sm:$0xff] %v280
  %297 = vst [vmem:[#allocation2 + $0x10] sm:$0xff] %v281
  %298 = vst [vmem:[#allocation2 + $0x18] sm:$0xff] %v282
  %299 = vst [vmem:[#allocation2 + $0x20] sm:$0xff] %v283
  %300 = vst [vmem:[#allocation2 + $0x28] sm:$0xff] %v284
  %301 = vst [vmem:[#allocation2 + $0x30] sm:$0xff] %v285
  %302 = vst [vmem:[#allocation2 + $0x38] sm:$0xff] %v286
  %303 = vst [vmem:[#allocation2 + $0x40] sm:$0xff] %v287
  %304 = vst [vmem:[#allocation2 + $0x48] sm:$0xff] %v288
  %305 = vst [vmem:[#allocation2 + $0x50] sm:$0xff] %v289
  %306 = vst [vmem:[#allocation2 + $0x58] sm:$0xff] %v290
  %307 = vst [vmem:[#allocation2 + $0x60] sm:$0xff] %v291
  %308 = vst [vmem:[#allocation2 + $0x68] sm:$0xff] %v292
  %309 = vst [vmem:[#allocation2 + $0x70] sm:$0xff] %v293
  %310 = vst [vmem:[#allocation2 + $0x78] sm:$0xff] %v294
  // Predicated region
  $region22: #{pointwise_spatial_attention.5} parent=0 // pred_check
    %p311 = pneg %p18
  $region23: #{pointwise_spatial_attention.5} parent=0 // pred_check_branch
    %313 = sbr.rel (%p311) target = $region25
  $region24: #{pointwise_spatial_attention.5} parent=0 // pred_region
    %v314 = vld [vmem:[#allocation2] sm:$0xff]
    %v315 = vld [vmem:[#allocation2 + $0x8] sm:$0xff]
    %v316 = vld [vmem:[#allocation2 + $0x10] sm:$0xff]
    %v317 = vld [vmem:[#allocation2 + $0x18] sm:$0xff]
    %v318 = vld [vmem:[#allocation2 + $0x20] sm:$0xff]
    %v319 = vld [vmem:[#allocation2 + $0x28] sm:$0xff]
    %v320 = vld [vmem:[#allocation2 + $0x30] sm:$0xff]
    %v321 = vld [vmem:[#allocation2 + $0x38] sm:$0xff]
    %v322 = vld [vmem:[#allocation2 + $0x40] sm:$0xff]
    %v323 = vld [vmem:[#allocation2 + $0x48] sm:$0xff]
    %v324 = vld [vmem:[#allocation2 + $0x50] sm:$0xff]
    %v325 = vld [vmem:[#allocation2 + $0x58] sm:$0xff]
    %v326 = vld [vmem:[#allocation2 + $0x60] sm:$0xff]
    %v327 = vld [vmem:[#allocation2 + $0x68] sm:$0xff]
    %v328 = vld [vmem:[#allocation2 + $0x70] sm:$0xff]
    %v329 = vld [vmem:[#allocation2 + $0x78] sm:$0xff]
    %v330 = vld [vmem:[%s2] sm:$0x1]
    %v332 = vlaneseq
    %v333 = vshrl.u32 %v332, 7
    %v334 = vsub.s32 0, %v333
    %v335 = vrot.slane %v330, %v334
    %v337 = vmul.f32 %v314, %v335
    %v338 = vmul.f32 %v315, %v335
    %v339 = vmul.f32 %v316, %v335
    %v340 = vmul.f32 %v317, %v335
    %v341 = vmul.f32 %v318, %v335
    %v342 = vmul.f32 %v319, %v335
    %v343 = vmul.f32 %v320, %v335
    %v344 = vmul.f32 %v321, %v335
    %v345 = vmul.f32 %v322, %v335
    %v346 = vmul.f32 %v323, %v335
    %v347 = vmul.f32 %v324, %v335
    %v348 = vmul.f32 %v325, %v335
    %v349 = vmul.f32 %v326, %v335
    %v350 = vmul.f32 %v327, %v335
    %v351 = vmul.f32 %v328, %v335
    %v352 = vmul.f32 %v329, %v335
    %v353 = vld [vmem:[%s3] sm:$0x1]
    %v355 = vlaneseq
    %v356 = vshrl.u32 %v355, 7
    %v357 = vsub.s32 0, %v356
    %v358 = vrot.slane %v353, %v357
    %v360 = vadd.f32 %v337, %v358
    %v361 = vadd.f32 %v338, %v358
    %v362 = vadd.f32 %v339, %v358
    %v363 = vadd.f32 %v340, %v358
    %v364 = vadd.f32 %v341, %v358
    %v365 = vadd.f32 %v342, %v358
    %v366 = vadd.f32 %v343, %v358
    %v367 = vadd.f32 %v344, %v358
    %v368 = vadd.f32 %v345, %v358
    %v369 = vadd.f32 %v346, %v358
    %v370 = vadd.f32 %v347, %v358
    %v371 = vadd.f32 %v348, %v358
    %v372 = vadd.f32 %v349, %v358
    %v373 = vadd.f32 %v350, %v358
    %v374 = vadd.f32 %v351, %v358
    %v375 = vadd.f32 %v352, %v358
    %v376 = vmax.f32 %v360, 0.0
    %v377 = vmax.f32 %v361, 0.0
    %v378 = vmax.f32 %v362, 0.0
    %v379 = vmax.f32 %v363, 0.0
    %v380 = vmax.f32 %v364, 0.0
    %v381 = vmax.f32 %v365, 0.0
    %v382 = vmax.f32 %v366, 0.0
    %v383 = vmax.f32 %v367, 0.0
    %v384 = vmax.f32 %v368, 0.0
    %v385 = vmax.f32 %v369, 0.0
    %v386 = vmax.f32 %v370, 0.0
    %v387 = vmax.f32 %v371, 0.0
    %v388 = vmax.f32 %v372, 0.0
    %v389 = vmax.f32 %v373, 0.0
    %v390 = vmax.f32 %v374, 0.0
    %v391 = vmax.f32 %v375, 0.0
    %v392 = vpack.c.bf16 %v377, %v376
    %v393 = vpack.c.bf16 %v379, %v378
    %v394 = vpack.c.bf16 %v381, %v380
    %v395 = vpack.c.bf16 %v383, %v382
    %v396 = vpack.c.bf16 %v385, %v384
    %v397 = vpack.c.bf16 %v387, %v386
    %v398 = vpack.c.bf16 %v389, %v388
    %v399 = vpack.c.bf16 %v391, %v390
    %v408 = vunpack.c.l.b16 %v392
    %v409 = vunpack.c.h.b16 %v392
    %v410 = vunpack.c.l.b16 %v393
    %v411 = vunpack.c.h.b16 %v393
    %v412 = vunpack.c.l.b16 %v394
    %v413 = vunpack.c.h.b16 %v394
    %v414 = vunpack.c.l.b16 %v395
    %v415 = vunpack.c.h.b16 %v395
    %v416 = vunpack.c.l.b16 %v396
    %v417 = vunpack.c.h.b16 %v396
    %v418 = vunpack.c.l.b16 %v397
    %v419 = vunpack.c.h.b16 %v397
    %v420 = vunpack.c.l.b16 %v398
    %v421 = vunpack.c.h.b16 %v398
    %v422 = vunpack.c.l.b16 %v399
    %v423 = vunpack.c.h.b16 %v399
    %v424 = vpack.c.b16 %v408, %v408
    %v425 = vpack.c.b16 %v409, %v409
    %v426 = vpack.c.b16 %v410, %v410
    %v427 = vpack.c.b16 %v411, %v411
    %v428 = vpack.c.b16 %v412, %v412
    %v429 = vpack.c.b16 %v413, %v413
    %v430 = vpack.c.b16 %v414, %v414
    %v431 = vpack.c.b16 %v415, %v415
    %v432 = vpack.c.b16 %v416, %v416
    %v433 = vpack.c.b16 %v417, %v417
    %v434 = vpack.c.b16 %v418, %v418
    %v435 = vpack.c.b16 %v419, %v419
    %v436 = vpack.c.b16 %v420, %v420
    %v437 = vpack.c.b16 %v421, %v421
    %v438 = vpack.c.b16 %v422, %v422
    %v439 = vpack.c.b16 %v423, %v423
    %456 = vst [vmem:[%s4] sm:$0xf] %v424
    %457 = vst [vmem:[%s4 + $0x4] sm:$0xf] %v425
    %458 = vst [vmem:[%s4 + $0x8] sm:$0xf] %v426
    %459 = vst [vmem:[%s4 + $0xc] sm:$0xf] %v427
    %460 = vst [vmem:[%s4 + $0x10] sm:$0xf] %v428
    %461 = vst [vmem:[%s4 + $0x14] sm:$0xf] %v429
    %462 = vst [vmem:[%s4 + $0x18] sm:$0xf] %v430
    %463 = vst [vmem:[%s4 + $0x1c] sm:$0xf] %v431
    %464 = vst [vmem:[%s4 + $0x20] sm:$0xf] %v432
    %465 = vst [vmem:[%s4 + $0x24] sm:$0xf] %v433
    %466 = vst [vmem:[%s4 + $0x28] sm:$0xf] %v434
    %467 = vst [vmem:[%s4 + $0x2c] sm:$0xf] %v435
    %468 = vst [vmem:[%s4 + $0x30] sm:$0xf] %v436
    %469 = vst [vmem:[%s4 + $0x34] sm:$0xf] %v437
    %470 = vst [vmem:[%s4 + $0x38] sm:$0xf] %v438
    %471 = vst [vmem:[%s4 + $0x3c] sm:$0xf] %v439
  $region25: #{pointwise_spatial_attention.5} parent=0 // pred_fallthru
    _
  // Predicated region
  $region26: #{pointwise_spatial_attention.5} parent=0 // pred_check
    _
  $region27: #{pointwise_spatial_attention.5} parent=0 // pred_check_branch
    %473 = sbr.rel (0) target = $region29
  $region28: #{pointwise_spatial_attention.5} parent=0 // pred_region
    _
  $region29: #{pointwise_spatial_attention.5} parent=0 // pred_fallthru
    _
  // Predicated region
  $region30: #{pointwise_spatial_attention.5} parent=0 // pred_check
    _
  $region31: #{pointwise_spatial_attention.5} parent=0 // pred_check_branch
    %475 = sbr.rel (0) target = $region33
  $region32: #{pointwise_spatial_attention.5} parent=0 // pred_region
    _
  $region33: #{pointwise_spatial_attention.5} parent=0 // pred_fallthru
    _

// kernel: pointwise_spatial_attention.6
$region0: #{pointwise_spatial_attention.6}
  #allocation0 [shape = 'u32[]', space=smem, size = 0x4, offset = 0x4, fixed_abs, tag = 'smem constant byte address 0x4 - core index']
  #allocation1 [shape = 'u32[144,128]{1,0:T(1,128)}', space=vmem, size = 0x12000, scoped, tag = 'internal scratch']
  %s0 = inlined_call_operand.vmem [shape: bf16[2,2,64,128], index: 0, kind: input, shape index: {}, may-alias: {0,5}]
  %s1 = inlined_call_operand.vmem [shape: bf16[2,128,128], index: 1, kind: input, shape index: {}]
  %s2 = inlined_call_operand.vmem [shape: f32[2,1,128], index: 2, kind: input, shape index: {}]
  %s3 = inlined_call_operand.vmem [shape: f32[2,1,128], index: 3, kind: input, shape index: {}]
  %s4 = inlined_call_operand.vmem [shape: bf16[2,128,64], index: 4, kind: input, shape index: {}]
  %s5 = inlined_call_operand.vmem [shape: bf16[2,2,64,128], index: 5, kind: input, shape index: {}, may-alias: {0,5}]
  %s6 = inlined_call_operand.vmem [shape: f32[2,2,64,128], index: 6, kind: output, shape index: {}]
  %s7 = sld [smem:[#allocation0]]
  $region57: #{pointwise_spatial_attention.6} parent=0
    _
  %s9 = ssub.s32 1, %s7
  %s10 = scalar_select 0, %s9, %s7
  loop: start=0, step=1, limit=6
  $region2: #{pointwise_spatial_attention.6} parent=0 // loop_pre_header
    _
  $region3: #{pointwise_spatial_attention.6} parent=0 // loop_header
    %s12 = sphi 0, %s16
    %p13 = scmp.ge.s32.totalorder %s12, 6
    %s19 = sphi 0, %s38
    %s20 = sphi 0, %s34
    %s21 = sphi 0, %s30
    %s22 = sphi 0, %s19
    %s23 = sphi 0, %s20
    %s24 = sphi 0, %s21
    %s25 = sphi 0, %s22
    %s26 = sphi 0, %s23
    %s27 = sphi 0, %s24
    %s45 = sphi 0, %s47
    %s48 = sphi 0, %s45
    %s49 = sphi 0, %s48
    %s65 = sphi 0, %s49
    %s71 = sphi 0, %s73
    %s74 = sphi 0, %s71
    %s75 = sphi 0, %s74
    %s91 = sphi 0, %s75
    %s97 = sphi 0, %s99
    %s100 = sphi 0, %s97
    %s101 = sphi 0, %s100
    %s117 = sphi 0, %s101
    %s123 = sphi 0, %s125
    %s126 = sphi 0, %s123
    %s127 = sphi 0, %s126
    %s143 = sphi 0, %s127
    %s149 = sphi 0, %s151
    %s152 = sphi 0, %s149
    %s153 = sphi 0, %s152
    %s169 = sphi 0, %s153
    %s177 = sphi 0, %s179
    %s180 = sphi 0, %s177
    %s181 = sphi 0, %s180
    %s197 = sphi 0, %s181
    %s207 = sphi 0, %s209
    %s210 = sphi 0, %s207
    %s211 = sphi 0, %s210
    %s227 = sphi 0, %s211
  $region4: #{pointwise_spatial_attention.6} parent=0 // loop_header_branch
    %15 = sbr.rel (%p13) target = $region8
  $region5: #{pointwise_spatial_attention.6} parent=0 // loop_body
    %s17 = ssub.s32 %s12, 1
    %s18 = ssub.s32 %s12, 2
    %s28 = sadd.s32 1, %s21
    %p29 = scmp.ge.s32.totalorder %s28, 1
    %s30 = scalar_select %p29, 0, %s28
    %s31 = sadd.s32 1, %s20
    %s32 = scalar_select %p29, %s31, %s20
    %p33 = scmp.ge.s32.totalorder %s32, 2
    %s34 = scalar_select %p33, 0, %s32
    %s35 = sadd.s32 1, %s19
    %s36 = scalar_select %p33, %s35, %s19
    %p37 = scmp.ge.s32.totalorder %s36, 2
    %s38 = scalar_select %p37, 0, %s36
    %s39 = ssub.s32 %s19, %s38
    %s40 = ssub.s32 %s20, %s34
    %s41 = sor.u32 %s39, %s40
    %s42 = ssub.s32 %s21, %s30
    %s43 = sor.u32 %s41, %s42
    %p44 = scmp.eq.s32.totalorder %s43, 0
    %s46 = sadd.s32 %s45, 1
    %s47 = scalar_select %p44, %s45, %s46
    %p50 = pneg %p44
    %p51 = scmp.eq.s32.totalorder %s12, 3
    %p52 = por %p50, %p51
    %p53 = scmp.ne.s32.totalorder %s45, %s48
    %p54 = scmp.eq.s32.totalorder %s12, 0
    %p55 = por %p53, %p54
    %p56 = scmp.ne.s32.totalorder %s45, %s48
    %p57 = scmp.eq.s32.totalorder %s17, 3
    %p58 = por %p56, %p57
    %p59 = scmp.ne.s32.totalorder %s48, %s49
    %p60 = scmp.eq.s32.totalorder %s17, 0
    %p61 = por %p59, %p60
    %p62 = scmp.ne.s32.totalorder %s48, %s49
    %p63 = scmp.eq.s32.totalorder %s18, 3
    %p64 = por %p62, %p63
    %p66 = scmp.ne.s32.totalorder %s49, %s65
    %p67 = scmp.eq.s32.totalorder %s18, 0
    %p68 = por %p66, %p67
    %s69 = ssub.s32 %s19, %s38
    %p70 = scmp.eq.s32.totalorder %s69, 0
    %s72 = sadd.s32 %s71, 1
    %s73 = scalar_select %p70, %s71, %s72
    %p76 = pneg %p70
    %p77 = scmp.eq.s32.totalorder %s12, 3
    %p78 = por %p76, %p77
    %p79 = scmp.ne.s32.totalorder %s71, %s74
    %p80 = scmp.eq.s32.totalorder %s12, 0
    %p81 = por %p79, %p80
    %p82 = scmp.ne.s32.totalorder %s71, %s74
    %p83 = scmp.eq.s32.totalorder %s17, 3
    %p84 = por %p82, %p83
    %p85 = scmp.ne.s32.totalorder %s74, %s75
    %p86 = scmp.eq.s32.totalorder %s17, 0
    %p87 = por %p85, %p86
    %p88 = scmp.ne.s32.totalorder %s74, %s75
    %p89 = scmp.eq.s32.totalorder %s18, 3
    %p90 = por %p88, %p89
    %p92 = scmp.ne.s32.totalorder %s75, %s91
    %p93 = scmp.eq.s32.totalorder %s18, 0
    %p94 = por %p92, %p93
    %s95 = ssub.s32 %s19, %s38
    %p96 = scmp.eq.s32.totalorder %s95, 0
    %s98 = sadd.s32 %s97, 1
    %s99 = scalar_select %p96, %s97, %s98
    %p102 = pneg %p96
    %p103 = scmp.eq.s32.totalorder %s12, 3
    %p104 = por %p102, %p103
    %p105 = scmp.ne.s32.totalorder %s97, %s100
    %p106 = scmp.eq.s32.totalorder %s12, 0
    %p107 = por %p105, %p106
    %p108 = scmp.ne.s32.totalorder %s97, %s100
    %p109 = scmp.eq.s32.totalorder %s17, 3
    %p110 = por %p108, %p109
    %p111 = scmp.ne.s32.totalorder %s100, %s101
    %p112 = scmp.eq.s32.totalorder %s17, 0
    %p113 = por %p111, %p112
    %p114 = scmp.ne.s32.totalorder %s100, %s101
    %p115 = scmp.eq.s32.totalorder %s18, 3
    %p116 = por %p114, %p115
    %p118 = scmp.ne.s32.totalorder %s101, %s117
    %p119 = scmp.eq.s32.totalorder %s18, 0
    %p120 = por %p118, %p119
    %s121 = ssub.s32 %s19, %s38
    %p122 = scmp.eq.s32.totalorder %s121, 0
    %s124 = sadd.s32 %s123, 1
    %s125 = scalar_select %p122, %s123, %s124
    %p128 = pneg %p122
    %p129 = scmp.eq.s32.totalorder %s12, 3
    %p130 = por %p128, %p129
    %p131 = scmp.ne.s32.totalorder %s123, %s126
    %p132 = scmp.eq.s32.totalorder %s12, 0
    %p133 = por %p131, %p132
    %p134 = scmp.ne.s32.totalorder %s123, %s126
    %p135 = scmp.eq.s32.totalorder %s17, 3
    %p136 = por %p134, %p135
    %p137 = scmp.ne.s32.totalorder %s126, %s127
    %p138 = scmp.eq.s32.totalorder %s17, 0
    %p139 = por %p137, %p138
    %p140 = scmp.ne.s32.totalorder %s126, %s127
    %p141 = scmp.eq.s32.totalorder %s18, 3
    %p142 = por %p140, %p141
    %p144 = scmp.ne.s32.totalorder %s127, %s143
    %p145 = scmp.eq.s32.totalorder %s18, 0
    %p146 = por %p144, %p145
    %s147 = ssub.s32 %s19, %s38
    %p148 = scmp.eq.s32.totalorder %s147, 0
    %s150 = sadd.s32 %s149, 1
    %s151 = scalar_select %p148, %s149, %s150
    %p154 = pneg %p148
    %p155 = scmp.eq.s32.totalorder %s12, 3
    %p156 = por %p154, %p155
    %p157 = scmp.ne.s32.totalorder %s149, %s152
    %p158 = scmp.eq.s32.totalorder %s12, 0
    %p159 = por %p157, %p158
    %p160 = scmp.ne.s32.totalorder %s149, %s152
    %p161 = scmp.eq.s32.totalorder %s17, 3
    %p162 = por %p160, %p161
    %p163 = scmp.ne.s32.totalorder %s152, %s153
    %p164 = scmp.eq.s32.totalorder %s17, 0
    %p165 = por %p163, %p164
    %p166 = scmp.ne.s32.totalorder %s152, %s153
    %p167 = scmp.eq.s32.totalorder %s18, 3
    %p168 = por %p166, %p167
    %p170 = scmp.ne.s32.totalorder %s153, %s169
    %p171 = scmp.eq.s32.totalorder %s18, 0
    %p172 = por %p170, %p171
    %s173 = ssub.s32 %s19, %s38
    %s174 = ssub.s32 %s20, %s34
    %s175 = sor.u32 %s173, %s174
    %p176 = scmp.eq.s32.totalorder %s175, 0
    %s178 = sadd.s32 %s177, 1
    %s179 = scalar_select %p176, %s177, %s178
    %p182 = pneg %p176
    %p183 = scmp.eq.s32.totalorder %s12, 3
    %p184 = por %p182, %p183
    %p185 = scmp.ne.s32.totalorder %s177, %s180
    %p186 = scmp.eq.s32.totalorder %s12, 0
    %p187 = por %p185, %p186
    %p188 = scmp.ne.s32.totalorder %s177, %s180
    %p189 = scmp.eq.s32.totalorder %s17, 3
    %p190 = por %p188, %p189
    %p191 = scmp.ne.s32.totalorder %s180, %s181
    %p192 = scmp.eq.s32.totalorder %s17, 0
    %p193 = por %p191, %p192
    %p194 = scmp.ne.s32.totalorder %s180, %s181
    %p195 = scmp.eq.s32.totalorder %s18, 3
    %p196 = por %p194, %p195
    %p198 = scmp.ne.s32.totalorder %s181, %s197
    %p199 = scmp.eq.s32.totalorder %s18, 0
    %p200 = por %p198, %p199
    %s201 = ssub.s32 %s19, %s38
    %s202 = ssub.s32 %s20, %s34
    %s203 = sor.u32 %s201, %s202
    %s204 = ssub.s32 %s21, %s30
    %s205 = sor.u32 %s203, %s204
    %p206 = scmp.eq.s32.totalorder %s205, 0
    %s208 = sadd.s32 %s207, 1
    %s209 = scalar_select %p206, %s207, %s208
    %p212 = pneg %p206
    %p213 = scmp.eq.s32.totalorder %s12, 3
    %p214 = por %p212, %p213
    %p215 = scmp.ne.s32.totalorder %s207, %s210
    %p216 = scmp.eq.s32.totalorder %s12, 0
    %p217 = por %p215, %p216
    %p218 = scmp.ne.s32.totalorder %s207, %s210
    %p219 = scmp.eq.s32.totalorder %s17, 3
    %p220 = por %p218, %p219
    %p221 = scmp.ne.s32.totalorder %s210, %s211
    %p222 = scmp.eq.s32.totalorder %s17, 0
    %p223 = por %p221, %p222
    %p224 = scmp.ne.s32.totalorder %s210, %s211
    %p225 = scmp.eq.s32.totalorder %s18, 3
    %p226 = por %p224, %p225
    %p228 = scmp.ne.s32.totalorder %s211, %s227
    %p229 = scmp.eq.s32.totalorder %s18, 0
    %p230 = por %p228, %p229
    %p231 = scmp.le.s32.totalorder 1, %s12
    %p232 = scmp.lt.s32.totalorder %s12, 5
    %p233 = pnand %p231, %p232
    %p234 = pneg %p233
    // Predicated region
    $region9: #{pointwise_spatial_attention.6} parent=5 // pred_check
      _
    $region10: #{pointwise_spatial_attention.6} parent=5 // pred_check_branch
      %236 = sbr.rel (%p233) target = $region12
    $region11: #{pointwise_spatial_attention.6} parent=5 // pred_region
      %s237 = ssub.s32 %s12, 1
    $region12: #{pointwise_spatial_attention.6} parent=5 // pred_fallthru
      _
    %p238 = scmp.lt.s32.totalorder %s12, 4
    // Predicated region
    $region13: #{pointwise_spatial_attention.6} parent=5 // pred_check
      %p239 = pneg %p238
    $region14: #{pointwise_spatial_attention.6} parent=5 // pred_check_branch
      %241 = sbr.rel (%p239) target = $region16
    $region15: #{pointwise_spatial_attention.6} parent=5 // pred_region
      // Predicated region
      $region17: #{pointwise_spatial_attention.6} parent=15 // pred_check
        %p242 = pneg %p55
      $region18: #{pointwise_spatial_attention.6} parent=15 // pred_check_branch
        %244 = sbr.rel (%p242) target = $region20
      $region19: #{pointwise_spatial_attention.6} parent=15 // pred_region
        %s245 = smul.u32 8, %s21
        %p246 = scmp.lt.s32.totalorder %s19, 1
        %s247 = scalar_select %p246, %s19, 1
        %p248 = scmp.lt.s32.totalorder %s20, 1
        %s249 = scalar_select %p248, %s20, 1
        %p250 = scmp.lt.s32.totalorder %s245, 7
        %s251 = scalar_select %p250, %s245, 7
        %s252 = smul.addr %s249, 8
        %s253 = sadd.s32 %s251, %s252
        %s254 = smul.addr %s247, 16
        %s255 = sadd.s32 %s253, %s254
        %s256 = smul.addr %s255, 4
        %s257 = scalar_lea.vmem %s0, %s256
        %s258 = smul.u32 8, %s21
      $region20: #{pointwise_spatial_attention.6} parent=15 // pred_fallthru
        _
      // Predicated region
      $region21: #{pointwise_spatial_attention.6} parent=15 // pred_check
        %p259 = pneg %p81
      $region22: #{pointwise_spatial_attention.6} parent=15 // pred_check_branch
        %261 = sbr.rel (%p259) target = $region24
      $region23: #{pointwise_spatial_attention.6} parent=15 // pred_region
        %p262 = scmp.lt.s32.totalorder %s19, 1
        %s263 = scalar_select %p262, %s19, 1
        %s264 = smul.addr %s263, 16
        %s265 = smul.addr %s264, 4
        %s266 = scalar_lea.vmem %s1, %s265
      $region24: #{pointwise_spatial_attention.6} parent=15 // pred_fallthru
        _
      // Predicated region
      $region25: #{pointwise_spatial_attention.6} parent=15 // pred_check
        %p267 = pneg %p107
      $region26: #{pointwise_spatial_attention.6} parent=15 // pred_check_branch
        %269 = sbr.rel (%p267) target = $region28
      $region27: #{pointwise_spatial_attention.6} parent=15 // pred_region
        %p270 = scmp.lt.s32.totalorder %s19, 1
        %s271 = scalar_select %p270, %s19, 1
        %s272 = scalar_lea.vmem %s2, %s271
      $region28: #{pointwise_spatial_attention.6} parent=15 // pred_fallthru
        _
      // Predicated region
      $region29: #{pointwise_spatial_attention.6} parent=15 // pred_check
        %p273 = pneg %p133
      $region30: #{pointwise_spatial_attention.6} parent=15 // pred_check_branch
        %275 = sbr.rel (%p273) target = $region32
      $region31: #{pointwise_spatial_attention.6} parent=15 // pred_region
        %p276 = scmp.lt.s32.totalorder %s19, 1
        %s277 = scalar_select %p276, %s19, 1
        %s278 = scalar_lea.vmem %s3, %s277
      $region32: #{pointwise_spatial_attention.6} parent=15 // pred_fallthru
        _
      // Predicated region
      $region33: #{pointwise_spatial_attention.6} parent=15 // pred_check
        %p279 = pneg %p159
      $region34: #{pointwise_spatial_attention.6} parent=15 // pred_check_branch
        %281 = sbr.rel (%p279) target = $region36
      $region35: #{pointwise_spatial_attention.6} parent=15 // pred_region
        %p282 = scmp.lt.s32.totalorder %s19, 1
        %s283 = scalar_select %p282, %s19, 1
        %s284 = smul.addr %s283, 16
        %s285 = smul.addr %s284, 4
        %s286 = scalar_lea.vmem %s4, %s285
      $region36: #{pointwise_spatial_attention.6} parent=15 // pred_fallthru
        _
      // Predicated region
      $region37: #{pointwise_spatial_attention.6} parent=15 // pred_check
        %p287 = pneg %p187
      $region38: #{pointwise_spatial_attention.6} parent=15 // pred_check_branch
        %289 = sbr.rel (%p287) target = $region40
      $region39: #{pointwise_spatial_attention.6} parent=15 // pred_region
        %p290 = scmp.lt.s32.totalorder %s19, 1
        %s291 = scalar_select %p290, %s19, 1
        %p292 = scmp.lt.s32.totalorder %s20, 1
        %s293 = scalar_select %p292, %s20, 1
        %s294 = smul.addr %s293, 8
        %s295 = smul.addr %s291, 16
        %s296 = sadd.s32 %s294, %s295
        %s297 = smul.addr %s296, 4
        %s298 = scalar_lea.vmem %s5, %s297
      $region40: #{pointwise_spatial_attention.6} parent=15 // pred_fallthru
        _
    $region16: #{pointwise_spatial_attention.6} parent=5 // pred_fallthru
      _
    %p299 = scmp.le.s32.totalorder 1, %s12
    %p300 = scmp.lt.s32.totalorder %s12, 5
    %p301 = pnand %p299, %p300
    %p302 = pneg %p301
    // Predicated region
    $region41: #{pointwise_spatial_attention.6} parent=5 // pred_check
      _
    $region42: #{pointwise_spatial_attention.6} parent=5 // pred_check_branch
      %304 = sbr.rel (%p301) target = $region44
    $region43: #{pointwise_spatial_attention.6} parent=5 // pred_region
      %s305 = ssub.s32 %s12, 1
      %s306 = smul.u32 8, %s24
      %p307 = scmp.lt.s32.totalorder %s22, 1
      %s308 = scalar_select %p307, %s22, 1
      %p309 = scmp.lt.s32.totalorder %s23, 1
      %s310 = scalar_select %p309, %s23, 1
      %p311 = scmp.lt.s32.totalorder %s306, 7
      %s312 = scalar_select %p311, %s306, 7
      %s313 = smul.addr %s310, 8
      %s314 = sadd.s32 %s312, %s313
      %s315 = smul.addr %s308, 16
      %s316 = sadd.s32 %s314, %s315
      %s317 = smul.addr %s316, 4
      %s318 = scalar_lea.vmem %s0, %s317
      %p319 = pneg %p61
      %p320 = pneg %p58
      %p321 = scmp.lt.s32.totalorder %s22, 1
      %s322 = scalar_select %p321, %s22, 1
      %s323 = smul.addr %s322, 16
      %s324 = smul.addr %s323, 4
      %s325 = scalar_lea.vmem %s1, %s324
      %p326 = pneg %p87
      %p327 = pneg %p84
      %p328 = scmp.lt.s32.totalorder %s22, 1
      %s329 = scalar_select %p328, %s22, 1
      %s330 = scalar_lea.vmem %s2, %s329
      %p331 = pneg %p113
      %p332 = pneg %p110
      %p333 = scmp.lt.s32.totalorder %s22, 1
      %s334 = scalar_select %p333, %s22, 1
      %s335 = scalar_lea.vmem %s3, %s334
      %p336 = pneg %p139
      %p337 = pneg %p136
      %p338 = scmp.lt.s32.totalorder %s22, 1
      %s339 = scalar_select %p338, %s22, 1
      %s340 = smul.addr %s339, 16
      %s341 = smul.addr %s340, 4
      %s342 = scalar_lea.vmem %s4, %s341
      %p343 = pneg %p165
      %p344 = pneg %p162
      %p345 = scmp.lt.s32.totalorder %s22, 1
      %s346 = scalar_select %p345, %s22, 1
      %p347 = scmp.lt.s32.totalorder %s23, 1
      %s348 = scalar_select %p347, %s23, 1
      %s349 = smul.addr %s348, 8
      %s350 = smul.addr %s346, 16
      %s351 = sadd.s32 %s349, %s350
      %s352 = smul.addr %s351, 4
      %s353 = scalar_lea.vmem %s5, %s352
      %p354 = pneg %p193
      %p355 = pneg %p190
      %p356 = pneg %p223
      %p357 = pneg %p220
      %s358 = smul.u32 8, %s24
      %p359 = scmp.lt.s32.totalorder %s22, 1
      %s360 = scalar_select %p359, %s22, 1
      %p361 = scmp.lt.s32.totalorder %s23, 1
      %s362 = scalar_select %p361, %s23, 1
      %p363 = scmp.lt.s32.totalorder %s358, 7
      %s364 = scalar_select %p363, %s358, 7
      %s365 = smul.addr %s362, 8
      %s366 = sadd.s32 %s364, %s365
      %s367 = smul.addr %s360, 16
      %s368 = sadd.s32 %s366, %s367
      %s369 = smul.addr %s368, 8
      %s370 = scalar_lea.vmem %s6, %s369
      %s371 = smul.u32 8, %s24
      %p372 = scmp.lt.s32.totalorder %s22, 1
      %s373 = scalar_select %p372, %s22, 1
      %p374 = scmp.lt.s32.totalorder %s23, 1
      %s375 = scalar_select %p374, %s23, 1
      %p376 = scmp.lt.s32.totalorder %s371, 7
      %s377 = scalar_select %p376, %s371, 7
      %s378 = smul.addr %s375, 8
      %s379 = sadd.s32 %s377, %s378
      %s380 = smul.addr %s373, 16
      %s381 = sadd.s32 %s379, %s380
      %s382 = smul.addr %s381, 4
      %s383 = scalar_lea.vmem %s0, %s382
      %s384 = smul.u32 8, %s24
      %p385 = scmp.lt.s32.totalorder %s22, 1
      %s386 = scalar_select %p385, %s22, 1
      %s387 = smul.addr %s386, 16
      %s388 = smul.addr %s387, 4
      %s389 = scalar_lea.vmem %s1, %s388
      %p390 = scmp.lt.s32.totalorder %s22, 1
      %s391 = scalar_select %p390, %s22, 1
      %s392 = scalar_lea.vmem %s2, %s391
      %p393 = scmp.lt.s32.totalorder %s22, 1
      %s394 = scalar_select %p393, %s22, 1
      %s395 = scalar_lea.vmem %s3, %s394
      %p396 = scmp.lt.s32.totalorder %s22, 1
      %s397 = scalar_select %p396, %s22, 1
      %s398 = smul.addr %s397, 16
      %s399 = smul.addr %s398, 4
      %s400 = scalar_lea.vmem %s4, %s399
      %p401 = scmp.lt.s32.totalorder %s22, 1
      %s402 = scalar_select %p401, %s22, 1
      %p403 = scmp.lt.s32.totalorder %s23, 1
      %s404 = scalar_select %p403, %s23, 1
      %s405 = smul.addr %s404, 8
      %s406 = smul.addr %s402, 16
      %s407 = sadd.s32 %s405, %s406
      %s408 = smul.addr %s407, 4
      %s409 = scalar_lea.vmem %s5, %s408
      %s410 = smul.u32 8, %s24
      %p411 = scmp.lt.s32.totalorder %s22, 1
      %s412 = scalar_select %p411, %s22, 1
      %p413 = scmp.lt.s32.totalorder %s23, 1
      %s414 = scalar_select %p413, %s23, 1
      %p415 = scmp.lt.s32.totalorder %s410, 7
      %s416 = scalar_select %p415, %s410, 7
      %s417 = smul.addr %s414, 8
      %s418 = sadd.s32 %s416, %s417
      %s419 = smul.addr %s412, 16
      %s420 = sadd.s32 %s418, %s419
      %s421 = smul.addr %s420, 8
      %s422 = scalar_lea.vmem %s6, %s421
      %s423 = smul.u32 8, %s24
      %v425 = vld [vmem:[%s383] sm:$0xf]
      %v426 = vld [vmem:[%s383 + $0x4] sm:$0xf]
      %v427 = vld [vmem:[%s383 + $0x8] sm:$0xf]
      %v428 = vld [vmem:[%s383 + $0xc] sm:$0xf]
      %v429 = vld [vmem:[%s383 + $0x10] sm:$0xf]
      %v430 = vld [vmem:[%s383 + $0x14] sm:$0xf]
      %v431 = vld [vmem:[%s383 + $0x18] sm:$0xf]
      %v432 = vld [vmem:[%s383 + $0x1c] sm:$0xf]
      %v433 = vld [vmem:[%s389] sm:$0xf]
      %v434 = vld [vmem:[%s389 + $0x4] sm:$0xf]
      %v435 = vld [vmem:[%s389 + $0x8] sm:$0xf]
      %v436 = vld [vmem:[%s389 + $0xc] sm:$0xf]
      %v437 = vld [vmem:[%s389 + $0x10] sm:$0xf]
      %v438 = vld [vmem:[%s389 + $0x14] sm:$0xf]
      %v439 = vld [vmem:[%s389 + $0x18] sm:$0xf]
      %v440 = vld [vmem:[%s389 + $0x1c] sm:$0xf]
      %v441 = vld [vmem:[%s389 + $0x20] sm:$0xf]
      %v442 = vld [vmem:[%s389 + $0x24] sm:$0xf]
      %v443 = vld [vmem:[%s389 + $0x28] sm:$0xf]
      %v444 = vld [vmem:[%s389 + $0x2c] sm:$0xf]
      %v445 = vld [vmem:[%s389 + $0x30] sm:$0xf]
      %v446 = vld [vmem:[%s389 + $0x34] sm:$0xf]
      %v447 = vld [vmem:[%s389 + $0x38] sm:$0xf]
      %v448 = vld [vmem:[%s389 + $0x3c] sm:$0xf]
      %v457 = vunpack.c.l.b16 %v425
      %v458 = vunpack.c.l.b16 %v426
      %v459 = vunpack.c.l.b16 %v427
      %v460 = vunpack.c.l.b16 %v428
      %v461 = vunpack.c.l.b16 %v429
      %v462 = vunpack.c.l.b16 %v430
      %v463 = vunpack.c.l.b16 %v431
      %v464 = vunpack.c.l.b16 %v432
      %v465 = vpack.c.b16 %v458, %v457
      %v466 = vpack.c.b16 %v460, %v459
      %v467 = vpack.c.b16 %v462, %v461
      %v468 = vpack.c.b16 %v464, %v463
      %v489 = vunpack.c.l.b16 %v433
      %v490 = vunpack.c.l.b16 %v434
      %v491 = vunpack.c.l.b16 %v435
      %v492 = vunpack.c.l.b16 %v436
      %v493 = vunpack.c.l.b16 %v437
      %v494 = vunpack.c.l.b16 %v438
      %v495 = vunpack.c.l.b16 %v439
      %v496 = vunpack.c.l.b16 %v440
      %v497 = vunpack.c.l.b16 %v441
      %v498 = vunpack.c.l.b16 %v442
      %v499 = vunpack.c.l.b16 %v443
      %v500 = vunpack.c.l.b16 %v444
      %v501 = vunpack.c.l.b16 %v445
      %v502 = vunpack.c.l.b16 %v446
      %v503 = vunpack.c.l.b16 %v447
      %v504 = vunpack.c.l.b16 %v448
      %v505 = vpack.c.b16 %v490, %v489
      %v506 = vpack.c.b16 %v492, %v491
      %v507 = vpack.c.b16 %v494, %v493
      %v508 = vpack.c.b16 %v496, %v495
      %v509 = vpack.c.b16 %v498, %v497
      %v510 = vpack.c.b16 %v500, %v499
      %v511 = vpack.c.b16 %v502, %v501
      %v512 = vpack.c.b16 %v504, %v503
      %521 = vmatprep.subr.bf16.mxu0 0
      %522 = vmatpush1.bf16.msra.mxu0 %v505
      %523 = vmatprep.subr.bf16.mxu0 0
      %524 = vmatpush1.bf16.msra.mxu0 %v506
      %525 = vmatprep.subr.bf16.mxu0 0
      %526 = vmatpush1.bf16.msra.mxu0 %v507
      %527 = vmatprep.subr.bf16.mxu0 0
      %528 = vmatpush1.bf16.msra.mxu0 %v508
      %529 = vmatprep.subr.bf16.mxu0 0
      %530 = vmatpush1.bf16.msra.mxu0 %v509
      %531 = vmatprep.subr.bf16.mxu0 0
      %532 = vmatpush1.bf16.msra.mxu0 %v510
      %533 = vmatprep.subr.bf16.mxu0 0
      %534 = vmatpush1.bf16.msra.mxu0 %v511
      %535 = vmatprep.subr.bf16.mxu0 0
      %536 = vmatpush1.bf16.msra.mxu0 %v512
      %537 = vmatprep.subr.bf16.mxu0 0
      %538 = vmatpush1.bf16.msra.mxu0 0
      %539 = vmatprep.subr.bf16.mxu0 0
      %540 = vmatpush1.bf16.msra.mxu0 0
      %541 = vmatprep.subr.bf16.mxu0 0
      %542 = vmatpush1.bf16.msra.mxu0 0
      %543 = vmatprep.subr.bf16.mxu0 0
      %544 = vmatpush1.bf16.msra.mxu0 0
      %545 = vmatprep.subr.bf16.mxu0 0
      %546 = vmatpush1.bf16.msra.mxu0 0
      %547 = vmatprep.subr.bf16.mxu0 0
      %548 = vmatpush1.bf16.msra.mxu0 0
      %549 = vmatprep.subr.bf16.mxu0 0
      %550 = vmatpush1.bf16.msra.mxu0 0
      %551 = vmatprep.subr.bf16.mxu0 0
      %552 = vmatpush1.bf16.msra.mxu0 0
      %553 = vmatprep.mubr.bf16.mxu0 0
      %554 = vmatmul.mubr.bf16.gmra.mrb[0].mxu0 %v465
      %v555 = vpop.f32.mrb[0].mxu0
      %v556 = vadd.f32 0.0, %v555
      %v557 = vpop.f32.mrb[0].mxu0
      %v558 = vpop.f32.mrb[0].mxu0
      %v559 = vadd.f32 0.0, %v558
      %v560 = vpop.f32.mrb[0].mxu0
      %561 = vmatprep.mubr.bf16.mxu0 0
      %562 = vmatmul.mubr.bf16.gmra.mrb[0].mxu0 %v466
      %v563 = vpop.f32.mrb[0].mxu0
      %v564 = vadd.f32 0.0, %v563
      %v565 = vpop.f32.mrb[0].mxu0
      %v566 = vpop.f32.mrb[0].mxu0
      %v567 = vadd.f32 0.0, %v566
      %v568 = vpop.f32.mrb[0].mxu0
      %569 = vmatprep.mubr.bf16.mxu0 0
      %570 = vmatmul.mubr.bf16.gmra.mrb[0].mxu0 %v467
      %v571 = vpop.f32.mrb[0].mxu0
      %v572 = vadd.f32 0.0, %v571
      %v573 = vpop.f32.mrb[0].mxu0
      %v574 = vpop.f32.mrb[0].mxu0
      %v575 = vadd.f32 0.0, %v574
      %v576 = vpop.f32.mrb[0].mxu0
      %577 = vmatprep.mubr.bf16.mxu0 0
      %578 = vmatmul.mubr.bf16.gmra.mrb[0].mxu0 %v468
      %v579 = vpop.f32.mrb[0].mxu0
      %v580 = vadd.f32 0.0, %v579
      %v581 = vpop.f32.mrb[0].mxu0
      %v582 = vpop.f32.mrb[0].mxu0
      %v583 = vadd.f32 0.0, %v582
      %v584 = vpop.f32.mrb[0].mxu0
      %585 = vdwg.mxu0
      %v586 = vld [vmem:[%s392] sm:$0x1]
      %v588 = vlaneseq
      %v589 = vshrl.u32 %v588, 7
      %v590 = vsub.s32 0, %v589
      %v591 = vrot.slane %v586, %v590
      %v593 = vmul.f32 %v556, %v591
      %v594 = vmul.f32 %v559, %v591
      %v595 = vmul.f32 %v564, %v591
      %v596 = vmul.f32 %v567, %v591
      %v597 = vmul.f32 %v572, %v591
      %v598 = vmul.f32 %v575, %v591
      %v599 = vmul.f32 %v580, %v591
      %v600 = vmul.f32 %v583, %v591
      %v601 = vld [vmem:[%s395] sm:$0x1]
      %v603 = vlaneseq
      %v604 = vshrl.u32 %v603, 7
      %v605 = vsub.s32 0, %v604
      %v606 = vrot.slane %v601, %v605
      %v608 = vadd.f32 %v593, %v606
      %v609 = vadd.f32 %v594, %v606
      %v610 = vadd.f32 %v595, %v606
      %v611 = vadd.f32 %v596, %v606
      %v612 = vadd.f32 %v597, %v606
      %v613 = vadd.f32 %v598, %v606
      %v614 = vadd.f32 %v599, %v606
      %v615 = vadd.f32 %v600, %v606
      %v616 = vmax.f32 %v608, 0.0
      %v617 = vmax.f32 %v609, 0.0
      %v618 = vmax.f32 %v610, 0.0
      %v619 = vmax.f32 %v611, 0.0
      %v620 = vmax.f32 %v612, 0.0
      %v621 = vmax.f32 %v613, 0.0
      %v622 = vmax.f32 %v614, 0.0
      %v623 = vmax.f32 %v615, 0.0
      %v624 = vpack.c.bf16 %v617, %v616
      %v625 = vpack.c.bf16 %v619, %v618
      %v626 = vpack.c.bf16 %v621, %v620
      %v627 = vpack.c.bf16 %v623, %v622
      %v628 = vld [vmem:[%s400] sm:$0xf]
      %v629 = vld [vmem:[%s400 + $0x4] sm:$0xf]
      %v630 = vld [vmem:[%s400 + $0x8] sm:$0xf]
      %v631 = vld [vmem:[%s400 + $0xc] sm:$0xf]
      %v632 = vld [vmem:[%s400 + $0x10] sm:$0xf]
      %v633 = vld [vmem:[%s400 + $0x14] sm:$0xf]
      %v634 = vld [vmem:[%s400 + $0x18] sm:$0xf]
      %v635 = vld [vmem:[%s400 + $0x1c] sm:$0xf]
      %v636 = vld [vmem:[%s400 + $0x20] sm:$0xf]
      %v637 = vld [vmem:[%s400 + $0x24] sm:$0xf]
      %v638 = vld [vmem:[%s400 + $0x28] sm:$0xf]
      %v639 = vld [vmem:[%s400 + $0x2c] sm:$0xf]
      %v640 = vld [vmem:[%s400 + $0x30] sm:$0xf]
      %v641 = vld [vmem:[%s400 + $0x34] sm:$0xf]
      %v642 = vld [vmem:[%s400 + $0x38] sm:$0xf]
      %v643 = vld [vmem:[%s400 + $0x3c] sm:$0xf]
      %v660 = vunpack.c.l.b16 %v628
      %v661 = vunpack.c.l.b16 %v629
      %v662 = vunpack.c.l.b16 %v630
      %v663 = vunpack.c.l.b16 %v631
      %v664 = vunpack.c.l.b16 %v632
      %v665 = vunpack.c.l.b16 %v633
      %v666 = vunpack.c.l.b16 %v634
      %v667 = vunpack.c.l.b16 %v635
      %v668 = vunpack.c.l.b16 %v636
      %v669 = vunpack.c.l.b16 %v637
      %v670 = vunpack.c.l.b16 %v638
      %v671 = vunpack.c.l.b16 %v639
      %v672 = vunpack.c.l.b16 %v640
      %v673 = vunpack.c.l.b16 %v641
      %v674 = vunpack.c.l.b16 %v642
      %v675 = vunpack.c.l.b16 %v643
      %v676 = vpack.c.b16 %v661, %v660
      %v677 = vpack.c.b16 %v663, %v662
      %v678 = vpack.c.b16 %v665, %v664
      %v679 = vpack.c.b16 %v667, %v666
      %v680 = vpack.c.b16 %v669, %v668
      %v681 = vpack.c.b16 %v671, %v670
      %v682 = vpack.c.b16 %v673, %v672
      %v683 = vpack.c.b16 %v675, %v674
      %692 = vmatprep.subr.bf16.mxu0 0
      %693 = vmatpush1.bf16.msra.mxu0 %v676
      %694 = vmatprep.subr.bf16.mxu0 0
      %695 = vmatpush1.bf16.msra.mxu0 %v677
      %696 = vmatprep.subr.bf16.mxu0 0
      %697 = vmatpush1.bf16.msra.mxu0 %v678
      %698 = vmatprep.subr.bf16.mxu0 0
      %699 = vmatpush1.bf16.msra.mxu0 %v679
      %700 = vmatprep.subr.bf16.mxu0 0
      %701 = vmatpush1.bf16.msra.mxu0 %v680
      %702 = vmatprep.subr.bf16.mxu0 0
      %703 = vmatpush1.bf16.msra.mxu0 %v681
      %704 = vmatprep.subr.bf16.mxu0 0
      %705 = vmatpush1.bf16.msra.mxu0 %v682
      %706 = vmatprep.subr.bf16.mxu0 0
      %707 = vmatpush1.bf16.msra.mxu0 %v683
      %708 = vmatprep.subr.bf16.mxu0 0
      %709 = vmatpush1.bf16.msra.mxu0 0
      %710 = vmatprep.subr.bf16.mxu0 0
      %711 = vmatpush1.bf16.msra.mxu0 0
      %712 = vmatprep.subr.bf16.mxu0 0
      %713 = vmatpush1.bf16.msra.mxu0 0
      %714 = vmatprep.subr.bf16.mxu0 0
      %715 = vmatpush1.bf16.msra.mxu0 0
      %716 = vmatprep.subr.bf16.mxu0 0
      %717 = vmatpush1.bf16.msra.mxu0 0
      %718 = vmatprep.subr.bf16.mxu0 0
      %719 = vmatpush1.bf16.msra.mxu0 0
      %720 = vmatprep.subr.bf16.mxu0 0
      %721 = vmatpush1.bf16.msra.mxu0 0
      %722 = vmatprep.subr.bf16.mxu0 0
      %723 = vmatpush1.bf16.msra.mxu0 0
      %724 = vmatprep.mubr.bf16.mxu0 0
      %725 = vmatmul.mubr.bf16.gmra.mrb[0].mxu0 %v624
      %v726 = vpop.f32.mrb[0].mxu0
      %v727 = vadd.f32 0.0, %v726
      %v728 = vpop.f32.mrb[0].mxu0
      %v729 = vpop.f32.mrb[0].mxu0
      %v730 = vadd.f32 0.0, %v729
      %v731 = vpop.f32.mrb[0].mxu0
      %732 = vmatprep.mubr.bf16.mxu0 0
      %733 = vmatmul.mubr.bf16.gmra.mrb[0].mxu0 %v625
      %v734 = vpop.f32.mrb[0].mxu0
      %v735 = vadd.f32 0.0, %v734
      %v736 = vpop.f32.mrb[0].mxu0
      %v737 = vpop.f32.mrb[0].mxu0
      %v738 = vadd.f32 0.0, %v737
      %v739 = vpop.f32.mrb[0].mxu0
      %740 = vmatprep.mubr.bf16.mxu0 0
      %741 = vmatmul.mubr.bf16.gmra.mrb[0].mxu0 %v626
      %v742 = vpop.f32.mrb[0].mxu0
      %v743 = vadd.f32 0.0, %v742
      %v744 = vpop.f32.mrb[0].mxu0
      %v745 = vpop.f32.mrb[0].mxu0
      %v746 = vadd.f32 0.0, %v745
      %v747 = vpop.f32.mrb[0].mxu0
      %748 = vmatprep.mubr.bf16.mxu0 0
      %749 = vmatmul.mubr.bf16.gmra.mrb[0].mxu0 %v627
      %v750 = vpop.f32.mrb[0].mxu0
      %v751 = vadd.f32 0.0, %v750
      %v752 = vpop.f32.mrb[0].mxu0
      %v753 = vpop.f32.mrb[0].mxu0
      %v754 = vadd.f32 0.0, %v753
      %v755 = vpop.f32.mrb[0].mxu0
      %756 = vdwg.mxu0
      %vm757 = vcmask 523264
      %v758 = vsel %vm757, %v727, -inf
      %759 = vmax.xlane.f32.xlu0 %v758
      %v760 = vpop.xlane.xlu0 %759
      %v761 = vsel %vm757, %v730, -inf
      %762 = vmax.xlane.f32.xlu0 %v761
      %v763 = vpop.xlane.xlu0 %762
      %v764 = vsel %vm757, %v735, -inf
      %765 = vmax.xlane.f32.xlu0 %v764
      %v766 = vpop.xlane.xlu0 %765
      %v767 = vsel %vm757, %v738, -inf
      %768 = vmax.xlane.f32.xlu0 %v767
      %v769 = vpop.xlane.xlu0 %768
      %v770 = vsel %vm757, %v743, -inf
      %771 = vmax.xlane.f32.xlu0 %v770
      %v772 = vpop.xlane.xlu0 %771
      %v773 = vsel %vm757, %v746, -inf
      %774 = vmax.xlane.f32.xlu0 %v773
      %v775 = vpop.xlane.xlu0 %774
      %v776 = vsel %vm757, %v751, -inf
      %777 = vmax.xlane.f32.xlu0 %v776
      %v778 = vpop.xlane.xlu0 %777
      %v779 = vsel %vm757, %v754, -inf
      %780 = vmax.xlane.f32.xlu0 %v779
      %v781 = vpop.xlane.xlu0 %780
      %v782 = vsub.f32 %v727, %v760
      %v783 = vsub.f32 %v730, %v763
      %v784 = vsub.f32 %v735, %v766
      %v785 = vsub.f32 %v738, %v769
      %v786 = vsub.f32 %v743, %v772
      %v787 = vsub.f32 %v746, %v775
      %v788 = vsub.f32 %v751, %v778
      %v789 = vsub.f32 %v754, %v781
      %v790 = vmul.f32 %v782, 1.442695
      %v791 = vpow.pop %v790
      %v792 = vmul.f32 %v783, 1.442695
      %v793 = vpow.pop %v792
      %v794 = vmul.f32 %v784, 1.442695
      %v795 = vpow.pop %v794
      %v796 = vmul.f32 %v785, 1.442695
      %v797 = vpow.pop %v796
      %v798 = vmul.f32 %v786, 1.442695
      %v799 = vpow.pop %v798
      %v800 = vmul.f32 %v787, 1.442695
      %v801 = vpow.pop %v800
      %v802 = vmul.f32 %v788, 1.442695
      %v803 = vpow.pop %v802
      %v804 = vmul.f32 %v789, 1.442695
      %v805 = vpow.pop %v804
      %v806 = vsel %vm757, %v791, 0.0
      %807 = vadd.xlane.f32.xlu0 %v806
      %v808 = vpop.xlane.xlu0 %807
      %v809 = vsel %vm757, %v793, 0.0
      %810 = vadd.xlane.f32.xlu0 %v809
      %v811 = vpop.xlane.xlu0 %810
      %v812 = vsel %vm757, %v795, 0.0
      %813 = vadd.xlane.f32.xlu0 %v812
      %v814 = vpop.xlane.xlu0 %813
      %v815 = vsel %vm757, %v797, 0.0
      %816 = vadd.xlane.f32.xlu0 %v815
      %v817 = vpop.xlane.xlu0 %816
      %v818 = vsel %vm757, %v799, 0.0
      %819 = vadd.xlane.f32.xlu0 %v818
      %v820 = vpop.xlane.xlu0 %819
      %v821 = vsel %vm757, %v801, 0.0
      %822 = vadd.xlane.f32.xlu0 %v821
      %v823 = vpop.xlane.xlu0 %822
      %v824 = vsel %vm757, %v803, 0.0
      %825 = vadd.xlane.f32.xlu0 %v824
      %v826 = vpop.xlane.xlu0 %825
      %v827 = vsel %vm757, %v805, 0.0
      %828 = vadd.xlane.f32.xlu0 %v827
      %v829 = vpop.xlane.xlu0 %828
      %v830 = vrcp.pop %v808
      %v831 = vrcp.pop %v811
      %v832 = vrcp.pop %v814
      %v833 = vrcp.pop %v817
      %v834 = vrcp.pop %v820
      %v835 = vrcp.pop %v823
      %v836 = vrcp.pop %v826
      %v837 = vrcp.pop %v829
      %v838 = vmul.f32 %v791, %v830
      %v839 = vmul.f32 %v793, %v831
      %v840 = vmul.f32 %v795, %v832
      %v841 = vmul.f32 %v797, %v833
      %v842 = vmul.f32 %v799, %v834
      %v843 = vmul.f32 %v801, %v835
      %v844 = vmul.f32 %v803, %v836
      %v845 = vmul.f32 %v805, %v837
      %v846 = vpack.c.bf16 %v839, %v838
      %v847 = vpack.c.bf16 %v841, %v840
      %v848 = vpack.c.bf16 %v843, %v842
      %v849 = vpack.c.bf16 %v845, %v844
      %v850 = vld [vmem:[%s409] sm:$0xf]
      %v851 = vld [vmem:[%s409 + $0x4] sm:$0xf]
      %v852 = vld [vmem:[%s409 + $0x8] sm:$0xf]
      %v853 = vld [vmem:[%s409 + $0xc] sm:$0xf]
      %v854 = vld [vmem:[%s409 + $0x10] sm:$0xf]
      %v855 = vld [vmem:[%s409 + $0x14] sm:$0xf]
      %v856 = vld [vmem:[%s409 + $0x18] sm:$0xf]
      %v857 = vld [vmem:[%s409 + $0x1c] sm:$0xf]
      %v866 = vunpack.c.l.b16 %v850
      %v867 = vunpack.c.l.b16 %v851
      %v868 = vunpack.c.l.b16 %v852
      %v869 = vunpack.c.l.b16 %v853
      %v870 = vunpack.c.l.b16 %v854
      %v871 = vunpack.c.l.b16 %v855
      %v872 = vunpack.c.l.b16 %v856
      %v873 = vunpack.c.l.b16 %v857
      %v874 = vpack.c.b16 %v867, %v866
      %v875 = vpack.c.b16 %v869, %v868
      %v876 = vpack.c.b16 %v871, %v870
      %v877 = vpack.c.b16 %v873, %v872
      %v883 = vsel %vm757, %v846, 0
      %v886 = vsel %vm757, %v847, 0
      %v889 = vsel %vm757, %v848, 0
      %v892 = vsel %vm757, %v849, 0
      %894 = vmatprep.subr.bf16.mxu0 0
      %895 = vmatpush1.bf16.msra.mxu0 %v874
      %896 = vmatprep.subr.bf16.mxu0 0
      %897 = vmatpush1.bf16.msra.mxu0 %v875
      %898 = vmatprep.subr.bf16.mxu0 0
      %899 = vmatpush1.bf16.msra.mxu0 %v876
      %900 = vmatprep.subr.bf16.mxu0 0
      %901 = vmatpush1.bf16.msra.mxu0 %v877
      %902 = vmatprep.subr.bf16.mxu0 0
      %903 = vmatpush1.bf16.msra.mxu0 0
      %904 = vmatprep.subr.bf16.mxu0 0
      %905 = vmatpush1.bf16.msra.mxu0 0
      %906 = vmatprep.subr.bf16.mxu0 0
      %907 = vmatpush1.bf16.msra.mxu0 0
      %908 = vmatprep.subr.bf16.mxu0 0
      %909 = vmatpush1.bf16.msra.mxu0 0
      %910 = vmatprep.subr.bf16.mxu0 0
      %911 = vmatpush1.bf16.msra.mxu0 0
      %912 = vmatprep.subr.bf16.mxu0 0
      %913 = vmatpush1.bf16.msra.mxu0 0
      %914 = vmatprep.subr.bf16.mxu0 0
      %915 = vmatpush1.bf16.msra.mxu0 0
      %916 = vmatprep.subr.bf16.mxu0 0
      %917 = vmatpush1.bf16.msra.mxu0 0
      %918 = vmatprep.subr.bf16.mxu0 0
      %919 = vmatpush1.bf16.msra.mxu0 0
      %920 = vmatprep.subr.bf16.mxu0 0
      %921 = vmatpush1.bf16.msra.mxu0 0
      %922 = vmatprep.subr.bf16.mxu0 0
      %923 = vmatpush1.bf16.msra.mxu0 0
      %924 = vmatprep.subr.bf16.mxu0 0
      %925 = vmatpush1.bf16.msra.mxu0 0
      %926 = vmatprep.mubr.bf16.mxu0 0
      %927 = vmatmul.mubr.bf16.gmra.mrb[0].mxu0 %v883
      %v928 = vpop.f32.mrb[0].mxu0
      %v929 = vadd.f32 0.0, %v928
      %v930 = vpop.f32.mrb[0].mxu0
      %v931 = vpop.f32.mrb[0].mxu0
      %v932 = vadd.f32 0.0, %v931
      %v933 = vpop.f32.mrb[0].mxu0
      %934 = vmatprep.mubr.bf16.mxu0 0
      %935 = vmatmul.mubr.bf16.gmra.mrb[0].mxu0 %v886
      %v936 = vpop.f32.mrb[0].mxu0
      %v937 = vadd.f32 0.0, %v936
      %v938 = vpop.f32.mrb[0].mxu0
      %v939 = vpop.f32.mrb[0].mxu0
      %v940 = vadd.f32 0.0, %v939
      %v941 = vpop.f32.mrb[0].mxu0
      %942 = vmatprep.mubr.bf16.mxu0 0
      %943 = vmatmul.mubr.bf16.gmra.mrb[0].mxu0 %v889
      %v944 = vpop.f32.mrb[0].mxu0
      %v945 = vadd.f32 0.0, %v944
      %v946 = vpop.f32.mrb[0].mxu0
      %v947 = vpop.f32.mrb[0].mxu0
      %v948 = vadd.f32 0.0, %v947
      %v949 = vpop.f32.mrb[0].mxu0
      %950 = vmatprep.mubr.bf16.mxu0 0
      %951 = vmatmul.mubr.bf16.gmra.mrb[0].mxu0 %v892
      %v952 = vpop.f32.mrb[0].mxu0
      %v953 = vadd.f32 0.0, %v952
      %v954 = vpop.f32.mrb[0].mxu0
      %v955 = vpop.f32.mrb[0].mxu0
      %v956 = vadd.f32 0.0, %v955
      %v957 = vpop.f32.mrb[0].mxu0
      %958 = vdwg.mxu0
      %959 = vst [vmem:[%s422] sm:$0xff] %v929
      %960 = vst [vmem:[%s422 + $0x8] sm:$0xff] %v932
      %961 = vst [vmem:[%s422 + $0x10] sm:$0xff] %v937
      %962 = vst [vmem:[%s422 + $0x18] sm:$0xff] %v940
      %963 = vst [vmem:[%s422 + $0x20] sm:$0xff] %v945
      %964 = vst [vmem:[%s422 + $0x28] sm:$0xff] %v948
      %965 = vst [vmem:[%s422 + $0x30] sm:$0xff] %v953
      %966 = vst [vmem:[%s422 + $0x38] sm:$0xff] %v956
      %s967 = smul.u32 8, %s24
      %p968 = scmp.lt.s32.totalorder %s22, 1
      %s969 = scalar_select %p968, %s22, 1
      %p970 = scmp.lt.s32.totalorder %s23, 1
      %s971 = scalar_select %p970, %s23, 1
      %p972 = scmp.lt.s32.totalorder %s967, 7
      %s973 = scalar_select %p972, %s967, 7
      %s974 = smul.addr %s971, 8
      %s975 = sadd.s32 %s973, %s974
      %s976 = smul.addr %s969, 16
      %s977 = sadd.s32 %s975, %s976
      %s978 = smul.addr %s977, 8
      %s979 = scalar_lea.vmem %s6, %s978
      // Predicated region
      $region45: #{pointwise_spatial_attention.6} parent=43 // pred_check
        %p980 = pneg %p220
      $region46: #{pointwise_spatial_attention.6} parent=43 // pred_check_branch
        %982 = sbr.rel (%p980) target = $region48
      $region47: #{pointwise_spatial_attention.6} parent=43 // pred_region
        %s983 = smul.u32 8, %s24
      $region48: #{pointwise_spatial_attention.6} parent=43 // pred_fallthru
        _
    $region44: #{pointwise_spatial_attention.6} parent=5 // pred_fallthru
      _
    %p984 = scmp.le.s32.totalorder 2, %s12
    // Predicated region
    $region49: #{pointwise_spatial_attention.6} parent=5 // pred_check
      %p985 = pneg %p984
    $region50: #{pointwise_spatial_attention.6} parent=5 // pred_check_branch
      %987 = sbr.rel (%p985) target = $region52
    $region51: #{pointwise_spatial_attention.6} parent=5 // pred_region
      %s988 = ssub.s32 %s12, 2
      // Predicated region
      $region53: #{pointwise_spatial_attention.6} parent=51 // pred_check
        %p989 = pneg %p226
      $region54: #{pointwise_spatial_attention.6} parent=51 // pred_check_branch
        %991 = sbr.rel (%p989) target = $region56
      $region55: #{pointwise_spatial_attention.6} parent=51 // pred_region
        %s992 = smul.u32 8, %s27
        %p993 = scmp.lt.s32.totalorder %s25, 1
        %s994 = scalar_select %p993, %s25, 1
        %p995 = scmp.lt.s32.totalorder %s26, 1
        %s996 = scalar_select %p995, %s26, 1
        %p997 = scmp.lt.s32.totalorder %s992, 7
        %s998 = scalar_select %p997, %s992, 7
        %s999 = smul.addr %s996, 8
        %s1000 = sadd.s32 %s998, %s999
        %s1001 = smul.addr %s994, 16
        %s1002 = sadd.s32 %s1000, %s1001
        %s1003 = smul.addr %s1002, 8
        %s1004 = scalar_lea.vmem %s6, %s1003
      $region56: #{pointwise_spatial_attention.6} parent=51 // pred_fallthru
        _
    $region52: #{pointwise_spatial_attention.6} parent=5 // pred_fallthru
      _
  $region6: #{pointwise_spatial_attention.6} parent=0 // loop_footer
    %s16 = sadd.s32 1, %s12
  $region7: #{pointwise_spatial_attention.6} parent=0 // loop_footer_branch
    %11 = sbr.rel target = $region3
  $region8: #{pointwise_spatial_attention.6} parent=0 // loop_exit
    _

// kernel: pointwise_spatial_attention.7
$region0: #{pointwise_spatial_attention.7}
  #allocation0 [shape = 'u32[]', space=smem, size = 0x4, offset = 0x4, fixed_abs, tag = 'smem constant byte address 0x4 - core index']
  #allocation1 [shape = 'u32[144,128]{1,0:T(1,128)}', space=vmem, size = 0x12000, scoped, tag = 'internal scratch']
  #allocation2 [shape = 'f32[128,128]{1,0:T(8,128)}', space=vmem, size = 0x10000, scoped, tag = 'scratch operand']
  %s0 = inlined_call_operand.vmem [shape: bf16[128,128], index: 0, kind: input, shape index: {}]
  %s1 = inlined_call_operand.vmem [shape: bf16[128,128], index: 1, kind: input, shape index: {}]
  %s2 = inlined_call_operand.vmem [shape: f32[1,128], index: 2, kind: input, shape index: {}]
  %s3 = inlined_call_operand.vmem [shape: f32[1,128], index: 3, kind: input, shape index: {}]
  %s4 = inlined_call_operand.vmem [shape: f32[128,128], index: 4, kind: output, shape index: {}]
  %s5 = sld [smem:[#allocation0]]
  $region34: #{pointwise_spatial_attention.7} parent=0
    _
  %s7 = ssub.s32 1, %s5
  %s8 = scalar_select 0, %s7, %s5
  // Predicated region
  $region2: #{pointwise_spatial_attention.7} parent=0 // pred_check
    _
  $region3: #{pointwise_spatial_attention.7} parent=0 // pred_check_branch
    %10 = sbr.rel (0) target = $region5
  $region4: #{pointwise_spatial_attention.7} parent=0 // pred_region
    _
  $region5: #{pointwise_spatial_attention.7} parent=0 // pred_fallthru
    _
  // Predicated region
  $region6: #{pointwise_spatial_attention.7} parent=0 // pred_check
    _
  $region7: #{pointwise_spatial_attention.7} parent=0 // pred_check_branch
    %12 = sbr.rel (0) target = $region9
  $region8: #{pointwise_spatial_attention.7} parent=0 // pred_region
    _
  $region9: #{pointwise_spatial_attention.7} parent=0 // pred_fallthru
    _
  // Predicated region
  $region10: #{pointwise_spatial_attention.7} parent=0 // pred_check
    _
  $region11: #{pointwise_spatial_attention.7} parent=0 // pred_check_branch
    %14 = sbr.rel (0) target = $region13
  $region12: #{pointwise_spatial_attention.7} parent=0 // pred_region
    _
  $region13: #{pointwise_spatial_attention.7} parent=0 // pred_fallthru
    _
  // Predicated region
  $region14: #{pointwise_spatial_attention.7} parent=0 // pred_check
    _
  $region15: #{pointwise_spatial_attention.7} parent=0 // pred_check_branch
    %16 = sbr.rel (0) target = $region17
  $region16: #{pointwise_spatial_attention.7} parent=0 // pred_region
    _
  $region17: #{pointwise_spatial_attention.7} parent=0 // pred_fallthru
    _
  %p18 = scmp.eq.s32.totalorder 0, 0
  // Predicated region
  $region18: #{pointwise_spatial_attention.7} parent=0 // pred_check
    %p19 = pneg %p18
  $region19: #{pointwise_spatial_attention.7} parent=0 // pred_check_branch
    %21 = sbr.rel (%p19) target = $region21
  $region20: #{pointwise_spatial_attention.7} parent=0 // pred_region
    %22 = vst [vmem:[#allocation2] sm:$0xff] 0.0
    %23 = vst [vmem:[#allocation2 + $0x8] sm:$0xff] 0.0
    %24 = vst [vmem:[#allocation2 + $0x10] sm:$0xff] 0.0
    %25 = vst [vmem:[#allocation2 + $0x18] sm:$0xff] 0.0
    %26 = vst [vmem:[#allocation2 + $0x20] sm:$0xff] 0.0
    %27 = vst [vmem:[#allocation2 + $0x28] sm:$0xff] 0.0
    %28 = vst [vmem:[#allocation2 + $0x30] sm:$0xff] 0.0
    %29 = vst [vmem:[#allocation2 + $0x38] sm:$0xff] 0.0
    %30 = vst [vmem:[#allocation2 + $0x40] sm:$0xff] 0.0
    %31 = vst [vmem:[#allocation2 + $0x48] sm:$0xff] 0.0
    %32 = vst [vmem:[#allocation2 + $0x50] sm:$0xff] 0.0
    %33 = vst [vmem:[#allocation2 + $0x58] sm:$0xff] 0.0
    %34 = vst [vmem:[#allocation2 + $0x60] sm:$0xff] 0.0
    %35 = vst [vmem:[#allocation2 + $0x68] sm:$0xff] 0.0
    %36 = vst [vmem:[#allocation2 + $0x70] sm:$0xff] 0.0
    %37 = vst [vmem:[#allocation2 + $0x78] sm:$0xff] 0.0
  $region21: #{pointwise_spatial_attention.7} parent=0 // pred_fallthru
    _
  %v38 = vld [vmem:[#allocation2] sm:$0xff]
  %v39 = vld [vmem:[#allocation2 + $0x8] sm:$0xff]
  %v40 = vld [vmem:[#allocation2 + $0x10] sm:$0xff]
  %v41 = vld [vmem:[#allocation2 + $0x18] sm:$0xff]
  %v42 = vld [vmem:[#allocation2 + $0x20] sm:$0xff]
  %v43 = vld [vmem:[#allocation2 + $0x28] sm:$0xff]
  %v44 = vld [vmem:[#allocation2 + $0x30] sm:$0xff]
  %v45 = vld [vmem:[#allocation2 + $0x38] sm:$0xff]
  %v46 = vld [vmem:[#allocation2 + $0x40] sm:$0xff]
  %v47 = vld [vmem:[#allocation2 + $0x48] sm:$0xff]
  %v48 = vld [vmem:[#allocation2 + $0x50] sm:$0xff]
  %v49 = vld [vmem:[#allocation2 + $0x58] sm:$0xff]
  %v50 = vld [vmem:[#allocation2 + $0x60] sm:$0xff]
  %v51 = vld [vmem:[#allocation2 + $0x68] sm:$0xff]
  %v52 = vld [vmem:[#allocation2 + $0x70] sm:$0xff]
  %v53 = vld [vmem:[#allocation2 + $0x78] sm:$0xff]
  %v54 = vld [vmem:[%s0] sm:$0xf]
  %v55 = vld [vmem:[%s0 + $0x4] sm:$0xf]
  %v56 = vld [vmem:[%s0 + $0x8] sm:$0xf]
  %v57 = vld [vmem:[%s0 + $0xc] sm:$0xf]
  %v58 = vld [vmem:[%s0 + $0x10] sm:$0xf]
  %v59 = vld [vmem:[%s0 + $0x14] sm:$0xf]
  %v60 = vld [vmem:[%s0 + $0x18] sm:$0xf]
  %v61 = vld [vmem:[%s0 + $0x1c] sm:$0xf]
  %v62 = vld [vmem:[%s0 + $0x20] sm:$0xf]
  %v63 = vld [vmem:[%s0 + $0x24] sm:$0xf]
  %v64 = vld [vmem:[%s0 + $0x28] sm:$0xf]
  %v65 = vld [vmem:[%s0 + $0x2c] sm:$0xf]
  %v66 = vld [vmem:[%s0 + $0x30] sm:$0xf]
  %v67 = vld [vmem:[%s0 + $0x34] sm:$0xf]
  %v68 = vld [vmem:[%s0 + $0x38] sm:$0xf]
  %v69 = vld [vmem:[%s0 + $0x3c] sm:$0xf]
  %v70 = vld [vmem:[%s1] sm:$0xf]
  %v71 = vld [vmem:[%s1 + $0x4] sm:$0xf]
  %v72 = vld [vmem:[%s1 + $0x8] sm:$0xf]
  %v73 = vld [vmem:[%s1 + $0xc] sm:$0xf]
  %v74 = vld [vmem:[%s1 + $0x10] sm:$0xf]
  %v75 = vld [vmem:[%s1 + $0x14] sm:$0xf]
  %v76 = vld [vmem:[%s1 + $0x18] sm:$0xf]
  %v77 = vld [vmem:[%s1 + $0x1c] sm:$0xf]
  %v78 = vld [vmem:[%s1 + $0x20] sm:$0xf]
  %v79 = vld [vmem:[%s1 + $0x24] sm:$0xf]
  %v80 = vld [vmem:[%s1 + $0x28] sm:$0xf]
  %v81 = vld [vmem:[%s1 + $0x2c] sm:$0xf]
  %v82 = vld [vmem:[%s1 + $0x30] sm:$0xf]
  %v83 = vld [vmem:[%s1 + $0x34] sm:$0xf]
  %v84 = vld [vmem:[%s1 + $0x38] sm:$0xf]
  %v85 = vld [vmem:[%s1 + $0x3c] sm:$0xf]
  %v102 = vunpack.c.l.b16 %v54
  %v103 = vunpack.c.l.b16 %v55
  %v104 = vunpack.c.l.b16 %v56
  %v105 = vunpack.c.l.b16 %v57
  %v106 = vunpack.c.l.b16 %v58
  %v107 = vunpack.c.l.b16 %v59
  %v108 = vunpack.c.l.b16 %v60
  %v109 = vunpack.c.l.b16 %v61
  %v110 = vunpack.c.l.b16 %v62
  %v111 = vunpack.c.l.b16 %v63
  %v112 = vunpack.c.l.b16 %v64
  %v113 = vunpack.c.l.b16 %v65
  %v114 = vunpack.c.l.b16 %v66
  %v115 = vunpack.c.l.b16 %v67
  %v116 = vunpack.c.l.b16 %v68
  %v117 = vunpack.c.l.b16 %v69
  %v118 = vpack.c.b16 %v103, %v102
  %v119 = vpack.c.b16 %v105, %v104
  %v120 = vpack.c.b16 %v107, %v106
  %v121 = vpack.c.b16 %v109, %v108
  %v122 = vpack.c.b16 %v111, %v110
  %v123 = vpack.c.b16 %v113, %v112
  %v124 = vpack.c.b16 %v115, %v114
  %v125 = vpack.c.b16 %v117, %v116
  %v150 = vunpack.c.l.b16 %v70
  %v151 = vunpack.c.l.b16 %v71
  %v152 = vunpack.c.l.b16 %v72
  %v153 = vunpack.c.l.b16 %v73
  %v154 = vunpack.c.l.b16 %v74
  %v155 = vunpack.c.l.b16 %v75
  %v156 = vunpack.c.l.b16 %v76
  %v157 = vunpack.c.l.b16 %v77
  %v158 = vunpack.c.l.b16 %v78
  %v159 = vunpack.c.l.b16 %v79
  %v160 = vunpack.c.l.b16 %v80
  %v161 = vunpack.c.l.b16 %v81
  %v162 = vunpack.c.l.b16 %v82
  %v163 = vunpack.c.l.b16 %v83
  %v164 = vunpack.c.l.b16 %v84
  %v165 = vunpack.c.l.b16 %v85
  %v166 = vpack.c.b16 %v151, %v150
  %v167 = vpack.c.b16 %v153, %v152
  %v168 = vpack.c.b16 %v155, %v154
  %v169 = vpack.c.b16 %v157, %v156
  %v170 = vpack.c.b16 %v159, %v158
  %v171 = vpack.c.b16 %v161, %v160
  %v172 = vpack.c.b16 %v163, %v162
  %v173 = vpack.c.b16 %v165, %v164
  %182 = vmatprep.subr.bf16.mxu0 0
  %183 = vmatpush1.bf16.msra.mxu0 %v166
  %184 = vmatprep.subr.bf16.mxu0 0
  %185 = vmatpush1.bf16.msra.mxu0 %v167
  %186 = vmatprep.subr.bf16.mxu0 0
  %187 = vmatpush1.bf16.msra.mxu0 %v168
  %188 = vmatprep.subr.bf16.mxu0 0
  %189 = vmatpush1.bf16.msra.mxu0 %v169
  %190 = vmatprep.subr.bf16.mxu0 0
  %191 = vmatpush1.bf16.msra.mxu0 %v170
  %192 = vmatprep.subr.bf16.mxu0 0
  %193 = vmatpush1.bf16.msra.mxu0 %v171
  %194 = vmatprep.subr.bf16.mxu0 0
  %195 = vmatpush1.bf16.msra.mxu0 %v172
  %196 = vmatprep.subr.bf16.mxu0 0
  %197 = vmatpush1.bf16.msra.mxu0 %v173
  %198 = vmatprep.subr.bf16.mxu0 0
  %199 = vmatpush1.bf16.msra.mxu0 0
  %200 = vmatprep.subr.bf16.mxu0 0
  %201 = vmatpush1.bf16.msra.mxu0 0
  %202 = vmatprep.subr.bf16.mxu0 0
  %203 = vmatpush1.bf16.msra.mxu0 0
  %204 = vmatprep.subr.bf16.mxu0 0
  %205 = vmatpush1.bf16.msra.mxu0 0
  %206 = vmatprep.subr.bf16.mxu0 0
  %207 = vmatpush1.bf16.msra.mxu0 0
  %208 = vmatprep.subr.bf16.mxu0 0
  %209 = vmatpush1.bf16.msra.mxu0 0
  %210 = vmatprep.subr.bf16.mxu0 0
  %211 = vmatpush1.bf16.msra.mxu0 0
  %212 = vmatprep.subr.bf16.mxu0 0
  %213 = vmatpush1.bf16.msra.mxu0 0
  %214 = vmatprep.mubr.bf16.mxu0 0
  %215 = vmatmul.mubr.bf16.gmra.mrb[0].mxu0 %v118
  %v216 = vpop.f32.mrb[0].mxu0
  %v217 = vadd.f32 0.0, %v216
  %v218 = vpop.f32.mrb[0].mxu0
  %v219 = vpop.f32.mrb[0].mxu0
  %v220 = vadd.f32 0.0, %v219
  %v221 = vpop.f32.mrb[0].mxu0
  %222 = vmatprep.mubr.bf16.mxu0 0
  %223 = vmatmul.mubr.bf16.gmra.mrb[0].mxu0 %v119
  %v224 = vpop.f32.mrb[0].mxu0
  %v225 = vadd.f32 0.0, %v224
  %v226 = vpop.f32.mrb[0].mxu0
  %v227 = vpop.f32.mrb[0].mxu0
  %v228 = vadd.f32 0.0, %v227
  %v229 = vpop.f32.mrb[0].mxu0
  %230 = vmatprep.mubr.bf16.mxu0 0
  %231 = vmatmul.mubr.bf16.gmra.mrb[0].mxu0 %v120
  %v232 = vpop.f32.mrb[0].mxu0
  %v233 = vadd.f32 0.0, %v232
  %v234 = vpop.f32.mrb[0].mxu0
  %v235 = vpop.f32.mrb[0].mxu0
  %v236 = vadd.f32 0.0, %v235
  %v237 = vpop.f32.mrb[0].mxu0
  %238 = vmatprep.mubr.bf16.mxu0 0
  %239 = vmatmul.mubr.bf16.gmra.mrb[0].mxu0 %v121
  %v240 = vpop.f32.mrb[0].mxu0
  %v241 = vadd.f32 0.0, %v240
  %v242 = vpop.f32.mrb[0].mxu0
  %v243 = vpop.f32.mrb[0].mxu0
  %v244 = vadd.f32 0.0, %v243
  %v245 = vpop.f32.mrb[0].mxu0
  %246 = vmatprep.mubr.bf16.mxu0 0
  %247 = vmatmul.mubr.bf16.gmra.mrb[0].mxu0 %v122
  %v248 = vpop.f32.mrb[0].mxu0
  %v249 = vadd.f32 0.0, %v248
  %v250 = vpop.f32.mrb[0].mxu0
  %v251 = vpop.f32.mrb[0].mxu0
  %v252 = vadd.f32 0.0, %v251
  %v253 = vpop.f32.mrb[0].mxu0
  %254 = vmatprep.mubr.bf16.mxu0 0
  %255 = vmatmul.mubr.bf16.gmra.mrb[0].mxu0 %v123
  %v256 = vpop.f32.mrb[0].mxu0
  %v257 = vadd.f32 0.0, %v256
  %v258 = vpop.f32.mrb[0].mxu0
  %v259 = vpop.f32.mrb[0].mxu0
  %v260 = vadd.f32 0.0, %v259
  %v261 = vpop.f32.mrb[0].mxu0
  %262 = vmatprep.mubr.bf16.mxu0 0
  %263 = vmatmul.mubr.bf16.gmra.mrb[0].mxu0 %v124
  %v264 = vpop.f32.mrb[0].mxu0
  %v265 = vadd.f32 0.0, %v264
  %v266 = vpop.f32.mrb[0].mxu0
  %v267 = vpop.f32.mrb[0].mxu0
  %v268 = vadd.f32 0.0, %v267
  %v269 = vpop.f32.mrb[0].mxu0
  %270 = vmatprep.mubr.bf16.mxu0 0
  %271 = vmatmul.mubr.bf16.gmra.mrb[0].mxu0 %v125
  %v272 = vpop.f32.mrb[0].mxu0
  %v273 = vadd.f32 0.0, %v272
  %v274 = vpop.f32.mrb[0].mxu0
  %v275 = vpop.f32.mrb[0].mxu0
  %v276 = vadd.f32 0.0, %v275
  %v277 = vpop.f32.mrb[0].mxu0
  %278 = vdwg.mxu0
  %v279 = vadd.f32 %v38, %v217
  %v280 = vadd.f32 %v39, %v220
  %v281 = vadd.f32 %v40, %v225
  %v282 = vadd.f32 %v41, %v228
  %v283 = vadd.f32 %v42, %v233
  %v284 = vadd.f32 %v43, %v236
  %v285 = vadd.f32 %v44, %v241
  %v286 = vadd.f32 %v45, %v244
  %v287 = vadd.f32 %v46, %v249
  %v288 = vadd.f32 %v47, %v252
  %v289 = vadd.f32 %v48, %v257
  %v290 = vadd.f32 %v49, %v260
  %v291 = vadd.f32 %v50, %v265
  %v292 = vadd.f32 %v51, %v268
  %v293 = vadd.f32 %v52, %v273
  %v294 = vadd.f32 %v53, %v276
  %295 = vst [vmem:[#allocation2] sm:$0xff] %v279
  %296 = vst [vmem:[#allocation2 + $0x8] sm:$0xff] %v280
  %297 = vst [vmem:[#allocation2 + $0x10] sm:$0xff] %v281
  %298 = vst [vmem:[#allocation2 + $0x18] sm:$0xff] %v282
  %299 = vst [vmem:[#allocation2 + $0x20] sm:$0xff] %v283
  %300 = vst [vmem:[#allocation2 + $0x28] sm:$0xff] %v284
  %301 = vst [vmem:[#allocation2 + $0x30] sm:$0xff] %v285
  %302 = vst [vmem:[#allocation2 + $0x38] sm:$0xff] %v286
  %303 = vst [vmem:[#allocation2 + $0x40] sm:$0xff] %v287
  %304 = vst [vmem:[#allocation2 + $0x48] sm:$0xff] %v288
  %305 = vst [vmem:[#allocation2 + $0x50] sm:$0xff] %v289
  %306 = vst [vmem:[#allocation2 + $0x58] sm:$0xff] %v290
  %307 = vst [vmem:[#allocation2 + $0x60] sm:$0xff] %v291
  %308 = vst [vmem:[#allocation2 + $0x68] sm:$0xff] %v292
  %309 = vst [vmem:[#allocation2 + $0x70] sm:$0xff] %v293
  %310 = vst [vmem:[#allocation2 + $0x78] sm:$0xff] %v294
  // Predicated region
  $region22: #{pointwise_spatial_attention.7} parent=0 // pred_check
    %p311 = pneg %p18
  $region23: #{pointwise_spatial_attention.7} parent=0 // pred_check_branch
    %313 = sbr.rel (%p311) target = $region25
  $region24: #{pointwise_spatial_attention.7} parent=0 // pred_region
    %v314 = vld [vmem:[#allocation2] sm:$0xff]
    %v315 = vld [vmem:[#allocation2 + $0x8] sm:$0xff]
    %v316 = vld [vmem:[#allocation2 + $0x10] sm:$0xff]
    %v317 = vld [vmem:[#allocation2 + $0x18] sm:$0xff]
    %v318 = vld [vmem:[#allocation2 + $0x20] sm:$0xff]
    %v319 = vld [vmem:[#allocation2 + $0x28] sm:$0xff]
    %v320 = vld [vmem:[#allocation2 + $0x30] sm:$0xff]
    %v321 = vld [vmem:[#allocation2 + $0x38] sm:$0xff]
    %v322 = vld [vmem:[#allocation2 + $0x40] sm:$0xff]
    %v323 = vld [vmem:[#allocation2 + $0x48] sm:$0xff]
    %v324 = vld [vmem:[#allocation2 + $0x50] sm:$0xff]
    %v325 = vld [vmem:[#allocation2 + $0x58] sm:$0xff]
    %v326 = vld [vmem:[#allocation2 + $0x60] sm:$0xff]
    %v327 = vld [vmem:[#allocation2 + $0x68] sm:$0xff]
    %v328 = vld [vmem:[#allocation2 + $0x70] sm:$0xff]
    %v329 = vld [vmem:[#allocation2 + $0x78] sm:$0xff]
    %v330 = vld [vmem:[%s2] sm:$0x1]
    %v332 = vlaneseq
    %v333 = vshrl.u32 %v332, 7
    %v334 = vsub.s32 0, %v333
    %v335 = vrot.slane %v330, %v334
    %v337 = vmul.f32 %v314, %v335
    %v338 = vmul.f32 %v315, %v335
    %v339 = vmul.f32 %v316, %v335
    %v340 = vmul.f32 %v317, %v335
    %v341 = vmul.f32 %v318, %v335
    %v342 = vmul.f32 %v319, %v335
    %v343 = vmul.f32 %v320, %v335
    %v344 = vmul.f32 %v321, %v335
    %v345 = vmul.f32 %v322, %v335
    %v346 = vmul.f32 %v323, %v335
    %v347 = vmul.f32 %v324, %v335
    %v348 = vmul.f32 %v325, %v335
    %v349 = vmul.f32 %v326, %v335
    %v350 = vmul.f32 %v327, %v335
    %v351 = vmul.f32 %v328, %v335
    %v352 = vmul.f32 %v329, %v335
    %v353 = vld [vmem:[%s3] sm:$0x1]
    %v355 = vlaneseq
    %v356 = vshrl.u32 %v355, 7
    %v357 = vsub.s32 0, %v356
    %v358 = vrot.slane %v353, %v357
    %v360 = vadd.f32 %v337, %v358
    %v361 = vadd.f32 %v338, %v358
    %v362 = vadd.f32 %v339, %v358
    %v363 = vadd.f32 %v340, %v358
    %v364 = vadd.f32 %v341, %v358
    %v365 = vadd.f32 %v342, %v358
    %v366 = vadd.f32 %v343, %v358
    %v367 = vadd.f32 %v344, %v358
    %v368 = vadd.f32 %v345, %v358
    %v369 = vadd.f32 %v346, %v358
    %v370 = vadd.f32 %v347, %v358
    %v371 = vadd.f32 %v348, %v358
    %v372 = vadd.f32 %v349, %v358
    %v373 = vadd.f32 %v350, %v358
    %v374 = vadd.f32 %v351, %v358
    %v375 = vadd.f32 %v352, %v358
    %v376 = vmax.f32 %v360, 0.0
    %v377 = vmax.f32 %v361, 0.0
    %v378 = vmax.f32 %v362, 0.0
    %v379 = vmax.f32 %v363, 0.0
    %v380 = vmax.f32 %v364, 0.0
    %v381 = vmax.f32 %v365, 0.0
    %v382 = vmax.f32 %v366, 0.0
    %v383 = vmax.f32 %v367, 0.0
    %v384 = vmax.f32 %v368, 0.0
    %v385 = vmax.f32 %v369, 0.0
    %v386 = vmax.f32 %v370, 0.0
    %v387 = vmax.f32 %v371, 0.0
    %v388 = vmax.f32 %v372, 0.0
    %v389 = vmax.f32 %v373, 0.0
    %v390 = vmax.f32 %v374, 0.0
    %v391 = vmax.f32 %v375, 0.0
    %392 = vst [vmem:[%s4] sm:$0xff] %v376
    %393 = vst [vmem:[%s4 + $0x8] sm:$0xff] %v377
    %394 = vst [vmem:[%s4 + $0x10] sm:$0xff] %v378
    %395 = vst [vmem:[%s4 + $0x18] sm:$0xff] %v379
    %396 = vst [vmem:[%s4 + $0x20] sm:$0xff] %v380
    %397 = vst [vmem:[%s4 + $0x28] sm:$0xff] %v381
    %398 = vst [vmem:[%s4 + $0x30] sm:$0xff] %v382
    %399 = vst [vmem:[%s4 + $0x38] sm:$0xff] %v383
    %400 = vst [vmem:[%s4 + $0x40] sm:$0xff] %v384
    %401 = vst [vmem:[%s4 + $0x48] sm:$0xff] %v385
    %402 = vst [vmem:[%s4 + $0x50] sm:$0xff] %v386
    %403 = vst [vmem:[%s4 + $0x58] sm:$0xff] %v387
    %404 = vst [vmem:[%s4 + $0x60] sm:$0xff] %v388
    %405 = vst [vmem:[%s4 + $0x68] sm:$0xff] %v389
    %406 = vst [vmem:[%s4 + $0x70] sm:$0xff] %v390
    %407 = vst [vmem:[%s4 + $0x78] sm:$0xff] %v391
  $region25: #{pointwise_spatial_attention.7} parent=0 // pred_fallthru
    _
  // Predicated region
  $region26: #{pointwise_spatial_attention.7} parent=0 // pred_check
    _
  $region27: #{pointwise_spatial_attention.7} parent=0 // pred_check_branch
    %409 = sbr.rel (0) target = $region29
  $region28: #{pointwise_spatial_attention.7} parent=0 // pred_region
    _
  $region29: #{pointwise_spatial_attention.7} parent=0 // pred_fallthru
    _
  // Predicated region
  $region30: #{pointwise_spatial_attention.7} parent=0 // pred_check
    _
  $region31: #{pointwise_spatial_attention.7} parent=0 // pred_check_branch
    %411 = sbr.rel (0) target = $region33
  $region32: #{pointwise_spatial_attention.7} parent=0 // pred_region
    _
  $region33: #{pointwise_spatial_attention.7} parent=0 // pred_fallthru
    _

// kernel: pointwise_spatial_attention.9
$region0: #{pointwise_spatial_attention.9}
  #allocation0 [shape = 'u32[]', space=smem, size = 0x4, offset = 0x4, fixed_abs, tag = 'smem constant byte address 0x4 - core index']
  #allocation1 [shape = 'u32[144,128]{1,0:T(1,128)}', space=vmem, size = 0x12000, scoped, tag = 'internal scratch']
  #allocation2 [shape = 'f32[128,128]{1,0:T(8,128)}', space=vmem, size = 0x10000, scoped, tag = 'scratch operand']
  %s0 = inlined_call_operand.vmem [shape: bf16[128,128], index: 0, kind: input, shape index: {}]
  %s1 = inlined_call_operand.vmem [shape: bf16[128,128], index: 1, kind: input, shape index: {}]
  %s2 = inlined_call_operand.vmem [shape: f32[1,128], index: 2, kind: input, shape index: {}]
  %s3 = inlined_call_operand.vmem [shape: f32[1,128], index: 3, kind: input, shape index: {}]
  %s4 = inlined_call_operand.hbm [shape: f32[128,128], index: 4, kind: output, shape index: {}]
  %s5 = sld [smem:[#allocation0]]
  $region34: #{pointwise_spatial_attention.9} parent=0
    _
  %s7 = ssub.s32 1, %s5
  %s8 = scalar_select 0, %s7, %s5
  $region1: #{pointwise_spatial_attention.9} parent=0
    #allocation3 [shape = 'u8[65536]{0}', space=vmem, size = 0x10000, scoped, tag = 'output window, operand 0, single buffered']
    #allocation4 [shape = 's32[1]{0}', space=sflag, size = 0x4, scoped, tag = 'scoped memory for pointwise_spatial_attention.9']
    %9 = vsyncpa [#allocation4], 0
    // Predicated region
    $region2: #{pointwise_spatial_attention.9} parent=1 // pred_check
      _
    $region3: #{pointwise_spatial_attention.9} parent=1 // pred_check_branch
      %11 = sbr.rel (0) target = $region5
    $region4: #{pointwise_spatial_attention.9} parent=1 // pred_region
      _
    $region5: #{pointwise_spatial_attention.9} parent=1 // pred_fallthru
      _
    // Predicated region
    $region6: #{pointwise_spatial_attention.9} parent=1 // pred_check
      _
    $region7: #{pointwise_spatial_attention.9} parent=1 // pred_check_branch
      %13 = sbr.rel (0) target = $region9
    $region8: #{pointwise_spatial_attention.9} parent=1 // pred_region
      _
    $region9: #{pointwise_spatial_attention.9} parent=1 // pred_fallthru
      _
    // Predicated region
    $region10: #{pointwise_spatial_attention.9} parent=1 // pred_check
      _
    $region11: #{pointwise_spatial_attention.9} parent=1 // pred_check_branch
      %15 = sbr.rel (0) target = $region13
    $region12: #{pointwise_spatial_attention.9} parent=1 // pred_region
      _
    $region13: #{pointwise_spatial_attention.9} parent=1 // pred_fallthru
      _
    // Predicated region
    $region14: #{pointwise_spatial_attention.9} parent=1 // pred_check
      _
    $region15: #{pointwise_spatial_attention.9} parent=1 // pred_check_branch
      %17 = sbr.rel (0) target = $region17
    $region16: #{pointwise_spatial_attention.9} parent=1 // pred_region
      _
    $region17: #{pointwise_spatial_attention.9} parent=1 // pred_fallthru
      _
    %p19 = scmp.eq.s32.totalorder 0, 0
    // Predicated region
    $region18: #{pointwise_spatial_attention.9} parent=1 // pred_check
      %p20 = pneg %p19
    $region19: #{pointwise_spatial_attention.9} parent=1 // pred_check_branch
      %22 = sbr.rel (%p20) target = $region21
    $region20: #{pointwise_spatial_attention.9} parent=1 // pred_region
      %23 = vst [vmem:[#allocation2] sm:$0xff] 0.0
      %24 = vst [vmem:[#allocation2 + $0x8] sm:$0xff] 0.0
      %25 = vst [vmem:[#allocation2 + $0x10] sm:$0xff] 0.0
      %26 = vst [vmem:[#allocation2 + $0x18] sm:$0xff] 0.0
      %27 = vst [vmem:[#allocation2 + $0x20] sm:$0xff] 0.0
      %28 = vst [vmem:[#allocation2 + $0x28] sm:$0xff] 0.0
      %29 = vst [vmem:[#allocation2 + $0x30] sm:$0xff] 0.0
      %30 = vst [vmem:[#allocation2 + $0x38] sm:$0xff] 0.0
      %31 = vst [vmem:[#allocation2 + $0x40] sm:$0xff] 0.0
      %32 = vst [vmem:[#allocation2 + $0x48] sm:$0xff] 0.0
      %33 = vst [vmem:[#allocation2 + $0x50] sm:$0xff] 0.0
      %34 = vst [vmem:[#allocation2 + $0x58] sm:$0xff] 0.0
      %35 = vst [vmem:[#allocation2 + $0x60] sm:$0xff] 0.0
      %36 = vst [vmem:[#allocation2 + $0x68] sm:$0xff] 0.0
      %37 = vst [vmem:[#allocation2 + $0x70] sm:$0xff] 0.0
      %38 = vst [vmem:[#allocation2 + $0x78] sm:$0xff] 0.0
    $region21: #{pointwise_spatial_attention.9} parent=1 // pred_fallthru
      _
    %v39 = vld [vmem:[#allocation2] sm:$0xff]
    %v40 = vld [vmem:[#allocation2 + $0x8] sm:$0xff]
    %v41 = vld [vmem:[#allocation2 + $0x10] sm:$0xff]
    %v42 = vld [vmem:[#allocation2 + $0x18] sm:$0xff]
    %v43 = vld [vmem:[#allocation2 + $0x20] sm:$0xff]
    %v44 = vld [vmem:[#allocation2 + $0x28] sm:$0xff]
    %v45 = vld [vmem:[#allocation2 + $0x30] sm:$0xff]
    %v46 = vld [vmem:[#allocation2 + $0x38] sm:$0xff]
    %v47 = vld [vmem:[#allocation2 + $0x40] sm:$0xff]
    %v48 = vld [vmem:[#allocation2 + $0x48] sm:$0xff]
    %v49 = vld [vmem:[#allocation2 + $0x50] sm:$0xff]
    %v50 = vld [vmem:[#allocation2 + $0x58] sm:$0xff]
    %v51 = vld [vmem:[#allocation2 + $0x60] sm:$0xff]
    %v52 = vld [vmem:[#allocation2 + $0x68] sm:$0xff]
    %v53 = vld [vmem:[#allocation2 + $0x70] sm:$0xff]
    %v54 = vld [vmem:[#allocation2 + $0x78] sm:$0xff]
    %v55 = vld [vmem:[%s0] sm:$0xf]
    %v56 = vld [vmem:[%s0 + $0x4] sm:$0xf]
    %v57 = vld [vmem:[%s0 + $0x8] sm:$0xf]
    %v58 = vld [vmem:[%s0 + $0xc] sm:$0xf]
    %v59 = vld [vmem:[%s0 + $0x10] sm:$0xf]
    %v60 = vld [vmem:[%s0 + $0x14] sm:$0xf]
    %v61 = vld [vmem:[%s0 + $0x18] sm:$0xf]
    %v62 = vld [vmem:[%s0 + $0x1c] sm:$0xf]
    %v63 = vld [vmem:[%s0 + $0x20] sm:$0xf]
    %v64 = vld [vmem:[%s0 + $0x24] sm:$0xf]
    %v65 = vld [vmem:[%s0 + $0x28] sm:$0xf]
    %v66 = vld [vmem:[%s0 + $0x2c] sm:$0xf]
    %v67 = vld [vmem:[%s0 + $0x30] sm:$0xf]
    %v68 = vld [vmem:[%s0 + $0x34] sm:$0xf]
    %v69 = vld [vmem:[%s0 + $0x38] sm:$0xf]
    %v70 = vld [vmem:[%s0 + $0x3c] sm:$0xf]
    %v71 = vld [vmem:[%s1] sm:$0xf]
    %v72 = vld [vmem:[%s1 + $0x4] sm:$0xf]
    %v73 = vld [vmem:[%s1 + $0x8] sm:$0xf]
    %v74 = vld [vmem:[%s1 + $0xc] sm:$0xf]
    %v75 = vld [vmem:[%s1 + $0x10] sm:$0xf]
    %v76 = vld [vmem:[%s1 + $0x14] sm:$0xf]
    %v77 = vld [vmem:[%s1 + $0x18] sm:$0xf]
    %v78 = vld [vmem:[%s1 + $0x1c] sm:$0xf]
    %v79 = vld [vmem:[%s1 + $0x20] sm:$0xf]
    %v80 = vld [vmem:[%s1 + $0x24] sm:$0xf]
    %v81 = vld [vmem:[%s1 + $0x28] sm:$0xf]
    %v82 = vld [vmem:[%s1 + $0x2c] sm:$0xf]
    %v83 = vld [vmem:[%s1 + $0x30] sm:$0xf]
    %v84 = vld [vmem:[%s1 + $0x34] sm:$0xf]
    %v85 = vld [vmem:[%s1 + $0x38] sm:$0xf]
    %v86 = vld [vmem:[%s1 + $0x3c] sm:$0xf]
    %v103 = vunpack.c.l.b16 %v55
    %v104 = vunpack.c.l.b16 %v56
    %v105 = vunpack.c.l.b16 %v57
    %v106 = vunpack.c.l.b16 %v58
    %v107 = vunpack.c.l.b16 %v59
    %v108 = vunpack.c.l.b16 %v60
    %v109 = vunpack.c.l.b16 %v61
    %v110 = vunpack.c.l.b16 %v62
    %v111 = vunpack.c.l.b16 %v63
    %v112 = vunpack.c.l.b16 %v64
    %v113 = vunpack.c.l.b16 %v65
    %v114 = vunpack.c.l.b16 %v66
    %v115 = vunpack.c.l.b16 %v67
    %v116 = vunpack.c.l.b16 %v68
    %v117 = vunpack.c.l.b16 %v69
    %v118 = vunpack.c.l.b16 %v70
    %v119 = vpack.c.b16 %v104, %v103
    %v120 = vpack.c.b16 %v106, %v105
    %v121 = vpack.c.b16 %v108, %v107
    %v122 = vpack.c.b16 %v110, %v109
    %v123 = vpack.c.b16 %v112, %v111
    %v124 = vpack.c.b16 %v114, %v113
    %v125 = vpack.c.b16 %v116, %v115
    %v126 = vpack.c.b16 %v118, %v117
    %v151 = vunpack.c.l.b16 %v71
    %v152 = vunpack.c.l.b16 %v72
    %v153 = vunpack.c.l.b16 %v73
    %v154 = vunpack.c.l.b16 %v74
    %v155 = vunpack.c.l.b16 %v75
    %v156 = vunpack.c.l.b16 %v76
    %v157 = vunpack.c.l.b16 %v77
    %v158 = vunpack.c.l.b16 %v78
    %v159 = vunpack.c.l.b16 %v79
    %v160 = vunpack.c.l.b16 %v80
    %v161 = vunpack.c.l.b16 %v81
    %v162 = vunpack.c.l.b16 %v82
    %v163 = vunpack.c.l.b16 %v83
    %v164 = vunpack.c.l.b16 %v84
    %v165 = vunpack.c.l.b16 %v85
    %v166 = vunpack.c.l.b16 %v86
    %v167 = vpack.c.b16 %v152, %v151
    %v168 = vpack.c.b16 %v154, %v153
    %v169 = vpack.c.b16 %v156, %v155
    %v170 = vpack.c.b16 %v158, %v157
    %v171 = vpack.c.b16 %v160, %v159
    %v172 = vpack.c.b16 %v162, %v161
    %v173 = vpack.c.b16 %v164, %v163
    %v174 = vpack.c.b16 %v166, %v165
    %183 = vmatprep.subr.bf16.mxu0 0
    %184 = vmatpush1.bf16.msra.mxu0 %v167
    %185 = vmatprep.subr.bf16.mxu0 0
    %186 = vmatpush1.bf16.msra.mxu0 %v168
    %187 = vmatprep.subr.bf16.mxu0 0
    %188 = vmatpush1.bf16.msra.mxu0 %v169
    %189 = vmatprep.subr.bf16.mxu0 0
    %190 = vmatpush1.bf16.msra.mxu0 %v170
    %191 = vmatprep.subr.bf16.mxu0 0
    %192 = vmatpush1.bf16.msra.mxu0 %v171
    %193 = vmatprep.subr.bf16.mxu0 0
    %194 = vmatpush1.bf16.msra.mxu0 %v172
    %195 = vmatprep.subr.bf16.mxu0 0
    %196 = vmatpush1.bf16.msra.mxu0 %v173
    %197 = vmatprep.subr.bf16.mxu0 0
    %198 = vmatpush1.bf16.msra.mxu0 %v174
    %199 = vmatprep.subr.bf16.mxu0 0
    %200 = vmatpush1.bf16.msra.mxu0 0
    %201 = vmatprep.subr.bf16.mxu0 0
    %202 = vmatpush1.bf16.msra.mxu0 0
    %203 = vmatprep.subr.bf16.mxu0 0
    %204 = vmatpush1.bf16.msra.mxu0 0
    %205 = vmatprep.subr.bf16.mxu0 0
    %206 = vmatpush1.bf16.msra.mxu0 0
    %207 = vmatprep.subr.bf16.mxu0 0
    %208 = vmatpush1.bf16.msra.mxu0 0
    %209 = vmatprep.subr.bf16.mxu0 0
    %210 = vmatpush1.bf16.msra.mxu0 0
    %211 = vmatprep.subr.bf16.mxu0 0
    %212 = vmatpush1.bf16.msra.mxu0 0
    %213 = vmatprep.subr.bf16.mxu0 0
    %214 = vmatpush1.bf16.msra.mxu0 0
    %215 = vmatprep.mubr.bf16.mxu0 0
    %216 = vmatmul.mubr.bf16.gmra.mrb[0].mxu0 %v119
    %v217 = vpop.f32.mrb[0].mxu0
    %v218 = vadd.f32 0.0, %v217
    %v219 = vpop.f32.mrb[0].mxu0
    %v220 = vpop.f32.mrb[0].mxu0
    %v221 = vadd.f32 0.0, %v220
    %v222 = vpop.f32.mrb[0].mxu0
    %223 = vmatprep.mubr.bf16.mxu0 0
    %224 = vmatmul.mubr.bf16.gmra.mrb[0].mxu0 %v120
    %v225 = vpop.f32.mrb[0].mxu0
    %v226 = vadd.f32 0.0, %v225
    %v227 = vpop.f32.mrb[0].mxu0
    %v228 = vpop.f32.mrb[0].mxu0
    %v229 = vadd.f32 0.0, %v228
    %v230 = vpop.f32.mrb[0].mxu0
    %231 = vmatprep.mubr.bf16.mxu0 0
    %232 = vmatmul.mubr.bf16.gmra.mrb[0].mxu0 %v121
    %v233 = vpop.f32.mrb[0].mxu0
    %v234 = vadd.f32 0.0, %v233
    %v235 = vpop.f32.mrb[0].mxu0
    %v236 = vpop.f32.mrb[0].mxu0
    %v237 = vadd.f32 0.0, %v236
    %v238 = vpop.f32.mrb[0].mxu0
    %239 = vmatprep.mubr.bf16.mxu0 0
    %240 = vmatmul.mubr.bf16.gmra.mrb[0].mxu0 %v122
    %v241 = vpop.f32.mrb[0].mxu0
    %v242 = vadd.f32 0.0, %v241
    %v243 = vpop.f32.mrb[0].mxu0
    %v244 = vpop.f32.mrb[0].mxu0
    %v245 = vadd.f32 0.0, %v244
    %v246 = vpop.f32.mrb[0].mxu0
    %247 = vmatprep.mubr.bf16.mxu0 0
    %248 = vmatmul.mubr.bf16.gmra.mrb[0].mxu0 %v123
    %v249 = vpop.f32.mrb[0].mxu0
    %v250 = vadd.f32 0.0, %v249
    %v251 = vpop.f32.mrb[0].mxu0
    %v252 = vpop.f32.mrb[0].mxu0
    %v253 = vadd.f32 0.0, %v252
    %v254 = vpop.f32.mrb[0].mxu0
    %255 = vmatprep.mubr.bf16.mxu0 0
    %256 = vmatmul.mubr.bf16.gmra.mrb[0].mxu0 %v124
    %v257 = vpop.f32.mrb[0].mxu0
    %v258 = vadd.f32 0.0, %v257
    %v259 = vpop.f32.mrb[0].mxu0
    %v260 = vpop.f32.mrb[0].mxu0
    %v261 = vadd.f32 0.0, %v260
    %v262 = vpop.f32.mrb[0].mxu0
    %263 = vmatprep.mubr.bf16.mxu0 0
    %264 = vmatmul.mubr.bf16.gmra.mrb[0].mxu0 %v125
    %v265 = vpop.f32.mrb[0].mxu0
    %v266 = vadd.f32 0.0, %v265
    %v267 = vpop.f32.mrb[0].mxu0
    %v268 = vpop.f32.mrb[0].mxu0
    %v269 = vadd.f32 0.0, %v268
    %v270 = vpop.f32.mrb[0].mxu0
    %271 = vmatprep.mubr.bf16.mxu0 0
    %272 = vmatmul.mubr.bf16.gmra.mrb[0].mxu0 %v126
    %v273 = vpop.f32.mrb[0].mxu0
    %v274 = vadd.f32 0.0, %v273
    %v275 = vpop.f32.mrb[0].mxu0
    %v276 = vpop.f32.mrb[0].mxu0
    %v277 = vadd.f32 0.0, %v276
    %v278 = vpop.f32.mrb[0].mxu0
    %279 = vdwg.mxu0
    %v280 = vadd.f32 %v39, %v218
    %v281 = vadd.f32 %v40, %v221
    %v282 = vadd.f32 %v41, %v226
    %v283 = vadd.f32 %v42, %v229
    %v284 = vadd.f32 %v43, %v234
    %v285 = vadd.f32 %v44, %v237
    %v286 = vadd.f32 %v45, %v242
    %v287 = vadd.f32 %v46, %v245
    %v288 = vadd.f32 %v47, %v250
    %v289 = vadd.f32 %v48, %v253
    %v290 = vadd.f32 %v49, %v258
    %v291 = vadd.f32 %v50, %v261
    %v292 = vadd.f32 %v51, %v266
    %v293 = vadd.f32 %v52, %v269
    %v294 = vadd.f32 %v53, %v274
    %v295 = vadd.f32 %v54, %v277
    %296 = vst [vmem:[#allocation2] sm:$0xff] %v280
    %297 = vst [vmem:[#allocation2 + $0x8] sm:$0xff] %v281
    %298 = vst [vmem:[#allocation2 + $0x10] sm:$0xff] %v282
    %299 = vst [vmem:[#allocation2 + $0x18] sm:$0xff] %v283
    %300 = vst [vmem:[#allocation2 + $0x20] sm:$0xff] %v284
    %301 = vst [vmem:[#allocation2 + $0x28] sm:$0xff] %v285
    %302 = vst [vmem:[#allocation2 + $0x30] sm:$0xff] %v286
    %303 = vst [vmem:[#allocation2 + $0x38] sm:$0xff] %v287
    %304 = vst [vmem:[#allocation2 + $0x40] sm:$0xff] %v288
    %305 = vst [vmem:[#allocation2 + $0x48] sm:$0xff] %v289
    %306 = vst [vmem:[#allocation2 + $0x50] sm:$0xff] %v290
    %307 = vst [vmem:[#allocation2 + $0x58] sm:$0xff] %v291
    %308 = vst [vmem:[#allocation2 + $0x60] sm:$0xff] %v292
    %309 = vst [vmem:[#allocation2 + $0x68] sm:$0xff] %v293
    %310 = vst [vmem:[#allocation2 + $0x70] sm:$0xff] %v294
    %311 = vst [vmem:[#allocation2 + $0x78] sm:$0xff] %v295
    // Predicated region
    $region22: #{pointwise_spatial_attention.9} parent=1 // pred_check
      %p312 = pneg %p19
    $region23: #{pointwise_spatial_attention.9} parent=1 // pred_check_branch
      %314 = sbr.rel (%p312) target = $region25
    $region24: #{pointwise_spatial_attention.9} parent=1 // pred_region
      %v315 = vld [vmem:[#allocation2] sm:$0xff]
      %v316 = vld [vmem:[#allocation2 + $0x8] sm:$0xff]
      %v317 = vld [vmem:[#allocation2 + $0x10] sm:$0xff]
      %v318 = vld [vmem:[#allocation2 + $0x18] sm:$0xff]
      %v319 = vld [vmem:[#allocation2 + $0x20] sm:$0xff]
      %v320 = vld [vmem:[#allocation2 + $0x28] sm:$0xff]
      %v321 = vld [vmem:[#allocation2 + $0x30] sm:$0xff]
      %v322 = vld [vmem:[#allocation2 + $0x38] sm:$0xff]
      %v323 = vld [vmem:[#allocation2 + $0x40] sm:$0xff]
      %v324 = vld [vmem:[#allocation2 + $0x48] sm:$0xff]
      %v325 = vld [vmem:[#allocation2 + $0x50] sm:$0xff]
      %v326 = vld [vmem:[#allocation2 + $0x58] sm:$0xff]
      %v327 = vld [vmem:[#allocation2 + $0x60] sm:$0xff]
      %v328 = vld [vmem:[#allocation2 + $0x68] sm:$0xff]
      %v329 = vld [vmem:[#allocation2 + $0x70] sm:$0xff]
      %v330 = vld [vmem:[#allocation2 + $0x78] sm:$0xff]
      %v331 = vld [vmem:[%s2] sm:$0x1]
      %v333 = vlaneseq
      %v334 = vshrl.u32 %v333, 7
      %v335 = vsub.s32 0, %v334
      %v336 = vrot.slane %v331, %v335
      %v338 = vmul.f32 %v315, %v336
      %v339 = vmul.f32 %v316, %v336
      %v340 = vmul.f32 %v317, %v336
      %v341 = vmul.f32 %v318, %v336
      %v342 = vmul.f32 %v319, %v336
      %v343 = vmul.f32 %v320, %v336
      %v344 = vmul.f32 %v321, %v336
      %v345 = vmul.f32 %v322, %v336
      %v346 = vmul.f32 %v323, %v336
      %v347 = vmul.f32 %v324, %v336
      %v348 = vmul.f32 %v325, %v336
      %v349 = vmul.f32 %v326, %v336
      %v350 = vmul.f32 %v327, %v336
      %v351 = vmul.f32 %v328, %v336
      %v352 = vmul.f32 %v329, %v336
      %v353 = vmul.f32 %v330, %v336
      %v354 = vld [vmem:[%s3] sm:$0x1]
      %v356 = vlaneseq
      %v357 = vshrl.u32 %v356, 7
      %v358 = vsub.s32 0, %v357
      %v359 = vrot.slane %v354, %v358
      %v361 = vadd.f32 %v338, %v359
      %v362 = vadd.f32 %v339, %v359
      %v363 = vadd.f32 %v340, %v359
      %v364 = vadd.f32 %v341, %v359
      %v365 = vadd.f32 %v342, %v359
      %v366 = vadd.f32 %v343, %v359
      %v367 = vadd.f32 %v344, %v359
      %v368 = vadd.f32 %v345, %v359
      %v369 = vadd.f32 %v346, %v359
      %v370 = vadd.f32 %v347, %v359
      %v371 = vadd.f32 %v348, %v359
      %v372 = vadd.f32 %v349, %v359
      %v373 = vadd.f32 %v350, %v359
      %v374 = vadd.f32 %v351, %v359
      %v375 = vadd.f32 %v352, %v359
      %v376 = vadd.f32 %v353, %v359
      %377 = vst [vmem:[#allocation3] sm:$0xff] %v361
      %378 = vst [vmem:[#allocation3 + $0x8] sm:$0xff] %v362
      %379 = vst [vmem:[#allocation3 + $0x10] sm:$0xff] %v363
      %380 = vst [vmem:[#allocation3 + $0x18] sm:$0xff] %v364
      %381 = vst [vmem:[#allocation3 + $0x20] sm:$0xff] %v365
      %382 = vst [vmem:[#allocation3 + $0x28] sm:$0xff] %v366
      %383 = vst [vmem:[#allocation3 + $0x30] sm:$0xff] %v367
      %384 = vst [vmem:[#allocation3 + $0x38] sm:$0xff] %v368
      %385 = vst [vmem:[#allocation3 + $0x40] sm:$0xff] %v369
      %386 = vst [vmem:[#allocation3 + $0x48] sm:$0xff] %v370
      %387 = vst [vmem:[#allocation3 + $0x50] sm:$0xff] %v371
      %388 = vst [vmem:[#allocation3 + $0x58] sm:$0xff] %v372
      %389 = vst [vmem:[#allocation3 + $0x60] sm:$0xff] %v373
      %390 = vst [vmem:[#allocation3 + $0x68] sm:$0xff] %v374
      %391 = vst [vmem:[#allocation3 + $0x70] sm:$0xff] %v375
      %392 = vst [vmem:[#allocation3 + $0x78] sm:$0xff] %v376
    $region25: #{pointwise_spatial_attention.9} parent=1 // pred_fallthru
      _
    // Predicated region
    $region26: #{pointwise_spatial_attention.9} parent=1 // pred_check
      _
    $region27: #{pointwise_spatial_attention.9} parent=1 // pred_check_branch
      %394 = sbr.rel (0) target = $region29
    $region28: #{pointwise_spatial_attention.9} parent=1 // pred_region
      %s396 = ssub.s32 2048, 2048
      %397 = vsyncadd [#allocation4], %s396
      %s398 = sshll.u32 [#allocation3], 4
      %s399 = int_to_ptr.vmem [resolvable:$true] %s398
      %404 = dma.vmem_to_hbm [thread:$0]  %s399, 2048, %s4, [#allocation4], 128, 128, 8
    $region29: #{pointwise_spatial_attention.9} parent=1 // pred_fallthru
      _
    // Predicated region
    $region30: #{pointwise_spatial_attention.9} parent=1 // pred_check
      _
    $region31: #{pointwise_spatial_attention.9} parent=1 // pred_check_branch
      %406 = sbr.rel (0) target = $region33
    $region32: #{pointwise_spatial_attention.9} parent=1 // pred_region
      %407 = dma.done [#allocation4], 2048
    $region33: #{pointwise_spatial_attention.9} parent=1 // pred_fallthru
      _
    %408 = vsyncpa [#allocation4], 1

// kernel: pointwise_spatial_attention.8
$region0: #{pointwise_spatial_attention.8}
  #allocation0 [shape = 'u32[]', space=smem, size = 0x4, offset = 0x4, fixed_abs, tag = 'smem constant byte address 0x4 - core index']
  #allocation1 [shape = 'u32[144,128]{1,0:T(1,128)}', space=vmem, size = 0x12000, scoped, tag = 'internal scratch']
  #allocation2 [shape = 'f32[8,8,128]{2,1,0:T(8,128)}', space=vmem, size = 0x8000, scoped, tag = 'scratch operand']
  %s0 = inlined_call_operand.vmem [shape: bf16[2,10,10,256], index: 0, kind: input, shape index: {}]
  %s1 = inlined_call_operand.vmem [shape: bf16[3,3,256,128], index: 1, kind: input, shape index: {}]
  %s2 = inlined_call_operand.vmem [shape: f32[1,128], index: 2, kind: input, shape index: {}]
  %s3 = inlined_call_operand.vmem [shape: f32[1,128], index: 3, kind: input, shape index: {}]
  %s4 = inlined_call_operand.vmem [shape: f32[2,8,8,128], index: 4, kind: output, shape index: {}]
  %s5 = sld [smem:[#allocation0]]
  $region57: #{pointwise_spatial_attention.8} parent=0
    _
  %s7 = ssub.s32 1, %s5
  %s8 = scalar_select 0, %s7, %s5
  loop: start=0, step=1, limit=4
  $region2: #{pointwise_spatial_attention.8} parent=0 // loop_pre_header
    _
  $region3: #{pointwise_spatial_attention.8} parent=0 // loop_header
    %s10 = sphi 0, %s14
    %p11 = scmp.ge.s32.totalorder %s10, 4
    %s17 = sphi 0, %s29
    %s18 = sphi 0, %s25
    %s19 = sphi 0, %s17
    %s20 = sphi 0, %s18
    %s21 = sphi 0, %s19
    %s22 = sphi 0, %s20
    %s34 = sphi 0, %s36
    %s37 = sphi 0, %s34
    %s38 = sphi 0, %s37
    %s54 = sphi 0, %s38
    %s60 = sphi 0, %s62
    %s63 = sphi 0, %s60
    %s64 = sphi 0, %s63
    %s80 = sphi 0, %s64
    %s84 = sphi 0, %s84
    %s86 = sphi 0, %s84
    %s87 = sphi 0, %s86
    %s101 = sphi 0, %s87
    %s105 = sphi 0, %s105
    %s107 = sphi 0, %s105
    %s108 = sphi 0, %s107
    %s122 = sphi 0, %s108
    %s128 = sphi 0, %s130
    %s131 = sphi 0, %s128
    %s132 = sphi 0, %s131
    %s148 = sphi 0, %s132
  $region4: #{pointwise_spatial_attention.8} parent=0 // loop_header_branch
    %13 = sbr.rel (%p11) target = $region8
  $region5: #{pointwise_spatial_attention.8} parent=0 // loop_body
    %s15 = ssub.s32 %s10, 1
    %s16 = ssub.s32 %s10, 2
    %s23 = sadd.s32 1, %s18
    %p24 = scmp.ge.s32.totalorder %s23, 1
    %s25 = scalar_select %p24, 0, %s23
    %s26 = sadd.s32 1, %s17
    %s27 = scalar_select %p24, %s26, %s17
    %p28 = scmp.ge.s32.totalorder %s27, 2
    %s29 = scalar_select %p28, 0, %s27
    %s30 = ssub.s32 %s17, %s29
    %s31 = ssub.s32 %s18, %s25
    %s32 = sor.u32 %s30, %s31
    %p33 = scmp.eq.s32.totalorder %s32, 0
    %s35 = sadd.s32 %s34, 1
    %s36 = scalar_select %p33, %s34, %s35
    %p39 = pneg %p33
    %p40 = scmp.eq.s32.totalorder %s10, 1
    %p41 = por %p39, %p40
    %p42 = scmp.ne.s32.totalorder %s34, %s37
    %p43 = scmp.eq.s32.totalorder %s10, 0
    %p44 = por %p42, %p43
    %p45 = scmp.ne.s32.totalorder %s34, %s37
    %p46 = scmp.eq.s32.totalorder %s15, 1
    %p47 = por %p45, %p46
    %p48 = scmp.ne.s32.totalorder %s37, %s38
    %p49 = scmp.eq.s32.totalorder %s15, 0
    %p50 = por %p48, %p49
    %p51 = scmp.ne.s32.totalorder %s37, %s38
    %p52 = scmp.eq.s32.totalorder %s16, 1
    %p53 = por %p51, %p52
    %p55 = scmp.ne.s32.totalorder %s38, %s54
    %p56 = scmp.eq.s32.totalorder %s16, 0
    %p57 = por %p55, %p56
    %s58 = ssub.s32 %s18, %s25
    %p59 = scmp.eq.s32.totalorder %s58, 0
    %s61 = sadd.s32 %s60, 1
    %s62 = scalar_select %p59, %s60, %s61
    %p65 = pneg %p59
    %p66 = scmp.eq.s32.totalorder %s10, 1
    %p67 = por %p65, %p66
    %p68 = scmp.ne.s32.totalorder %s60, %s63
    %p69 = scmp.eq.s32.totalorder %s10, 0
    %p70 = por %p68, %p69
    %p71 = scmp.ne.s32.totalorder %s60, %s63
    %p72 = scmp.eq.s32.totalorder %s15, 1
    %p73 = por %p71, %p72
    %p74 = scmp.ne.s32.totalorder %s63, %s64
    %p75 = scmp.eq.s32.totalorder %s15, 0
    %p76 = por %p74, %p75
    %p77 = scmp.ne.s32.totalorder %s63, %s64
    %p78 = scmp.eq.s32.totalorder %s16, 1
    %p79 = por %p77, %p78
    %p81 = scmp.ne.s32.totalorder %s64, %s80
    %p82 = scmp.eq.s32.totalorder %s16, 0
    %p83 = por %p81, %p82
    %s85 = sadd.s32 %s84, 1
    %p88 = scmp.eq.s32.totalorder %s10, 1
    %p89 = scmp.ne.s32.totalorder %s84, %s86
    %p90 = scmp.eq.s32.totalorder %s10, 0
    %p91 = por %p89, %p90
    %p92 = scmp.ne.s32.totalorder %s84, %s86
    %p93 = scmp.eq.s32.totalorder %s15, 1
    %p94 = por %p92, %p93
    %p95 = scmp.ne.s32.totalorder %s86, %s87
    %p96 = scmp.eq.s32.totalorder %s15, 0
    %p97 = por %p95, %p96
    %p98 = scmp.ne.s32.totalorder %s86, %s87
    %p99 = scmp.eq.s32.totalorder %s16, 1
    %p100 = por %p98, %p99
    %p102 = scmp.ne.s32.totalorder %s87, %s101
    %p103 = scmp.eq.s32.totalorder %s16, 0
    %p104 = por %p102, %p103
    %s106 = sadd.s32 %s105, 1
    %p109 = scmp.eq.s32.totalorder %s10, 1
    %p110 = scmp.ne.s32.totalorder %s105, %s107
    %p111 = scmp.eq.s32.totalorder %s10, 0
    %p112 = por %p110, %p111
    %p113 = scmp.ne.s32.totalorder %s105, %s107
    %p114 = scmp.eq.s32.totalorder %s15, 1
    %p115 = por %p113, %p114
    %p116 = scmp.ne.s32.totalorder %s107, %s108
    %p117 = scmp.eq.s32.totalorder %s15, 0
    %p118 = por %p116, %p117
    %p119 = scmp.ne.s32.totalorder %s107, %s108
    %p120 = scmp.eq.s32.totalorder %s16, 1
    %p121 = por %p119, %p120
    %p123 = scmp.ne.s32.totalorder %s108, %s122
    %p124 = scmp.eq.s32.totalorder %s16, 0
    %p125 = por %p123, %p124
    %s126 = ssub.s32 %s17, %s29
    %p127 = scmp.eq.s32.totalorder %s126, 0
    %s129 = sadd.s32 %s128, 1
    %s130 = scalar_select %p127, %s128, %s129
    %p133 = pneg %p127
    %p134 = scmp.eq.s32.totalorder %s10, 1
    %p135 = por %p133, %p134
    %p136 = scmp.ne.s32.totalorder %s128, %s131
    %p137 = scmp.eq.s32.totalorder %s10, 0
    %p138 = por %p136, %p137
    %p139 = scmp.ne.s32.totalorder %s128, %s131
    %p140 = scmp.eq.s32.totalorder %s15, 1
    %p141 = por %p139, %p140
    %p142 = scmp.ne.s32.totalorder %s131, %s132
    %p143 = scmp.eq.s32.totalorder %s15, 0
    %p144 = por %p142, %p143
    %p145 = scmp.ne.s32.totalorder %s131, %s132
    %p146 = scmp.eq.s32.totalorder %s16, 1
    %p147 = por %p145, %p146
    %p149 = scmp.ne.s32.totalorder %s132, %s148
    %p150 = scmp.eq.s32.totalorder %s16, 0
    %p151 = por %p149, %p150
    %p152 = scmp.le.s32.totalorder 1, %s10
    %p153 = scmp.lt.s32.totalorder %s10, 3
    %p154 = pnand %p152, %p153
    %p155 = pneg %p154
    // Predicated region
    $region9: #{pointwise_spatial_attention.8} parent=5 // pred_check
      _
    $region10: #{pointwise_spatial_attention.8} parent=5 // pred_check_branch
      %157 = sbr.rel (%p154) target = $region12
    $region11: #{pointwise_spatial_attention.8} parent=5 // pred_region
      %s158 = ssub.s32 %s10, 1
      // Predicated region
      $region13: #{pointwise_spatial_attention.8} parent=11 // pred_check
        %p159 = pneg %p76
      $region14: #{pointwise_spatial_attention.8} parent=11 // pred_check_branch
        %161 = sbr.rel (%p159) target = $region16
      $region15: #{pointwise_spatial_attention.8} parent=11 // pred_region
        %s162 = smul.u32 32, %s20
        %p163 = scmp.lt.s32.totalorder %s162, 31
        %s164 = scalar_select %p163, %s162, 31
        %s165 = smul.addr %s164, 4
        %s166 = scalar_lea.vmem %s1, %s165
        %s167 = smul.u32 32, %s20
      $region16: #{pointwise_spatial_attention.8} parent=11 // pred_fallthru
        _
      // Predicated region
      $region17: #{pointwise_spatial_attention.8} parent=11 // pred_check
        %p168 = pneg %p97
      $region18: #{pointwise_spatial_attention.8} parent=11 // pred_check_branch
        %170 = sbr.rel (%p168) target = $region20
      $region19: #{pointwise_spatial_attention.8} parent=11 // pred_region
        _
      $region20: #{pointwise_spatial_attention.8} parent=11 // pred_fallthru
        _
      // Predicated region
      $region21: #{pointwise_spatial_attention.8} parent=11 // pred_check
        %p171 = pneg %p118
      $region22: #{pointwise_spatial_attention.8} parent=11 // pred_check_branch
        %173 = sbr.rel (%p171) target = $region24
      $region23: #{pointwise_spatial_attention.8} parent=11 // pred_region
        _
      $region24: #{pointwise_spatial_attention.8} parent=11 // pred_fallthru
        _
    $region12: #{pointwise_spatial_attention.8} parent=5 // pred_fallthru
      _
    %p174 = scmp.lt.s32.totalorder %s10, 2
    // Predicated region
    $region25: #{pointwise_spatial_attention.8} parent=5 // pred_check
      %p175 = pneg %p174
    $region26: #{pointwise_spatial_attention.8} parent=5 // pred_check_branch
      %177 = sbr.rel (%p175) target = $region28
    $region27: #{pointwise_spatial_attention.8} parent=5 // pred_region
      // Predicated region
      $region29: #{pointwise_spatial_attention.8} parent=27 // pred_check
        %p178 = pneg %p44
      $region30: #{pointwise_spatial_attention.8} parent=27 // pred_check_branch
        %180 = sbr.rel (%p178) target = $region32
      $region31: #{pointwise_spatial_attention.8} parent=27 // pred_region
        %s181 = smul.u32 2, %s18
        %p182 = scmp.lt.s32.totalorder %s17, 1
        %s183 = scalar_select %p182, %s17, 1
        %p184 = scmp.lt.s32.totalorder %s181, 1
        %s185 = scalar_select %p184, %s181, 1
        %s186 = smul.addr %s183, 40
        %s187 = sadd.s32 %s185, %s186
        %s188 = smul.addr %s187, 4
        %s189 = scalar_lea.vmem %s0, %s188
        %s190 = smul.u32 2, %s18
      $region32: #{pointwise_spatial_attention.8} parent=27 // pred_fallthru
        _
    $region28: #{pointwise_spatial_attention.8} parent=5 // pred_fallthru
      _
    %p191 = scmp.le.s32.totalorder 1, %s10
    %p192 = scmp.lt.s32.totalorder %s10, 3
    %p193 = pnand %p191, %p192
    %p194 = pneg %p193
    // Predicated region
    $region33: #{pointwise_spatial_attention.8} parent=5 // pred_check
      _
    $region34: #{pointwise_spatial_attention.8} parent=5 // pred_check_branch
      %196 = sbr.rel (%p193) target = $region36
    $region35: #{pointwise_spatial_attention.8} parent=5 // pred_region
      %s197 = ssub.s32 %s10, 1
      %s198 = smul.u32 2, %s20
      %p199 = scmp.lt.s32.totalorder %s19, 1
      %s200 = scalar_select %p199, %s19, 1
      %p201 = scmp.lt.s32.totalorder %s198, 1
      %s202 = scalar_select %p201, %s198, 1
      %s203 = smul.addr %s200, 40
      %s204 = sadd.s32 %s202, %s203
      %s205 = smul.addr %s204, 4
      %s206 = scalar_lea.vmem %s0, %s205
      %p207 = pneg %p50
      %p208 = pneg %p47
      %s209 = smul.u32 32, %s20
      %p210 = scmp.lt.s32.totalorder %s209, 31
      %s211 = scalar_select %p210, %s209, 31
      %s212 = smul.addr %s211, 4
      %s213 = scalar_lea.vmem %s1, %s212
      %p214 = pneg %p76
      %p215 = pneg %p73
      %p216 = pneg %p97
      %p217 = pneg %p94
      %p218 = pneg %p118
      %p219 = pneg %p115
      %p220 = pneg %p144
      %p221 = pneg %p141
      %p222 = scmp.lt.s32.totalorder %s19, 1
      %s223 = scalar_select %p222, %s19, 1
      %s224 = smul.addr %s223, 8
      %s225 = smul.addr %s224, 8
      %s226 = scalar_lea.vmem %s4, %s225
      %s227 = smul.u32 2, %s20
      %p228 = scmp.lt.s32.totalorder %s19, 1
      %s229 = scalar_select %p228, %s19, 1
      %p230 = scmp.lt.s32.totalorder %s227, 1
      %s231 = scalar_select %p230, %s227, 1
      %s232 = smul.addr %s229, 40
      %s233 = sadd.s32 %s231, %s232
      %s234 = smul.addr %s233, 4
      %s235 = scalar_lea.vmem %s0, %s234
      %s236 = smul.u32 2, %s20
      %s237 = smul.u32 32, %s20
      %p238 = scmp.lt.s32.totalorder %s237, 31
      %s239 = scalar_select %p238, %s237, 31
      %s240 = smul.addr %s239, 4
      %s241 = scalar_lea.vmem %s1, %s240
      %s242 = smul.u32 32, %s20
      %p243 = scmp.lt.s32.totalorder %s19, 1
      %s244 = scalar_select %p243, %s19, 1
      %s245 = smul.addr %s244, 8
      %s246 = smul.addr %s245, 8
      %s247 = scalar_lea.vmem %s4, %s246
      %p249 = scmp.eq.s32.totalorder %s20, 0
      // Predicated region
      $region37: #{pointwise_spatial_attention.8} parent=35 // pred_check
        %p250 = pneg %p249
      $region38: #{pointwise_spatial_attention.8} parent=35 // pred_check_branch
        %252 = sbr.rel (%p250) target = $region40
      $region39: #{pointwise_spatial_attention.8} parent=35 // pred_region
        %253 = vst [vmem:[#allocation2] sm:$0xff] 0.0
        %254 = vst [vmem:[#allocation2 + $0x8] sm:$0xff] 0.0
        %255 = vst [vmem:[#allocation2 + $0x10] sm:$0xff] 0.0
        %256 = vst [vmem:[#allocation2 + $0x18] sm:$0xff] 0.0
        %257 = vst [vmem:[#allocation2 + $0x20] sm:$0xff] 0.0
        %258 = vst [vmem:[#allocation2 + $0x28] sm:$0xff] 0.0
        %259 = vst [vmem:[#allocation2 + $0x30] sm:$0xff] 0.0
        %260 = vst [vmem:[#allocation2 + $0x38] sm:$0xff] 0.0
      $region40: #{pointwise_spatial_attention.8} parent=35 // pred_fallthru
        _
      %v261 = vld [vmem:[%s235] sm:$0xff]
      %v262 = vld [vmem:[%s235 + $0x8] sm:$0x11]
      %v263 = vld [vmem:[%s235 + $0x10] sm:$0xff]
      %v264 = vld [vmem:[%s235 + $0x18] sm:$0x11]
      %v265 = vld [vmem:[%s235 + $0x20] sm:$0xff]
      %v266 = vld [vmem:[%s235 + $0x28] sm:$0x11]
      %v267 = vld [vmem:[%s235 + $0x30] sm:$0xff]
      %v268 = vld [vmem:[%s235 + $0x38] sm:$0x11]
      %v269 = vld [vmem:[%s235 + $0x40] sm:$0xff]
      %v270 = vld [vmem:[%s235 + $0x48] sm:$0x11]
      %v271 = vld [vmem:[%s235 + $0x50] sm:$0xff]
      %v272 = vld [vmem:[%s235 + $0x58] sm:$0x11]
      %v273 = vld [vmem:[%s235 + $0x60] sm:$0xff]
      %v274 = vld [vmem:[%s235 + $0x68] sm:$0x11]
      %v275 = vld [vmem:[%s235 + $0x70] sm:$0xff]
      %v276 = vld [vmem:[%s235 + $0x78] sm:$0x11]
      %v277 = vld [vmem:[%s235 + $0x80] sm:$0xff]
      %v278 = vld [vmem:[%s235 + $0x88] sm:$0x11]
      %v279 = vld [vmem:[%s235 + $0x90] sm:$0xff]
      %v280 = vld [vmem:[%s235 + $0x98] sm:$0x11]
      %v281 = vld [vmem:[%s241] sm:$0xf]
      %v282 = vld [vmem:[%s241 + $0x4] sm:$0xf]
      %v283 = vld [vmem:[%s241 + $0x8] sm:$0xf]
      %v284 = vld [vmem:[%s241 + $0xc] sm:$0xf]
      %v285 = vld [vmem:[%s241 + $0x10] sm:$0xf]
      %v286 = vld [vmem:[%s241 + $0x14] sm:$0xf]
      %v287 = vld [vmem:[%s241 + $0x18] sm:$0xf]
      %v288 = vld [vmem:[%s241 + $0x1c] sm:$0xf]
      %v289 = vld [vmem:[%s241 + $0x20] sm:$0xf]
      %v290 = vld [vmem:[%s241 + $0x24] sm:$0xf]
      %v291 = vld [vmem:[%s241 + $0x28] sm:$0xf]
      %v292 = vld [vmem:[%s241 + $0x2c] sm:$0xf]
      %v293 = vld [vmem:[%s241 + $0x30] sm:$0xf]
      %v294 = vld [vmem:[%s241 + $0x34] sm:$0xf]
      %v295 = vld [vmem:[%s241 + $0x38] sm:$0xf]
      %v296 = vld [vmem:[%s241 + $0x3c] sm:$0xf]
      %v297 = vld [vmem:[%s241 + $0x40] sm:$0xf]
      %v298 = vld [vmem:[%s241 + $0x44] sm:$0xf]
      %v299 = vld [vmem:[%s241 + $0x48] sm:$0xf]
      %v300 = vld [vmem:[%s241 + $0x4c] sm:$0xf]
      %v301 = vld [vmem:[%s241 + $0x50] sm:$0xf]
      %v302 = vld [vmem:[%s241 + $0x54] sm:$0xf]
      %v303 = vld [vmem:[%s241 + $0x58] sm:$0xf]
      %v304 = vld [vmem:[%s241 + $0x5c] sm:$0xf]
      %v305 = vld [vmem:[%s241 + $0x60] sm:$0xf]
      %v306 = vld [vmem:[%s241 + $0x64] sm:$0xf]
      %v307 = vld [vmem:[%s241 + $0x68] sm:$0xf]
      %v308 = vld [vmem:[%s241 + $0x6c] sm:$0xf]
      %v309 = vld [vmem:[%s241 + $0x70] sm:$0xf]
      %v310 = vld [vmem:[%s241 + $0x74] sm:$0xf]
      %v311 = vld [vmem:[%s241 + $0x78] sm:$0xf]
      %v312 = vld [vmem:[%s241 + $0x7c] sm:$0xf]
      %s313 = scalar_lea.vmem %s241, 128
      %v314 = vld [vmem:[%s313] sm:$0xf]
      %v315 = vld [vmem:[%s313 + $0x4] sm:$0xf]
      %v316 = vld [vmem:[%s313 + $0x8] sm:$0xf]
      %v317 = vld [vmem:[%s313 + $0xc] sm:$0xf]
      %v318 = vld [vmem:[%s313 + $0x10] sm:$0xf]
      %v319 = vld [vmem:[%s313 + $0x14] sm:$0xf]
      %v320 = vld [vmem:[%s313 + $0x18] sm:$0xf]
      %v321 = vld [vmem:[%s313 + $0x1c] sm:$0xf]
      %v322 = vld [vmem:[%s313 + $0x20] sm:$0xf]
      %v323 = vld [vmem:[%s313 + $0x24] sm:$0xf]
      %v324 = vld [vmem:[%s313 + $0x28] sm:$0xf]
      %v325 = vld [vmem:[%s313 + $0x2c] sm:$0xf]
      %v326 = vld [vmem:[%s313 + $0x30] sm:$0xf]
      %v327 = vld [vmem:[%s313 + $0x34] sm:$0xf]
      %v328 = vld [vmem:[%s313 + $0x38] sm:$0xf]
      %v329 = vld [vmem:[%s313 + $0x3c] sm:$0xf]
      %v330 = vld [vmem:[%s313 + $0x40] sm:$0xf]
      %v331 = vld [vmem:[%s313 + $0x44] sm:$0xf]
      %v332 = vld [vmem:[%s313 + $0x48] sm:$0xf]
      %v333 = vld [vmem:[%s313 + $0x4c] sm:$0xf]
      %v334 = vld [vmem:[%s313 + $0x50] sm:$0xf]
      %v335 = vld [vmem:[%s313 + $0x54] sm:$0xf]
      %v336 = vld [vmem:[%s313 + $0x58] sm:$0xf]
      %v337 = vld [vmem:[%s313 + $0x5c] sm:$0xf]
      %v338 = vld [vmem:[%s313 + $0x60] sm:$0xf]
      %v339 = vld [vmem:[%s313 + $0x64] sm:$0xf]
      %v340 = vld [vmem:[%s313 + $0x68] sm:$0xf]
      %v341 = vld [vmem:[%s313 + $0x6c] sm:$0xf]
      %v342 = vld [vmem:[%s313 + $0x70] sm:$0xf]
      %v343 = vld [vmem:[%s313 + $0x74] sm:$0xf]
      %v344 = vld [vmem:[%s313 + $0x78] sm:$0xf]
      %v345 = vld [vmem:[%s313 + $0x7c] sm:$0xf]
      %vm346 = vsmask.f32 3328
      %vm347 = vsmask.f32 7440
      %vm348 = vmor %vm346, %vm347
      %v350 = vshrl.u32 %v261, 16
      %v352 = vrot.slane %v350, 4
      %v353 = vshll.u32 %v261, 16
      %v355 = vrot.slane %v353, 5
      %v356 = vor.u32 %v352, %v355
      %v357 = vrot.slane %v356, 4
      %v359 = vshll.u32 %v262, 16
      %v361 = vrot.slane %v359, 5
      %v362 = vsel %vm348, %v357, %v361
      %v364 = vshrl.u32 %v263, 16
      %v366 = vrot.slane %v364, 4
      %v367 = vshll.u32 %v263, 16
      %v369 = vrot.slane %v367, 5
      %v370 = vor.u32 %v366, %v369
      %v371 = vrot.slane %v370, 4
      %v373 = vshll.u32 %v264, 16
      %v375 = vrot.slane %v373, 5
      %v376 = vsel %vm348, %v371, %v375
      %v378 = vshrl.u32 %v265, 16
      %v380 = vrot.slane %v378, 4
      %v381 = vshll.u32 %v265, 16
      %v383 = vrot.slane %v381, 5
      %v384 = vor.u32 %v380, %v383
      %v385 = vrot.slane %v384, 4
      %v387 = vshll.u32 %v266, 16
      %v389 = vrot.slane %v387, 5
      %v390 = vsel %vm348, %v385, %v389
      %v392 = vshrl.u32 %v267, 16
      %v394 = vrot.slane %v392, 4
      %v395 = vshll.u32 %v267, 16
      %v397 = vrot.slane %v395, 5
      %v398 = vor.u32 %v394, %v397
      %v399 = vrot.slane %v398, 4
      %v401 = vshll.u32 %v268, 16
      %v403 = vrot.slane %v401, 5
      %v404 = vsel %vm348, %v399, %v403
      %v406 = vshrl.u32 %v269, 16
      %v408 = vrot.slane %v406, 4
      %v409 = vshll.u32 %v269, 16
      %v411 = vrot.slane %v409, 5
      %v412 = vor.u32 %v408, %v411
      %v413 = vrot.slane %v412, 4
      %v415 = vshll.u32 %v270, 16
      %v417 = vrot.slane %v415, 5
      %v418 = vsel %vm348, %v413, %v417
      %v420 = vshrl.u32 %v271, 16
      %v422 = vrot.slane %v420, 4
      %v423 = vshll.u32 %v271, 16
      %v425 = vrot.slane %v423, 5
      %v426 = vor.u32 %v422, %v425
      %v427 = vrot.slane %v426, 4
      %v429 = vshll.u32 %v272, 16
      %v431 = vrot.slane %v429, 5
      %v432 = vsel %vm348, %v427, %v431
      %v434 = vshrl.u32 %v273, 16
      %v436 = vrot.slane %v434, 4
      %v437 = vshll.u32 %v273, 16
      %v439 = vrot.slane %v437, 5
      %v440 = vor.u32 %v436, %v439
      %v441 = vrot.slane %v440, 4
      %v443 = vshll.u32 %v274, 16
      %v445 = vrot.slane %v443, 5
      %v446 = vsel %vm348, %v441, %v445
      %v448 = vshrl.u32 %v275, 16
      %v450 = vrot.slane %v448, 4
      %v451 = vshll.u32 %v275, 16
      %v453 = vrot.slane %v451, 5
      %v454 = vor.u32 %v450, %v453
      %v455 = vrot.slane %v454, 4
      %v457 = vshll.u32 %v276, 16
      %v459 = vrot.slane %v457, 5
      %v460 = vsel %vm348, %v455, %v459
      %v461 = vunpack.c.l.b16 %v362
      %v462 = vunpack.c.h.b16 %v362
      %v463 = vunpack.c.l.b16 %v376
      %v464 = vunpack.c.h.b16 %v376
      %v465 = vunpack.c.l.b16 %v390
      %v466 = vunpack.c.h.b16 %v390
      %v467 = vunpack.c.l.b16 %v404
      %v468 = vunpack.c.h.b16 %v404
      %v469 = vunpack.c.l.b16 %v418
      %v470 = vunpack.c.h.b16 %v418
      %v471 = vunpack.c.l.b16 %v432
      %v472 = vunpack.c.h.b16 %v432
      %v473 = vunpack.c.l.b16 %v446
      %v474 = vunpack.c.h.b16 %v446
      %v475 = vunpack.c.l.b16 %v460
      %v476 = vunpack.c.h.b16 %v460
      %v477 = vpack.c.b16 %v463, %v461
      %v478 = vpack.c.b16 %v464, %v462
      %v479 = vpack.c.b16 %v467, %v465
      %v480 = vpack.c.b16 %v468, %v466
      %v481 = vpack.c.b16 %v471, %v469
      %v482 = vpack.c.b16 %v472, %v470
      %v483 = vpack.c.b16 %v475, %v473
      %v484 = vpack.c.b16 %v476, %v474
      %v525 = vunpack.c.l.b16 %v314
      %v526 = vunpack.c.l.b16 %v315
      %v527 = vunpack.c.l.b16 %v316
      %v528 = vunpack.c.l.b16 %v317
      %v529 = vunpack.c.l.b16 %v318
      %v530 = vunpack.c.l.b16 %v319
      %v531 = vunpack.c.l.b16 %v320
      %v532 = vunpack.c.l.b16 %v321
      %v533 = vunpack.c.l.b16 %v322
      %v534 = vunpack.c.l.b16 %v323
      %v535 = vunpack.c.l.b16 %v324
      %v536 = vunpack.c.l.b16 %v325
      %v537 = vunpack.c.l.b16 %v326
      %v538 = vunpack.c.l.b16 %v327
      %v539 = vunpack.c.l.b16 %v328
      %v540 = vunpack.c.l.b16 %v329
      %v541 = vunpack.c.l.b16 %v330
      %v542 = vunpack.c.l.b16 %v331
      %v543 = vunpack.c.l.b16 %v332
      %v544 = vunpack.c.l.b16 %v333
      %v545 = vunpack.c.l.b16 %v334
      %v546 = vunpack.c.l.b16 %v335
      %v547 = vunpack.c.l.b16 %v336
      %v548 = vunpack.c.l.b16 %v337
      %v549 = vunpack.c.l.b16 %v338
      %v550 = vunpack.c.l.b16 %v339
      %v551 = vunpack.c.l.b16 %v340
      %v552 = vunpack.c.l.b16 %v341
      %v553 = vunpack.c.l.b16 %v342
      %v554 = vunpack.c.l.b16 %v343
      %v555 = vunpack.c.l.b16 %v344
      %v556 = vunpack.c.l.b16 %v345
      %v557 = vpack.c.b16 %v526, %v525
      %v558 = vpack.c.b16 %v528, %v527
      %v559 = vpack.c.b16 %v530, %v529
      %v560 = vpack.c.b16 %v532, %v531
      %v561 = vpack.c.b16 %v534, %v533
      %v562 = vpack.c.b16 %v536, %v535
      %v563 = vpack.c.b16 %v538, %v537
      %v564 = vpack.c.b16 %v540, %v539
      %v565 = vpack.c.b16 %v542, %v541
      %v566 = vpack.c.b16 %v544, %v543
      %v567 = vpack.c.b16 %v546, %v545
      %v568 = vpack.c.b16 %v548, %v547
      %v569 = vpack.c.b16 %v550, %v549
      %v570 = vpack.c.b16 %v552, %v551
      %v571 = vpack.c.b16 %v554, %v553
      %v572 = vpack.c.b16 %v556, %v555
      %589 = vmatprep.subr.bf16.mxu0 0
      %590 = vmatpush1.bf16.msra.mxu0 %v557
      %591 = vmatprep.subr.bf16.mxu0 0
      %592 = vmatpush1.bf16.msra.mxu0 %v558
      %593 = vmatprep.subr.bf16.mxu0 0
      %594 = vmatpush1.bf16.msra.mxu0 %v559
      %595 = vmatprep.subr.bf16.mxu0 0
      %596 = vmatpush1.bf16.msra.mxu0 %v560
      %597 = vmatprep.subr.bf16.mxu0 0
      %598 = vmatpush1.bf16.msra.mxu0 %v561
      %599 = vmatprep.subr.bf16.mxu0 0
      %600 = vmatpush1.bf16.msra.mxu0 %v562
      %601 = vmatprep.subr.bf16.mxu0 0
      %602 = vmatpush1.bf16.msra.mxu0 %v563
      %603 = vmatprep.subr.bf16.mxu0 0
      %604 = vmatpush1.bf16.msra.mxu0 %v564
      %605 = vmatprep.subr.bf16.mxu0 0
      %606 = vmatpush1.bf16.msra.mxu0 %v565
      %607 = vmatprep.subr.bf16.mxu0 0
      %608 = vmatpush1.bf16.msra.mxu0 %v566
      %609 = vmatprep.subr.bf16.mxu0 0
      %610 = vmatpush1.bf16.msra.mxu0 %v567
      %611 = vmatprep.subr.bf16.mxu0 0
      %612 = vmatpush1.bf16.msra.mxu0 %v568
      %613 = vmatprep.subr.bf16.mxu0 0
      %614 = vmatpush1.bf16.msra.mxu0 %v569
      %615 = vmatprep.subr.bf16.mxu0 0
      %616 = vmatpush1.bf16.msra.mxu0 %v570
      %617 = vmatprep.subr.bf16.mxu0 0
      %618 = vmatpush1.bf16.msra.mxu0 %v571
      %619 = vmatprep.subr.bf16.mxu0 0
      %620 = vmatpush1.bf16.msra.mxu0 %v572
      %621 = vmatprep.mubr.bf16.mxu0 %v478
      %622 = vmatmul.mubr.bf16.gmra.mrb[0].mxu0 %v477
      %v623 = vpop.f32.mrb[0].mxu0
      %v624 = vadd.f32 0.0, %v623
      %v625 = vpop.f32.mrb[0].mxu0
      %v626 = vpop.f32.mrb[0].mxu0
      %v627 = vadd.f32 0.0, %v626
      %v628 = vpop.f32.mrb[0].mxu0
      %629 = vmatprep.mubr.bf16.mxu0 %v480
      %630 = vmatmul.mubr.bf16.gmra.mrb[0].mxu0 %v479
      %v631 = vpop.f32.mrb[0].mxu0
      %v632 = vadd.f32 0.0, %v631
      %v633 = vpop.f32.mrb[0].mxu0
      %v634 = vpop.f32.mrb[0].mxu0
      %v635 = vadd.f32 0.0, %v634
      %v636 = vpop.f32.mrb[0].mxu0
      %637 = vmatprep.mubr.bf16.mxu0 %v482
      %638 = vmatmul.mubr.bf16.gmra.mrb[0].mxu0 %v481
      %v639 = vpop.f32.mrb[0].mxu0
      %v640 = vadd.f32 0.0, %v639
      %v641 = vpop.f32.mrb[0].mxu0
      %v642 = vpop.f32.mrb[0].mxu0
      %v643 = vadd.f32 0.0, %v642
      %v644 = vpop.f32.mrb[0].mxu0
      %645 = vmatprep.mubr.bf16.mxu0 %v484
      %646 = vmatmul.mubr.bf16.gmra.mrb[0].mxu0 %v483
      %v647 = vpop.f32.mrb[0].mxu0
      %v648 = vadd.f32 0.0, %v647
      %v649 = vpop.f32.mrb[0].mxu0
      %v650 = vpop.f32.mrb[0].mxu0
      %v651 = vadd.f32 0.0, %v650
      %v652 = vpop.f32.mrb[0].mxu0
      %653 = vdwg.mxu0
      %v662 = vunpack.c.l.b16 %v261
      %v663 = vunpack.c.h.b16 %v261
      %v664 = vunpack.c.l.b16 %v263
      %v665 = vunpack.c.h.b16 %v263
      %v666 = vunpack.c.l.b16 %v265
      %v667 = vunpack.c.h.b16 %v265
      %v668 = vunpack.c.l.b16 %v267
      %v669 = vunpack.c.h.b16 %v267
      %v670 = vunpack.c.l.b16 %v269
      %v671 = vunpack.c.h.b16 %v269
      %v672 = vunpack.c.l.b16 %v271
      %v673 = vunpack.c.h.b16 %v271
      %v674 = vunpack.c.l.b16 %v273
      %v675 = vunpack.c.h.b16 %v273
      %v676 = vunpack.c.l.b16 %v275
      %v677 = vunpack.c.h.b16 %v275
      %v678 = vpack.c.b16 %v664, %v662
      %v679 = vpack.c.b16 %v665, %v663
      %v680 = vpack.c.b16 %v668, %v666
      %v681 = vpack.c.b16 %v669, %v667
      %v682 = vpack.c.b16 %v672, %v670
      %v683 = vpack.c.b16 %v673, %v671
      %v684 = vpack.c.b16 %v676, %v674
      %v685 = vpack.c.b16 %v677, %v675
      %v726 = vunpack.c.l.b16 %v281
      %v727 = vunpack.c.l.b16 %v282
      %v728 = vunpack.c.l.b16 %v283
      %v729 = vunpack.c.l.b16 %v284
      %v730 = vunpack.c.l.b16 %v285
      %v731 = vunpack.c.l.b16 %v286
      %v732 = vunpack.c.l.b16 %v287
      %v733 = vunpack.c.l.b16 %v288
      %v734 = vunpack.c.l.b16 %v289
      %v735 = vunpack.c.l.b16 %v290
      %v736 = vunpack.c.l.b16 %v291
      %v737 = vunpack.c.l.b16 %v292
      %v738 = vunpack.c.l.b16 %v293
      %v739 = vunpack.c.l.b16 %v294
      %v740 = vunpack.c.l.b16 %v295
      %v741 = vunpack.c.l.b16 %v296
      %v742 = vunpack.c.l.b16 %v297
      %v743 = vunpack.c.l.b16 %v298
      %v744 = vunpack.c.l.b16 %v299
      %v745 = vunpack.c.l.b16 %v300
      %v746 = vunpack.c.l.b16 %v301
      %v747 = vunpack.c.l.b16 %v302
      %v748 = vunpack.c.l.b16 %v303
      %v749 = vunpack.c.l.b16 %v304
      %v750 = vunpack.c.l.b16 %v305
      %v751 = vunpack.c.l.b16 %v306
      %v752 = vunpack.c.l.b16 %v307
      %v753 = vunpack.c.l.b16 %v308
      %v754 = vunpack.c.l.b16 %v309
      %v755 = vunpack.c.l.b16 %v310
      %v756 = vunpack.c.l.b16 %v311
      %v757 = vunpack.c.l.b16 %v312
      %v758 = vpack.c.b16 %v727, %v726
      %v759 = vpack.c.b16 %v729, %v728
      %v760 = vpack.c.b16 %v731, %v730
      %v761 = vpack.c.b16 %v733, %v732
      %v762 = vpack.c.b16 %v735, %v734
      %v763 = vpack.c.b16 %v737, %v736
      %v764 = vpack.c.b16 %v739, %v738
      %v765 = vpack.c.b16 %v741, %v740
      %v766 = vpack.c.b16 %v743, %v742
      %v767 = vpack.c.b16 %v745, %v744
      %v768 = vpack.c.b16 %v747, %v746
      %v769 = vpack.c.b16 %v749, %v748
      %v770 = vpack.c.b16 %v751, %v750
      %v771 = vpack.c.b16 %v753, %v752
      %v772 = vpack.c.b16 %v755, %v754
      %v773 = vpack.c.b16 %v757, %v756
      %790 = vmatprep.subr.bf16.mxu0 0
      %791 = vmatpush1.bf16.msra.mxu0 %v758
      %792 = vmatprep.subr.bf16.mxu0 0
      %793 = vmatpush1.bf16.msra.mxu0 %v759
      %794 = vmatprep.subr.bf16.mxu0 0
      %795 = vmatpush1.bf16.msra.mxu0 %v760
      %796 = vmatprep.subr.bf16.mxu0 0
      %797 = vmatpush1.bf16.msra.mxu0 %v761
      %798 = vmatprep.subr.bf16.mxu0 0
      %799 = vmatpush1.bf16.msra.mxu0 %v762
      %800 = vmatprep.subr.bf16.mxu0 0
      %801 = vmatpush1.bf16.msra.mxu0 %v763
      %802 = vmatprep.subr.bf16.mxu0 0
      %803 = vmatpush1.bf16.msra.mxu0 %v764
      %804 = vmatprep.subr.bf16.mxu0 0
      %805 = vmatpush1.bf16.msra.mxu0 %v765
      %806 = vmatprep.subr.bf16.mxu0 0
      %807 = vmatpush1.bf16.msra.mxu0 %v766
      %808 = vmatprep.subr.bf16.mxu0 0
      %809 = vmatpush1.bf16.msra.mxu0 %v767
      %810 = vmatprep.subr.bf16.mxu0 0
      %811 = vmatpush1.bf16.msra.mxu0 %v768
      %812 = vmatprep.subr.bf16.mxu0 0
      %813 = vmatpush1.bf16.msra.mxu0 %v769
      %814 = vmatprep.subr.bf16.mxu0 0
      %815 = vmatpush1.bf16.msra.mxu0 %v770
      %816 = vmatprep.subr.bf16.mxu0 0
      %817 = vmatpush1.bf16.msra.mxu0 %v771
      %818 = vmatprep.subr.bf16.mxu0 0
      %819 = vmatpush1.bf16.msra.mxu0 %v772
      %820 = vmatprep.subr.bf16.mxu0 0
      %821 = vmatpush1.bf16.msra.mxu0 %v773
      %822 = vmatprep.mubr.bf16.mxu0 %v679
      %823 = vmatmul.mubr.bf16.gmra.mrb[0].mxu0 %v678
      %v824 = vpop.f32.mrb[0].mxu0
      %v825 = vadd.f32 %v624, %v824
      %v826 = vpop.f32.mrb[0].mxu0
      %v827 = vpop.f32.mrb[0].mxu0
      %v828 = vadd.f32 %v627, %v827
      %v829 = vpop.f32.mrb[0].mxu0
      %830 = vmatprep.mubr.bf16.mxu0 %v681
      %831 = vmatmul.mubr.bf16.gmra.mrb[0].mxu0 %v680
      %v832 = vpop.f32.mrb[0].mxu0
      %v833 = vadd.f32 %v632, %v832
      %v834 = vpop.f32.mrb[0].mxu0
      %v835 = vpop.f32.mrb[0].mxu0
      %v836 = vadd.f32 %v635, %v835
      %v837 = vpop.f32.mrb[0].mxu0
      %838 = vmatprep.mubr.bf16.mxu0 %v683
      %839 = vmatmul.mubr.bf16.gmra.mrb[0].mxu0 %v682
      %v840 = vpop.f32.mrb[0].mxu0
      %v841 = vadd.f32 %v640, %v840
      %v842 = vpop.f32.mrb[0].mxu0
      %v843 = vpop.f32.mrb[0].mxu0
      %v844 = vadd.f32 %v643, %v843
      %v845 = vpop.f32.mrb[0].mxu0
      %846 = vmatprep.mubr.bf16.mxu0 %v685
      %847 = vmatmul.mubr.bf16.gmra.mrb[0].mxu0 %v684
      %v848 = vpop.f32.mrb[0].mxu0
      %v849 = vadd.f32 %v648, %v848
      %v850 = vpop.f32.mrb[0].mxu0
      %v851 = vpop.f32.mrb[0].mxu0
      %v852 = vadd.f32 %v651, %v851
      %v853 = vpop.f32.mrb[0].mxu0
      %854 = vdwg.mxu0
      %s855 = scalar_lea.vmem %s241, 256
      %v856 = vld [vmem:[%s855] sm:$0xf]
      %v857 = vld [vmem:[%s855 + $0x4] sm:$0xf]
      %v858 = vld [vmem:[%s855 + $0x8] sm:$0xf]
      %v859 = vld [vmem:[%s855 + $0xc] sm:$0xf]
      %v860 = vld [vmem:[%s855 + $0x10] sm:$0xf]
      %v861 = vld [vmem:[%s855 + $0x14] sm:$0xf]
      %v862 = vld [vmem:[%s855 + $0x18] sm:$0xf]
      %v863 = vld [vmem:[%s855 + $0x1c] sm:$0xf]
      %v864 = vld [vmem:[%s855 + $0x20] sm:$0xf]
      %v865 = vld [vmem:[%s855 + $0x24] sm:$0xf]
      %v866 = vld [vmem:[%s855 + $0x28] sm:$0xf]
      %v867 = vld [vmem:[%s855 + $0x2c] sm:$0xf]
      %v868 = vld [vmem:[%s855 + $0x30] sm:$0xf]
      %v869 = vld [vmem:[%s855 + $0x34] sm:$0xf]
      %v870 = vld [vmem:[%s855 + $0x38] sm:$0xf]
      %v871 = vld [vmem:[%s855 + $0x3c] sm:$0xf]
      %v872 = vld [vmem:[%s855 + $0x40] sm:$0xf]
      %v873 = vld [vmem:[%s855 + $0x44] sm:$0xf]
      %v874 = vld [vmem:[%s855 + $0x48] sm:$0xf]
      %v875 = vld [vmem:[%s855 + $0x4c] sm:$0xf]
      %v876 = vld [vmem:[%s855 + $0x50] sm:$0xf]
      %v877 = vld [vmem:[%s855 + $0x54] sm:$0xf]
      %v878 = vld [vmem:[%s855 + $0x58] sm:$0xf]
      %v879 = vld [vmem:[%s855 + $0x5c] sm:$0xf]
      %v880 = vld [vmem:[%s855 + $0x60] sm:$0xf]
      %v881 = vld [vmem:[%s855 + $0x64] sm:$0xf]
      %v882 = vld [vmem:[%s855 + $0x68] sm:$0xf]
      %v883 = vld [vmem:[%s855 + $0x6c] sm:$0xf]
      %v884 = vld [vmem:[%s855 + $0x70] sm:$0xf]
      %v885 = vld [vmem:[%s855 + $0x74] sm:$0xf]
      %v886 = vld [vmem:[%s855 + $0x78] sm:$0xf]
      %v887 = vld [vmem:[%s855 + $0x7c] sm:$0xf]
      %vm896 = vcmask 1042432
      %vm897 = vcmask 1046532
      %vm898 = vmor %vm896, %vm897
      %v899 = vrot.slane %v261, 5
      %v900 = vrot.slane %v899, 4
      %v901 = vrot.slane %v262, 5
      %v902 = vsel %vm898, %v900, %v901
      %v903 = vrot.slane %v263, 5
      %v904 = vrot.slane %v903, 4
      %v905 = vrot.slane %v264, 5
      %v906 = vsel %vm898, %v904, %v905
      %v907 = vrot.slane %v265, 5
      %v908 = vrot.slane %v907, 4
      %v909 = vrot.slane %v266, 5
      %v910 = vsel %vm898, %v908, %v909
      %v911 = vrot.slane %v267, 5
      %v912 = vrot.slane %v911, 4
      %v913 = vrot.slane %v268, 5
      %v914 = vsel %vm898, %v912, %v913
      %v915 = vrot.slane %v269, 5
      %v916 = vrot.slane %v915, 4
      %v917 = vrot.slane %v270, 5
      %v918 = vsel %vm898, %v916, %v917
      %v919 = vrot.slane %v271, 5
      %v920 = vrot.slane %v919, 4
      %v921 = vrot.slane %v272, 5
      %v922 = vsel %vm898, %v920, %v921
      %v923 = vrot.slane %v273, 5
      %v924 = vrot.slane %v923, 4
      %v925 = vrot.slane %v274, 5
      %v926 = vsel %vm898, %v924, %v925
      %v927 = vrot.slane %v275, 5
      %v928 = vrot.slane %v927, 4
      %v929 = vrot.slane %v276, 5
      %v930 = vsel %vm898, %v928, %v929
      %v931 = vunpack.c.l.b16 %v902
      %v932 = vunpack.c.h.b16 %v902
      %v933 = vunpack.c.l.b16 %v906
      %v934 = vunpack.c.h.b16 %v906
      %v935 = vunpack.c.l.b16 %v910
      %v936 = vunpack.c.h.b16 %v910
      %v937 = vunpack.c.l.b16 %v914
      %v938 = vunpack.c.h.b16 %v914
      %v939 = vunpack.c.l.b16 %v918
      %v940 = vunpack.c.h.b16 %v918
      %v941 = vunpack.c.l.b16 %v922
      %v942 = vunpack.c.h.b16 %v922
      %v943 = vunpack.c.l.b16 %v926
      %v944 = vunpack.c.h.b16 %v926
      %v945 = vunpack.c.l.b16 %v930
      %v946 = vunpack.c.h.b16 %v930
      %v947 = vpack.c.b16 %v933, %v931
      %v948 = vpack.c.b16 %v934, %v932
      %v949 = vpack.c.b16 %v937, %v935
      %v950 = vpack.c.b16 %v938, %v936
      %v951 = vpack.c.b16 %v941, %v939
      %v952 = vpack.c.b16 %v942, %v940
      %v953 = vpack.c.b16 %v945, %v943
      %v954 = vpack.c.b16 %v946, %v944
      %v995 = vunpack.c.l.b16 %v856
      %v996 = vunpack.c.l.b16 %v857
      %v997 = vunpack.c.l.b16 %v858
      %v998 = vunpack.c.l.b16 %v859
      %v999 = vunpack.c.l.b16 %v860
      %v1000 = vunpack.c.l.b16 %v861
      %v1001 = vunpack.c.l.b16 %v862
      %v1002 = vunpack.c.l.b16 %v863
      %v1003 = vunpack.c.l.b16 %v864
      %v1004 = vunpack.c.l.b16 %v865
      %v1005 = vunpack.c.l.b16 %v866
      %v1006 = vunpack.c.l.b16 %v867
      %v1007 = vunpack.c.l.b16 %v868
      %v1008 = vunpack.c.l.b16 %v869
      %v1009 = vunpack.c.l.b16 %v870
      %v1010 = vunpack.c.l.b16 %v871
      %v1011 = vunpack.c.l.b16 %v872
      %v1012 = vunpack.c.l.b16 %v873
      %v1013 = vunpack.c.l.b16 %v874
      %v1014 = vunpack.c.l.b16 %v875
      %v1015 = vunpack.c.l.b16 %v876
      %v1016 = vunpack.c.l.b16 %v877
      %v1017 = vunpack.c.l.b16 %v878
      %v1018 = vunpack.c.l.b16 %v879
      %v1019 = vunpack.c.l.b16 %v880
      %v1020 = vunpack.c.l.b16 %v881
      %v1021 = vunpack.c.l.b16 %v882
      %v1022 = vunpack.c.l.b16 %v883
      %v1023 = vunpack.c.l.b16 %v884
      %v1024 = vunpack.c.l.b16 %v885
      %v1025 = vunpack.c.l.b16 %v886
      %v1026 = vunpack.c.l.b16 %v887
      %v1027 = vpack.c.b16 %v996, %v995
      %v1028 = vpack.c.b16 %v998, %v997
      %v1029 = vpack.c.b16 %v1000, %v999
      %v1030 = vpack.c.b16 %v1002, %v1001
      %v1031 = vpack.c.b16 %v1004, %v1003
      %v1032 = vpack.c.b16 %v1006, %v1005
      %v1033 = vpack.c.b16 %v1008, %v1007
      %v1034 = vpack.c.b16 %v1010, %v1009
      %v1035 = vpack.c.b16 %v1012, %v1011
      %v1036 = vpack.c.b16 %v1014, %v1013
      %v1037 = vpack.c.b16 %v1016, %v1015
      %v1038 = vpack.c.b16 %v1018, %v1017
      %v1039 = vpack.c.b16 %v1020, %v1019
      %v1040 = vpack.c.b16 %v1022, %v1021
      %v1041 = vpack.c.b16 %v1024, %v1023
      %v1042 = vpack.c.b16 %v1026, %v1025
      %1059 = vmatprep.subr.bf16.mxu0 0
      %1060 = vmatpush1.bf16.msra.mxu0 %v1027
      %1061 = vmatprep.subr.bf16.mxu0 0
      %1062 = vmatpush1.bf16.msra.mxu0 %v1028
      %1063 = vmatprep.subr.bf16.mxu0 0
      %1064 = vmatpush1.bf16.msra.mxu0 %v1029
      %1065 = vmatprep.subr.bf16.mxu0 0
      %1066 = vmatpush1.bf16.msra.mxu0 %v1030
      %1067 = vmatprep.subr.bf16.mxu0 0
      %1068 = vmatpush1.bf16.msra.mxu0 %v1031
      %1069 = vmatprep.subr.bf16.mxu0 0
      %1070 = vmatpush1.bf16.msra.mxu0 %v1032
      %1071 = vmatprep.subr.bf16.mxu0 0
      %1072 = vmatpush1.bf16.msra.mxu0 %v1033
      %1073 = vmatprep.subr.bf16.mxu0 0
      %1074 = vmatpush1.bf16.msra.mxu0 %v1034
      %1075 = vmatprep.subr.bf16.mxu0 0
      %1076 = vmatpush1.bf16.msra.mxu0 %v1035
      %1077 = vmatprep.subr.bf16.mxu0 0
      %1078 = vmatpush1.bf16.msra.mxu0 %v1036
      %1079 = vmatprep.subr.bf16.mxu0 0
      %1080 = vmatpush1.bf16.msra.mxu0 %v1037
      %1081 = vmatprep.subr.bf16.mxu0 0
      %1082 = vmatpush1.bf16.msra.mxu0 %v1038
      %1083 = vmatprep.subr.bf16.mxu0 0
      %1084 = vmatpush1.bf16.msra.mxu0 %v1039
      %1085 = vmatprep.subr.bf16.mxu0 0
      %1086 = vmatpush1.bf16.msra.mxu0 %v1040
      %1087 = vmatprep.subr.bf16.mxu0 0
      %1088 = vmatpush1.bf16.msra.mxu0 %v1041
      %1089 = vmatprep.subr.bf16.mxu0 0
      %1090 = vmatpush1.bf16.msra.mxu0 %v1042
      %1091 = vmatprep.mubr.bf16.mxu0 %v948
      %1092 = vmatmul.mubr.bf16.gmra.mrb[0].mxu0 %v947
      %v1093 = vpop.f32.mrb[0].mxu0
      %v1094 = vadd.f32 0.0, %v1093
      %v1095 = vpop.f32.mrb[0].mxu0
      %v1096 = vpop.f32.mrb[0].mxu0
      %v1097 = vadd.f32 0.0, %v1096
      %v1098 = vpop.f32.mrb[0].mxu0
      %1099 = vmatprep.mubr.bf16.mxu0 %v950
      %1100 = vmatmul.mubr.bf16.gmra.mrb[0].mxu0 %v949
      %v1101 = vpop.f32.mrb[0].mxu0
      %v1102 = vadd.f32 0.0, %v1101
      %v1103 = vpop.f32.mrb[0].mxu0
      %v1104 = vpop.f32.mrb[0].mxu0
      %v1105 = vadd.f32 0.0, %v1104
      %v1106 = vpop.f32.mrb[0].mxu0
      %1107 = vmatprep.mubr.bf16.mxu0 %v952
      %1108 = vmatmul.mubr.bf16.gmra.mrb[0].mxu0 %v951
      %v1109 = vpop.f32.mrb[0].mxu0
      %v1110 = vadd.f32 0.0, %v1109
      %v1111 = vpop.f32.mrb[0].mxu0
      %v1112 = vpop.f32.mrb[0].mxu0
      %v1113 = vadd.f32 0.0, %v1112
      %v1114 = vpop.f32.mrb[0].mxu0
      %1115 = vmatprep.mubr.bf16.mxu0 %v954
      %1116 = vmatmul.mubr.bf16.gmra.mrb[0].mxu0 %v953
      %v1117 = vpop.f32.mrb[0].mxu0
      %v1118 = vadd.f32 0.0, %v1117
      %v1119 = vpop.f32.mrb[0].mxu0
      %v1120 = vpop.f32.mrb[0].mxu0
      %v1121 = vadd.f32 0.0, %v1120
      %v1122 = vpop.f32.mrb[0].mxu0
      %1123 = vdwg.mxu0
      %v1124 = vadd.f32 %v825, %v1094
      %v1125 = vadd.f32 %v828, %v1097
      %v1126 = vadd.f32 %v833, %v1102
      %v1127 = vadd.f32 %v836, %v1105
      %v1128 = vadd.f32 %v841, %v1110
      %v1129 = vadd.f32 %v844, %v1113
      %v1130 = vadd.f32 %v849, %v1118
      %v1131 = vadd.f32 %v852, %v1121
      %s1132 = scalar_lea.vmem %s241, 384
      %v1133 = vld [vmem:[%s1132] sm:$0xf]
      %v1134 = vld [vmem:[%s1132 + $0x4] sm:$0xf]
      %v1135 = vld [vmem:[%s1132 + $0x8] sm:$0xf]
      %v1136 = vld [vmem:[%s1132 + $0xc] sm:$0xf]
      %v1137 = vld [vmem:[%s1132 + $0x10] sm:$0xf]
      %v1138 = vld [vmem:[%s1132 + $0x14] sm:$0xf]
      %v1139 = vld [vmem:[%s1132 + $0x18] sm:$0xf]
      %v1140 = vld [vmem:[%s1132 + $0x1c] sm:$0xf]
      %v1141 = vld [vmem:[%s1132 + $0x20] sm:$0xf]
      %v1142 = vld [vmem:[%s1132 + $0x24] sm:$0xf]
      %v1143 = vld [vmem:[%s1132 + $0x28] sm:$0xf]
      %v1144 = vld [vmem:[%s1132 + $0x2c] sm:$0xf]
      %v1145 = vld [vmem:[%s1132 + $0x30] sm:$0xf]
      %v1146 = vld [vmem:[%s1132 + $0x34] sm:$0xf]
      %v1147 = vld [vmem:[%s1132 + $0x38] sm:$0xf]
      %v1148 = vld [vmem:[%s1132 + $0x3c] sm:$0xf]
      %v1149 = vld [vmem:[%s1132 + $0x40] sm:$0xf]
      %v1150 = vld [vmem:[%s1132 + $0x44] sm:$0xf]
      %v1151 = vld [vmem:[%s1132 + $0x48] sm:$0xf]
      %v1152 = vld [vmem:[%s1132 + $0x4c] sm:$0xf]
      %v1153 = vld [vmem:[%s1132 + $0x50] sm:$0xf]
      %v1154 = vld [vmem:[%s1132 + $0x54] sm:$0xf]
      %v1155 = vld [vmem:[%s1132 + $0x58] sm:$0xf]
      %v1156 = vld [vmem:[%s1132 + $0x5c] sm:$0xf]
      %v1157 = vld [vmem:[%s1132 + $0x60] sm:$0xf]
      %v1158 = vld [vmem:[%s1132 + $0x64] sm:$0xf]
      %v1159 = vld [vmem:[%s1132 + $0x68] sm:$0xf]
      %v1160 = vld [vmem:[%s1132 + $0x6c] sm:$0xf]
      %v1161 = vld [vmem:[%s1132 + $0x70] sm:$0xf]
      %v1162 = vld [vmem:[%s1132 + $0x74] sm:$0xf]
      %v1163 = vld [vmem:[%s1132 + $0x78] sm:$0xf]
      %v1164 = vld [vmem:[%s1132 + $0x7c] sm:$0xf]
      %v1166 = vunpack.c.l.b16 %v277
      %v1167 = vunpack.c.h.b16 %v277
      %v1168 = vpack.c.b16 %v666, %v664
      %v1169 = vpack.c.b16 %v667, %v665
      %v1170 = vpack.c.b16 %v670, %v668
      %v1171 = vpack.c.b16 %v671, %v669
      %v1172 = vpack.c.b16 %v674, %v672
      %v1173 = vpack.c.b16 %v675, %v673
      %v1174 = vpack.c.b16 %v1166, %v676
      %v1175 = vpack.c.b16 %v1167, %v677
      %v1216 = vunpack.c.l.b16 %v1133
      %v1217 = vunpack.c.l.b16 %v1134
      %v1218 = vunpack.c.l.b16 %v1135
      %v1219 = vunpack.c.l.b16 %v1136
      %v1220 = vunpack.c.l.b16 %v1137
      %v1221 = vunpack.c.l.b16 %v1138
      %v1222 = vunpack.c.l.b16 %v1139
      %v1223 = vunpack.c.l.b16 %v1140
      %v1224 = vunpack.c.l.b16 %v1141
      %v1225 = vunpack.c.l.b16 %v1142
      %v1226 = vunpack.c.l.b16 %v1143
      %v1227 = vunpack.c.l.b16 %v1144
      %v1228 = vunpack.c.l.b16 %v1145
      %v1229 = vunpack.c.l.b16 %v1146
      %v1230 = vunpack.c.l.b16 %v1147
      %v1231 = vunpack.c.l.b16 %v1148
      %v1232 = vunpack.c.l.b16 %v1149
      %v1233 = vunpack.c.l.b16 %v1150
      %v1234 = vunpack.c.l.b16 %v1151
      %v1235 = vunpack.c.l.b16 %v1152
      %v1236 = vunpack.c.l.b16 %v1153
      %v1237 = vunpack.c.l.b16 %v1154
      %v1238 = vunpack.c.l.b16 %v1155
      %v1239 = vunpack.c.l.b16 %v1156
      %v1240 = vunpack.c.l.b16 %v1157
      %v1241 = vunpack.c.l.b16 %v1158
      %v1242 = vunpack.c.l.b16 %v1159
      %v1243 = vunpack.c.l.b16 %v1160
      %v1244 = vunpack.c.l.b16 %v1161
      %v1245 = vunpack.c.l.b16 %v1162
      %v1246 = vunpack.c.l.b16 %v1163
      %v1247 = vunpack.c.l.b16 %v1164
      %v1248 = vpack.c.b16 %v1217, %v1216
      %v1249 = vpack.c.b16 %v1219, %v1218
      %v1250 = vpack.c.b16 %v1221, %v1220
      %v1251 = vpack.c.b16 %v1223, %v1222
      %v1252 = vpack.c.b16 %v1225, %v1224
      %v1253 = vpack.c.b16 %v1227, %v1226
      %v1254 = vpack.c.b16 %v1229, %v1228
      %v1255 = vpack.c.b16 %v1231, %v1230
      %v1256 = vpack.c.b16 %v1233, %v1232
      %v1257 = vpack.c.b16 %v1235, %v1234
      %v1258 = vpack.c.b16 %v1237, %v1236
      %v1259 = vpack.c.b16 %v1239, %v1238
      %v1260 = vpack.c.b16 %v1241, %v1240
      %v1261 = vpack.c.b16 %v1243, %v1242
      %v1262 = vpack.c.b16 %v1245, %v1244
      %v1263 = vpack.c.b16 %v1247, %v1246
      %1280 = vmatprep.subr.bf16.mxu0 0
      %1281 = vmatpush1.bf16.msra.mxu0 %v1248
      %1282 = vmatprep.subr.bf16.mxu0 0
      %1283 = vmatpush1.bf16.msra.mxu0 %v1249
      %1284 = vmatprep.subr.bf16.mxu0 0
      %1285 = vmatpush1.bf16.msra.mxu0 %v1250
      %1286 = vmatprep.subr.bf16.mxu0 0
      %1287 = vmatpush1.bf16.msra.mxu0 %v1251
      %1288 = vmatprep.subr.bf16.mxu0 0
      %1289 = vmatpush1.bf16.msra.mxu0 %v1252
      %1290 = vmatprep.subr.bf16.mxu0 0
      %1291 = vmatpush1.bf16.msra.mxu0 %v1253
      %1292 = vmatprep.subr.bf16.mxu0 0
      %1293 = vmatpush1.bf16.msra.mxu0 %v1254
      %1294 = vmatprep.subr.bf16.mxu0 0
      %1295 = vmatpush1.bf16.msra.mxu0 %v1255
      %1296 = vmatprep.subr.bf16.mxu0 0
      %1297 = vmatpush1.bf16.msra.mxu0 %v1256
      %1298 = vmatprep.subr.bf16.mxu0 0
      %1299 = vmatpush1.bf16.msra.mxu0 %v1257
      %1300 = vmatprep.subr.bf16.mxu0 0
      %1301 = vmatpush1.bf16.msra.mxu0 %v1258
      %1302 = vmatprep.subr.bf16.mxu0 0
      %1303 = vmatpush1.bf16.msra.mxu0 %v1259
      %1304 = vmatprep.subr.bf16.mxu0 0
      %1305 = vmatpush1.bf16.msra.mxu0 %v1260
      %1306 = vmatprep.subr.bf16.mxu0 0
      %1307 = vmatpush1.bf16.msra.mxu0 %v1261
      %1308 = vmatprep.subr.bf16.mxu0 0
      %1309 = vmatpush1.bf16.msra.mxu0 %v1262
      %1310 = vmatprep.subr.bf16.mxu0 0
      %1311 = vmatpush1.bf16.msra.mxu0 %v1263
      %1312 = vmatprep.mubr.bf16.mxu0 %v1169
      %1313 = vmatmul.mubr.bf16.gmra.mrb[0].mxu0 %v1168
      %v1314 = vpop.f32.mrb[0].mxu0
      %v1315 = vadd.f32 0.0, %v1314
      %v1316 = vpop.f32.mrb[0].mxu0
      %v1317 = vpop.f32.mrb[0].mxu0
      %v1318 = vadd.f32 0.0, %v1317
      %v1319 = vpop.f32.mrb[0].mxu0
      %1320 = vmatprep.mubr.bf16.mxu0 %v1171
      %1321 = vmatmul.mubr.bf16.gmra.mrb[0].mxu0 %v1170
      %v1322 = vpop.f32.mrb[0].mxu0
      %v1323 = vadd.f32 0.0, %v1322
      %v1324 = vpop.f32.mrb[0].mxu0
      %v1325 = vpop.f32.mrb[0].mxu0
      %v1326 = vadd.f32 0.0, %v1325
      %v1327 = vpop.f32.mrb[0].mxu0
      %1328 = vmatprep.mubr.bf16.mxu0 %v1173
      %1329 = vmatmul.mubr.bf16.gmra.mrb[0].mxu0 %v1172
      %v1330 = vpop.f32.mrb[0].mxu0
      %v1331 = vadd.f32 0.0, %v1330
      %v1332 = vpop.f32.mrb[0].mxu0
      %v1333 = vpop.f32.mrb[0].mxu0
      %v1334 = vadd.f32 0.0, %v1333
      %v1335 = vpop.f32.mrb[0].mxu0
      %1336 = vmatprep.mubr.bf16.mxu0 %v1175
      %1337 = vmatmul.mubr.bf16.gmra.mrb[0].mxu0 %v1174
      %v1338 = vpop.f32.mrb[0].mxu0
      %v1339 = vadd.f32 0.0, %v1338
      %v1340 = vpop.f32.mrb[0].mxu0
      %v1341 = vpop.f32.mrb[0].mxu0
      %v1342 = vadd.f32 0.0, %v1341
      %v1343 = vpop.f32.mrb[0].mxu0
      %1344 = vdwg.mxu0
      %v1345 = vadd.f32 %v1124, %v1315
      %v1346 = vadd.f32 %v1125, %v1318
      %v1347 = vadd.f32 %v1126, %v1323
      %v1348 = vadd.f32 %v1127, %v1326
      %v1349 = vadd.f32 %v1128, %v1331
      %v1350 = vadd.f32 %v1129, %v1334
      %v1351 = vadd.f32 %v1130, %v1339
      %v1352 = vadd.f32 %v1131, %v1342
      %s1353 = scalar_lea.vmem %s241, 512
      %v1354 = vld [vmem:[%s1353] sm:$0xf]
      %v1355 = vld [vmem:[%s1353 + $0x4] sm:$0xf]
      %v1356 = vld [vmem:[%s1353 + $0x8] sm:$0xf]
      %v1357 = vld [vmem:[%s1353 + $0xc] sm:$0xf]
      %v1358 = vld [vmem:[%s1353 + $0x10] sm:$0xf]
      %v1359 = vld [vmem:[%s1353 + $0x14] sm:$0xf]
      %v1360 = vld [vmem:[%s1353 + $0x18] sm:$0xf]
      %v1361 = vld [vmem:[%s1353 + $0x1c] sm:$0xf]
      %v1362 = vld [vmem:[%s1353 + $0x20] sm:$0xf]
      %v1363 = vld [vmem:[%s1353 + $0x24] sm:$0xf]
      %v1364 = vld [vmem:[%s1353 + $0x28] sm:$0xf]
      %v1365 = vld [vmem:[%s1353 + $0x2c] sm:$0xf]
      %v1366 = vld [vmem:[%s1353 + $0x30] sm:$0xf]
      %v1367 = vld [vmem:[%s1353 + $0x34] sm:$0xf]
      %v1368 = vld [vmem:[%s1353 + $0x38] sm:$0xf]
      %v1369 = vld [vmem:[%s1353 + $0x3c] sm:$0xf]
      %v1370 = vld [vmem:[%s1353 + $0x40] sm:$0xf]
      %v1371 = vld [vmem:[%s1353 + $0x44] sm:$0xf]
      %v1372 = vld [vmem:[%s1353 + $0x48] sm:$0xf]
      %v1373 = vld [vmem:[%s1353 + $0x4c] sm:$0xf]
      %v1374 = vld [vmem:[%s1353 + $0x50] sm:$0xf]
      %v1375 = vld [vmem:[%s1353 + $0x54] sm:$0xf]
      %v1376 = vld [vmem:[%s1353 + $0x58] sm:$0xf]
      %v1377 = vld [vmem:[%s1353 + $0x5c] sm:$0xf]
      %v1378 = vld [vmem:[%s1353 + $0x60] sm:$0xf]
      %v1379 = vld [vmem:[%s1353 + $0x64] sm:$0xf]
      %v1380 = vld [vmem:[%s1353 + $0x68] sm:$0xf]
      %v1381 = vld [vmem:[%s1353 + $0x6c] sm:$0xf]
      %v1382 = vld [vmem:[%s1353 + $0x70] sm:$0xf]
      %v1383 = vld [vmem:[%s1353 + $0x74] sm:$0xf]
      %v1384 = vld [vmem:[%s1353 + $0x78] sm:$0xf]
      %v1385 = vld [vmem:[%s1353 + $0x7c] sm:$0xf]
      %v1387 = vshrl.u32 %v277, 16
      %v1389 = vrot.slane %v1387, 4
      %v1390 = vshll.u32 %v277, 16
      %v1392 = vrot.slane %v1390, 5
      %v1393 = vor.u32 %v1389, %v1392
      %v1394 = vrot.slane %v1393, 4
      %v1396 = vshll.u32 %v278, 16
      %v1398 = vrot.slane %v1396, 5
      %v1399 = vsel %vm348, %v1394, %v1398
      %v1400 = vunpack.c.l.b16 %v1399
      %v1401 = vunpack.c.h.b16 %v1399
      %v1402 = vpack.c.b16 %v465, %v463
      %v1403 = vpack.c.b16 %v466, %v464
      %v1404 = vpack.c.b16 %v469, %v467
      %v1405 = vpack.c.b16 %v470, %v468
      %v1406 = vpack.c.b16 %v473, %v471
      %v1407 = vpack.c.b16 %v474, %v472
      %v1408 = vpack.c.b16 %v1400, %v475
      %v1409 = vpack.c.b16 %v1401, %v476
      %v1450 = vunpack.c.l.b16 %v1354
      %v1451 = vunpack.c.l.b16 %v1355
      %v1452 = vunpack.c.l.b16 %v1356
      %v1453 = vunpack.c.l.b16 %v1357
      %v1454 = vunpack.c.l.b16 %v1358
      %v1455 = vunpack.c.l.b16 %v1359
      %v1456 = vunpack.c.l.b16 %v1360
      %v1457 = vunpack.c.l.b16 %v1361
      %v1458 = vunpack.c.l.b16 %v1362
      %v1459 = vunpack.c.l.b16 %v1363
      %v1460 = vunpack.c.l.b16 %v1364
      %v1461 = vunpack.c.l.b16 %v1365
      %v1462 = vunpack.c.l.b16 %v1366
      %v1463 = vunpack.c.l.b16 %v1367
      %v1464 = vunpack.c.l.b16 %v1368
      %v1465 = vunpack.c.l.b16 %v1369
      %v1466 = vunpack.c.l.b16 %v1370
      %v1467 = vunpack.c.l.b16 %v1371
      %v1468 = vunpack.c.l.b16 %v1372
      %v1469 = vunpack.c.l.b16 %v1373
      %v1470 = vunpack.c.l.b16 %v1374
      %v1471 = vunpack.c.l.b16 %v1375
      %v1472 = vunpack.c.l.b16 %v1376
      %v1473 = vunpack.c.l.b16 %v1377
      %v1474 = vunpack.c.l.b16 %v1378
      %v1475 = vunpack.c.l.b16 %v1379
      %v1476 = vunpack.c.l.b16 %v1380
      %v1477 = vunpack.c.l.b16 %v1381
      %v1478 = vunpack.c.l.b16 %v1382
      %v1479 = vunpack.c.l.b16 %v1383
      %v1480 = vunpack.c.l.b16 %v1384
      %v1481 = vunpack.c.l.b16 %v1385
      %v1482 = vpack.c.b16 %v1451, %v1450
      %v1483 = vpack.c.b16 %v1453, %v1452
      %v1484 = vpack.c.b16 %v1455, %v1454
      %v1485 = vpack.c.b16 %v1457, %v1456
      %v1486 = vpack.c.b16 %v1459, %v1458
      %v1487 = vpack.c.b16 %v1461, %v1460
      %v1488 = vpack.c.b16 %v1463, %v1462
      %v1489 = vpack.c.b16 %v1465, %v1464
      %v1490 = vpack.c.b16 %v1467, %v1466
      %v1491 = vpack.c.b16 %v1469, %v1468
      %v1492 = vpack.c.b16 %v1471, %v1470
      %v1493 = vpack.c.b16 %v1473, %v1472
      %v1494 = vpack.c.b16 %v1475, %v1474
      %v1495 = vpack.c.b16 %v1477, %v1476
      %v1496 = vpack.c.b16 %v1479, %v1478
      %v1497 = vpack.c.b16 %v1481, %v1480
      %1514 = vmatprep.subr.bf16.mxu0 0
      %1515 = vmatpush1.bf16.msra.mxu0 %v1482
      %1516 = vmatprep.subr.bf16.mxu0 0
      %1517 = vmatpush1.bf16.msra.mxu0 %v1483
      %1518 = vmatprep.subr.bf16.mxu0 0
      %1519 = vmatpush1.bf16.msra.mxu0 %v1484
      %1520 = vmatprep.subr.bf16.mxu0 0
      %1521 = vmatpush1.bf16.msra.mxu0 %v1485
      %1522 = vmatprep.subr.bf16.mxu0 0
      %1523 = vmatpush1.bf16.msra.mxu0 %v1486
      %1524 = vmatprep.subr.bf16.mxu0 0
      %1525 = vmatpush1.bf16.msra.mxu0 %v1487
      %1526 = vmatprep.subr.bf16.mxu0 0
      %1527 = vmatpush1.bf16.msra.mxu0 %v1488
      %1528 = vmatprep.subr.bf16.mxu0 0
      %1529 = vmatpush1.bf16.msra.mxu0 %v1489
      %1530 = vmatprep.subr.bf16.mxu0 0
      %1531 = vmatpush1.bf16.msra.mxu0 %v1490
      %1532 = vmatprep.subr.bf16.mxu0 0
      %1533 = vmatpush1.bf16.msra.mxu0 %v1491
      %1534 = vmatprep.subr.bf16.mxu0 0
      %1535 = vmatpush1.bf16.msra.mxu0 %v1492
      %1536 = vmatprep.subr.bf16.mxu0 0
      %1537 = vmatpush1.bf16.msra.mxu0 %v1493
      %1538 = vmatprep.subr.bf16.mxu0 0
      %1539 = vmatpush1.bf16.msra.mxu0 %v1494
      %1540 = vmatprep.subr.bf16.mxu0 0
      %1541 = vmatpush1.bf16.msra.mxu0 %v1495
      %1542 = vmatprep.subr.bf16.mxu0 0
      %1543 = vmatpush1.bf16.msra.mxu0 %v1496
      %1544 = vmatprep.subr.bf16.mxu0 0
      %1545 = vmatpush1.bf16.msra.mxu0 %v1497
      %1546 = vmatprep.mubr.bf16.mxu0 %v1403
      %1547 = vmatmul.mubr.bf16.gmra.mrb[0].mxu0 %v1402
      %v1548 = vpop.f32.mrb[0].mxu0
      %v1549 = vadd.f32 0.0, %v1548
      %v1550 = vpop.f32.mrb[0].mxu0
      %v1551 = vpop.f32.mrb[0].mxu0
      %v1552 = vadd.f32 0.0, %v1551
      %v1553 = vpop.f32.mrb[0].mxu0
      %1554 = vmatprep.mubr.bf16.mxu0 %v1405
      %1555 = vmatmul.mubr.bf16.gmra.mrb[0].mxu0 %v1404
      %v1556 = vpop.f32.mrb[0].mxu0
      %v1557 = vadd.f32 0.0, %v1556
      %v1558 = vpop.f32.mrb[0].mxu0
      %v1559 = vpop.f32.mrb[0].mxu0
      %v1560 = vadd.f32 0.0, %v1559
      %v1561 = vpop.f32.mrb[0].mxu0
      %1562 = vmatprep.mubr.bf16.mxu0 %v1407
      %1563 = vmatmul.mubr.bf16.gmra.mrb[0].mxu0 %v1406
      %v1564 = vpop.f32.mrb[0].mxu0
      %v1565 = vadd.f32 0.0, %v1564
      %v1566 = vpop.f32.mrb[0].mxu0
      %v1567 = vpop.f32.mrb[0].mxu0
      %v1568 = vadd.f32 0.0, %v1567
      %v1569 = vpop.f32.mrb[0].mxu0
      %1570 = vmatprep.mubr.bf16.mxu0 %v1409
      %1571 = vmatmul.mubr.bf16.gmra.mrb[0].mxu0 %v1408
      %v1572 = vpop.f32.mrb[0].mxu0
      %v1573 = vadd.f32 0.0, %v1572
      %v1574 = vpop.f32.mrb[0].mxu0
      %v1575 = vpop.f32.mrb[0].mxu0
      %v1576 = vadd.f32 0.0, %v1575
      %v1577 = vpop.f32.mrb[0].mxu0
      %1578 = vdwg.mxu0
      %v1579 = vadd.f32 %v1345, %v1549
      %v1580 = vadd.f32 %v1346, %v1552
      %v1581 = vadd.f32 %v1347, %v1557
      %v1582 = vadd.f32 %v1348, %v1560
      %v1583 = vadd.f32 %v1349, %v1565
      %v1584 = vadd.f32 %v1350, %v1568
      %v1585 = vadd.f32 %v1351, %v1573
      %v1586 = vadd.f32 %v1352, %v1576
      %s1587 = scalar_lea.vmem %s241, 640
      %v1588 = vld [vmem:[%s1587] sm:$0xf]
      %v1589 = vld [vmem:[%s1587 + $0x4] sm:$0xf]
      %v1590 = vld [vmem:[%s1587 + $0x8] sm:$0xf]
      %v1591 = vld [vmem:[%s1587 + $0xc] sm:$0xf]
      %v1592 = vld [vmem:[%s1587 + $0x10] sm:$0xf]
      %v1593 = vld [vmem:[%s1587 + $0x14] sm:$0xf]
      %v1594 = vld [vmem:[%s1587 + $0x18] sm:$0xf]
      %v1595 = vld [vmem:[%s1587 + $0x1c] sm:$0xf]
      %v1596 = vld [vmem:[%s1587 + $0x20] sm:$0xf]
      %v1597 = vld [vmem:[%s1587 + $0x24] sm:$0xf]
      %v1598 = vld [vmem:[%s1587 + $0x28] sm:$0xf]
      %v1599 = vld [vmem:[%s1587 + $0x2c] sm:$0xf]
      %v1600 = vld [vmem:[%s1587 + $0x30] sm:$0xf]
      %v1601 = vld [vmem:[%s1587 + $0x34] sm:$0xf]
      %v1602 = vld [vmem:[%s1587 + $0x38] sm:$0xf]
      %v1603 = vld [vmem:[%s1587 + $0x3c] sm:$0xf]
      %v1604 = vld [vmem:[%s1587 + $0x40] sm:$0xf]
      %v1605 = vld [vmem:[%s1587 + $0x44] sm:$0xf]
      %v1606 = vld [vmem:[%s1587 + $0x48] sm:$0xf]
      %v1607 = vld [vmem:[%s1587 + $0x4c] sm:$0xf]
      %v1608 = vld [vmem:[%s1587 + $0x50] sm:$0xf]
      %v1609 = vld [vmem:[%s1587 + $0x54] sm:$0xf]
      %v1610 = vld [vmem:[%s1587 + $0x58] sm:$0xf]
      %v1611 = vld [vmem:[%s1587 + $0x5c] sm:$0xf]
      %v1612 = vld [vmem:[%s1587 + $0x60] sm:$0xf]
      %v1613 = vld [vmem:[%s1587 + $0x64] sm:$0xf]
      %v1614 = vld [vmem:[%s1587 + $0x68] sm:$0xf]
      %v1615 = vld [vmem:[%s1587 + $0x6c] sm:$0xf]
      %v1616 = vld [vmem:[%s1587 + $0x70] sm:$0xf]
      %v1617 = vld [vmem:[%s1587 + $0x74] sm:$0xf]
      %v1618 = vld [vmem:[%s1587 + $0x78] sm:$0xf]
      %v1619 = vld [vmem:[%s1587 + $0x7c] sm:$0xf]
      %v1621 = vrot.slane %v277, 5
      %v1622 = vrot.slane %v1621, 4
      %v1623 = vrot.slane %v278, 5
      %v1624 = vsel %vm898, %v1622, %v1623
      %v1625 = vunpack.c.l.b16 %v1624
      %v1626 = vunpack.c.h.b16 %v1624
      %v1627 = vpack.c.b16 %v935, %v933
      %v1628 = vpack.c.b16 %v936, %v934
      %v1629 = vpack.c.b16 %v939, %v937
      %v1630 = vpack.c.b16 %v940, %v938
      %v1631 = vpack.c.b16 %v943, %v941
      %v1632 = vpack.c.b16 %v944, %v942
      %v1633 = vpack.c.b16 %v1625, %v945
      %v1634 = vpack.c.b16 %v1626, %v946
      %v1675 = vunpack.c.l.b16 %v1588
      %v1676 = vunpack.c.l.b16 %v1589
      %v1677 = vunpack.c.l.b16 %v1590
      %v1678 = vunpack.c.l.b16 %v1591
      %v1679 = vunpack.c.l.b16 %v1592
      %v1680 = vunpack.c.l.b16 %v1593
      %v1681 = vunpack.c.l.b16 %v1594
      %v1682 = vunpack.c.l.b16 %v1595
      %v1683 = vunpack.c.l.b16 %v1596
      %v1684 = vunpack.c.l.b16 %v1597
      %v1685 = vunpack.c.l.b16 %v1598
      %v1686 = vunpack.c.l.b16 %v1599
      %v1687 = vunpack.c.l.b16 %v1600
      %v1688 = vunpack.c.l.b16 %v1601
      %v1689 = vunpack.c.l.b16 %v1602
      %v1690 = vunpack.c.l.b16 %v1603
      %v1691 = vunpack.c.l.b16 %v1604
      %v1692 = vunpack.c.l.b16 %v1605
      %v1693 = vunpack.c.l.b16 %v1606
      %v1694 = vunpack.c.l.b16 %v1607
      %v1695 = vunpack.c.l.b16 %v1608
      %v1696 = vunpack.c.l.b16 %v1609
      %v1697 = vunpack.c.l.b16 %v1610
      %v1698 = vunpack.c.l.b16 %v1611
      %v1699 = vunpack.c.l.b16 %v1612
      %v1700 = vunpack.c.l.b16 %v1613
      %v1701 = vunpack.c.l.b16 %v1614
      %v1702 = vunpack.c.l.b16 %v1615
      %v1703 = vunpack.c.l.b16 %v1616
      %v1704 = vunpack.c.l.b16 %v1617
      %v1705 = vunpack.c.l.b16 %v1618
      %v1706 = vunpack.c.l.b16 %v1619
      %v1707 = vpack.c.b16 %v1676, %v1675
      %v1708 = vpack.c.b16 %v1678, %v1677
      %v1709 = vpack.c.b16 %v1680, %v1679
      %v1710 = vpack.c.b16 %v1682, %v1681
      %v1711 = vpack.c.b16 %v1684, %v1683
      %v1712 = vpack.c.b16 %v1686, %v1685
      %v1713 = vpack.c.b16 %v1688, %v1687
      %v1714 = vpack.c.b16 %v1690, %v1689
      %v1715 = vpack.c.b16 %v1692, %v1691
      %v1716 = vpack.c.b16 %v1694, %v1693
      %v1717 = vpack.c.b16 %v1696, %v1695
      %v1718 = vpack.c.b16 %v1698, %v1697
      %v1719 = vpack.c.b16 %v1700, %v1699
      %v1720 = vpack.c.b16 %v1702, %v1701
      %v1721 = vpack.c.b16 %v1704, %v1703
      %v1722 = vpack.c.b16 %v1706, %v1705
      %1739 = vmatprep.subr.bf16.mxu0 0
      %1740 = vmatpush1.bf16.msra.mxu0 %v1707
      %1741 = vmatprep.subr.bf16.mxu0 0
      %1742 = vmatpush1.bf16.msra.mxu0 %v1708
      %1743 = vmatprep.subr.bf16.mxu0 0
      %1744 = vmatpush1.bf16.msra.mxu0 %v1709
      %1745 = vmatprep.subr.bf16.mxu0 0
      %1746 = vmatpush1.bf16.msra.mxu0 %v1710
      %1747 = vmatprep.subr.bf16.mxu0 0
      %1748 = vmatpush1.bf16.msra.mxu0 %v1711
      %1749 = vmatprep.subr.bf16.mxu0 0
      %1750 = vmatpush1.bf16.msra.mxu0 %v1712
      %1751 = vmatprep.subr.bf16.mxu0 0
      %1752 = vmatpush1.bf16.msra.mxu0 %v1713
      %1753 = vmatprep.subr.bf16.mxu0 0
      %1754 = vmatpush1.bf16.msra.mxu0 %v1714
      %1755 = vmatprep.subr.bf16.mxu0 0
      %1756 = vmatpush1.bf16.msra.mxu0 %v1715
      %1757 = vmatprep.subr.bf16.mxu0 0
      %1758 = vmatpush1.bf16.msra.mxu0 %v1716
      %1759 = vmatprep.subr.bf16.mxu0 0
      %1760 = vmatpush1.bf16.msra.mxu0 %v1717
      %1761 = vmatprep.subr.bf16.mxu0 0
      %1762 = vmatpush1.bf16.msra.mxu0 %v1718
      %1763 = vmatprep.subr.bf16.mxu0 0
      %1764 = vmatpush1.bf16.msra.mxu0 %v1719
      %1765 = vmatprep.subr.bf16.mxu0 0
      %1766 = vmatpush1.bf16.msra.mxu0 %v1720
      %1767 = vmatprep.subr.bf16.mxu0 0
      %1768 = vmatpush1.bf16.msra.mxu0 %v1721
      %1769 = vmatprep.subr.bf16.mxu0 0
      %1770 = vmatpush1.bf16.msra.mxu0 %v1722
      %1771 = vmatprep.mubr.bf16.mxu0 %v1628
      %1772 = vmatmul.mubr.bf16.gmra.mrb[0].mxu0 %v1627
      %v1773 = vpop.f32.mrb[0].mxu0
      %v1774 = vadd.f32 0.0, %v1773
      %v1775 = vpop.f32.mrb[0].mxu0
      %v1776 = vpop.f32.mrb[0].mxu0
      %v1777 = vadd.f32 0.0, %v1776
      %v1778 = vpop.f32.mrb[0].mxu0
      %1779 = vmatprep.mubr.bf16.mxu0 %v1630
      %1780 = vmatmul.mubr.bf16.gmra.mrb[0].mxu0 %v1629
      %v1781 = vpop.f32.mrb[0].mxu0
      %v1782 = vadd.f32 0.0, %v1781
      %v1783 = vpop.f32.mrb[0].mxu0
      %v1784 = vpop.f32.mrb[0].mxu0
      %v1785 = vadd.f32 0.0, %v1784
      %v1786 = vpop.f32.mrb[0].mxu0
      %1787 = vmatprep.mubr.bf16.mxu0 %v1632
      %1788 = vmatmul.mubr.bf16.gmra.mrb[0].mxu0 %v1631
      %v1789 = vpop.f32.mrb[0].mxu0
      %v1790 = vadd.f32 0.0, %v1789
      %v1791 = vpop.f32.mrb[0].mxu0
      %v1792 = vpop.f32.mrb[0].mxu0
      %v1793 = vadd.f32 0.0, %v1792
      %v1794 = vpop.f32.mrb[0].mxu0
      %1795 = vmatprep.mubr.bf16.mxu0 %v1634
      %1796 = vmatmul.mubr.bf16.gmra.mrb[0].mxu0 %v1633
      %v1797 = vpop.f32.mrb[0].mxu0
      %v1798 = vadd.f32 0.0, %v1797
      %v1799 = vpop.f32.mrb[0].mxu0
      %v1800 = vpop.f32.mrb[0].mxu0
      %v1801 = vadd.f32 0.0, %v1800
      %v1802 = vpop.f32.mrb[0].mxu0
      %1803 = vdwg.mxu0
      %v1804 = vadd.f32 %v1579, %v1774
      %v1805 = vadd.f32 %v1580, %v1777
      %v1806 = vadd.f32 %v1581, %v1782
      %v1807 = vadd.f32 %v1582, %v1785
      %v1808 = vadd.f32 %v1583, %v1790
      %v1809 = vadd.f32 %v1584, %v1793
      %v1810 = vadd.f32 %v1585, %v1798
      %v1811 = vadd.f32 %v1586, %v1801
      %s1812 = scalar_lea.vmem %s241, 768
      %v1813 = vld [vmem:[%s1812] sm:$0xf]
      %v1814 = vld [vmem:[%s1812 + $0x4] sm:$0xf]
      %v1815 = vld [vmem:[%s1812 + $0x8] sm:$0xf]
      %v1816 = vld [vmem:[%s1812 + $0xc] sm:$0xf]
      %v1817 = vld [vmem:[%s1812 + $0x10] sm:$0xf]
      %v1818 = vld [vmem:[%s1812 + $0x14] sm:$0xf]
      %v1819 = vld [vmem:[%s1812 + $0x18] sm:$0xf]
      %v1820 = vld [vmem:[%s1812 + $0x1c] sm:$0xf]
      %v1821 = vld [vmem:[%s1812 + $0x20] sm:$0xf]
      %v1822 = vld [vmem:[%s1812 + $0x24] sm:$0xf]
      %v1823 = vld [vmem:[%s1812 + $0x28] sm:$0xf]
      %v1824 = vld [vmem:[%s1812 + $0x2c] sm:$0xf]
      %v1825 = vld [vmem:[%s1812 + $0x30] sm:$0xf]
      %v1826 = vld [vmem:[%s1812 + $0x34] sm:$0xf]
      %v1827 = vld [vmem:[%s1812 + $0x38] sm:$0xf]
      %v1828 = vld [vmem:[%s1812 + $0x3c] sm:$0xf]
      %v1829 = vld [vmem:[%s1812 + $0x40] sm:$0xf]
      %v1830 = vld [vmem:[%s1812 + $0x44] sm:$0xf]
      %v1831 = vld [vmem:[%s1812 + $0x48] sm:$0xf]
      %v1832 = vld [vmem:[%s1812 + $0x4c] sm:$0xf]
      %v1833 = vld [vmem:[%s1812 + $0x50] sm:$0xf]
      %v1834 = vld [vmem:[%s1812 + $0x54] sm:$0xf]
      %v1835 = vld [vmem:[%s1812 + $0x58] sm:$0xf]
      %v1836 = vld [vmem:[%s1812 + $0x5c] sm:$0xf]
      %v1837 = vld [vmem:[%s1812 + $0x60] sm:$0xf]
      %v1838 = vld [vmem:[%s1812 + $0x64] sm:$0xf]
      %v1839 = vld [vmem:[%s1812 + $0x68] sm:$0xf]
      %v1840 = vld [vmem:[%s1812 + $0x6c] sm:$0xf]
      %v1841 = vld [vmem:[%s1812 + $0x70] sm:$0xf]
      %v1842 = vld [vmem:[%s1812 + $0x74] sm:$0xf]
      %v1843 = vld [vmem:[%s1812 + $0x78] sm:$0xf]
      %v1844 = vld [vmem:[%s1812 + $0x7c] sm:$0xf]
      %v1846 = vunpack.c.l.b16 %v279
      %v1847 = vunpack.c.h.b16 %v279
      %v1848 = vpack.c.b16 %v1846, %v1166
      %v1849 = vpack.c.b16 %v1847, %v1167
      %v1884 = vunpack.c.l.b16 %v1813
      %v1885 = vunpack.c.l.b16 %v1814
      %v1886 = vunpack.c.l.b16 %v1815
      %v1887 = vunpack.c.l.b16 %v1816
      %v1888 = vunpack.c.l.b16 %v1817
      %v1889 = vunpack.c.l.b16 %v1818
      %v1890 = vunpack.c.l.b16 %v1819
      %v1891 = vunpack.c.l.b16 %v1820
      %v1892 = vunpack.c.l.b16 %v1821
      %v1893 = vunpack.c.l.b16 %v1822
      %v1894 = vunpack.c.l.b16 %v1823
      %v1895 = vunpack.c.l.b16 %v1824
      %v1896 = vunpack.c.l.b16 %v1825
      %v1897 = vunpack.c.l.b16 %v1826
      %v1898 = vunpack.c.l.b16 %v1827
      %v1899 = vunpack.c.l.b16 %v1828
      %v1900 = vunpack.c.l.b16 %v1829
      %v1901 = vunpack.c.l.b16 %v1830
      %v1902 = vunpack.c.l.b16 %v1831
      %v1903 = vunpack.c.l.b16 %v1832
      %v1904 = vunpack.c.l.b16 %v1833
      %v1905 = vunpack.c.l.b16 %v1834
      %v1906 = vunpack.c.l.b16 %v1835
      %v1907 = vunpack.c.l.b16 %v1836
      %v1908 = vunpack.c.l.b16 %v1837
      %v1909 = vunpack.c.l.b16 %v1838
      %v1910 = vunpack.c.l.b16 %v1839
      %v1911 = vunpack.c.l.b16 %v1840
      %v1912 = vunpack.c.l.b16 %v1841
      %v1913 = vunpack.c.l.b16 %v1842
      %v1914 = vunpack.c.l.b16 %v1843
      %v1915 = vunpack.c.l.b16 %v1844
      %v1916 = vpack.c.b16 %v1885, %v1884
      %v1917 = vpack.c.b16 %v1887, %v1886
      %v1918 = vpack.c.b16 %v1889, %v1888
      %v1919 = vpack.c.b16 %v1891, %v1890
      %v1920 = vpack.c.b16 %v1893, %v1892
      %v1921 = vpack.c.b16 %v1895, %v1894
      %v1922 = vpack.c.b16 %v1897, %v1896
      %v1923 = vpack.c.b16 %v1899, %v1898
      %v1924 = vpack.c.b16 %v1901, %v1900
      %v1925 = vpack.c.b16 %v1903, %v1902
      %v1926 = vpack.c.b16 %v1905, %v1904
      %v1927 = vpack.c.b16 %v1907, %v1906
      %v1928 = vpack.c.b16 %v1909, %v1908
      %v1929 = vpack.c.b16 %v1911, %v1910
      %v1930 = vpack.c.b16 %v1913, %v1912
      %v1931 = vpack.c.b16 %v1915, %v1914
      %1948 = vmatprep.subr.bf16.mxu0 0
      %1949 = vmatpush1.bf16.msra.mxu0 %v1916
      %1950 = vmatprep.subr.bf16.mxu0 0
      %1951 = vmatpush1.bf16.msra.mxu0 %v1917
      %1952 = vmatprep.subr.bf16.mxu0 0
      %1953 = vmatpush1.bf16.msra.mxu0 %v1918
      %1954 = vmatprep.subr.bf16.mxu0 0
      %1955 = vmatpush1.bf16.msra.mxu0 %v1919
      %1956 = vmatprep.subr.bf16.mxu0 0
      %1957 = vmatpush1.bf16.msra.mxu0 %v1920
      %1958 = vmatprep.subr.bf16.mxu0 0
      %1959 = vmatpush1.bf16.msra.mxu0 %v1921
      %1960 = vmatprep.subr.bf16.mxu0 0
      %1961 = vmatpush1.bf16.msra.mxu0 %v1922
      %1962 = vmatprep.subr.bf16.mxu0 0
      %1963 = vmatpush1.bf16.msra.mxu0 %v1923
      %1964 = vmatprep.subr.bf16.mxu0 0
      %1965 = vmatpush1.bf16.msra.mxu0 %v1924
      %1966 = vmatprep.subr.bf16.mxu0 0
      %1967 = vmatpush1.bf16.msra.mxu0 %v1925
      %1968 = vmatprep.subr.bf16.mxu0 0
      %1969 = vmatpush1.bf16.msra.mxu0 %v1926
      %1970 = vmatprep.subr.bf16.mxu0 0
      %1971 = vmatpush1.bf16.msra.mxu0 %v1927
      %1972 = vmatprep.subr.bf16.mxu0 0
      %1973 = vmatpush1.bf16.msra.mxu0 %v1928
      %1974 = vmatprep.subr.bf16.mxu0 0
      %1975 = vmatpush1.bf16.msra.mxu0 %v1929
      %1976 = vmatprep.subr.bf16.mxu0 0
      %1977 = vmatpush1.bf16.msra.mxu0 %v1930
      %1978 = vmatprep.subr.bf16.mxu0 0
      %1979 = vmatpush1.bf16.msra.mxu0 %v1931
      %1980 = vmatprep.mubr.bf16.mxu0 %v681
      %1981 = vmatmul.mubr.bf16.gmra.mrb[0].mxu0 %v680
      %v1982 = vpop.f32.mrb[0].mxu0
      %v1983 = vadd.f32 0.0, %v1982
      %v1984 = vpop.f32.mrb[0].mxu0
      %v1985 = vpop.f32.mrb[0].mxu0
      %v1986 = vadd.f32 0.0, %v1985
      %v1987 = vpop.f32.mrb[0].mxu0
      %1988 = vmatprep.mubr.bf16.mxu0 %v683
      %1989 = vmatmul.mubr.bf16.gmra.mrb[0].mxu0 %v682
      %v1990 = vpop.f32.mrb[0].mxu0
      %v1991 = vadd.f32 0.0, %v1990
      %v1992 = vpop.f32.mrb[0].mxu0
      %v1993 = vpop.f32.mrb[0].mxu0
      %v1994 = vadd.f32 0.0, %v1993
      %v1995 = vpop.f32.mrb[0].mxu0
      %1996 = vmatprep.mubr.bf16.mxu0 %v685
      %1997 = vmatmul.mubr.bf16.gmra.mrb[0].mxu0 %v684
      %v1998 = vpop.f32.mrb[0].mxu0
      %v1999 = vadd.f32 0.0, %v1998
      %v2000 = vpop.f32.mrb[0].mxu0
      %v2001 = vpop.f32.mrb[0].mxu0
      %v2002 = vadd.f32 0.0, %v2001
      %v2003 = vpop.f32.mrb[0].mxu0
      %2004 = vmatprep.mubr.bf16.mxu0 %v1849
      %2005 = vmatmul.mubr.bf16.gmra.mrb[0].mxu0 %v1848
      %v2006 = vpop.f32.mrb[0].mxu0
      %v2007 = vadd.f32 0.0, %v2006
      %v2008 = vpop.f32.mrb[0].mxu0
      %v2009 = vpop.f32.mrb[0].mxu0
      %v2010 = vadd.f32 0.0, %v2009
      %v2011 = vpop.f32.mrb[0].mxu0
      %2012 = vdwg.mxu0
      %v2013 = vadd.f32 %v1804, %v1983
      %v2014 = vadd.f32 %v1805, %v1986
      %v2015 = vadd.f32 %v1806, %v1991
      %v2016 = vadd.f32 %v1807, %v1994
      %v2017 = vadd.f32 %v1808, %v1999
      %v2018 = vadd.f32 %v1809, %v2002
      %v2019 = vadd.f32 %v1810, %v2007
      %v2020 = vadd.f32 %v1811, %v2010
      %s2021 = scalar_lea.vmem %s241, 896
      %v2022 = vld [vmem:[%s2021] sm:$0xf]
      %v2023 = vld [vmem:[%s2021 + $0x4] sm:$0xf]
      %v2024 = vld [vmem:[%s2021 + $0x8] sm:$0xf]
      %v2025 = vld [vmem:[%s2021 + $0xc] sm:$0xf]
      %v2026 = vld [vmem:[%s2021 + $0x10] sm:$0xf]
      %v2027 = vld [vmem:[%s2021 + $0x14] sm:$0xf]
      %v2028 = vld [vmem:[%s2021 + $0x18] sm:$0xf]
      %v2029 = vld [vmem:[%s2021 + $0x1c] sm:$0xf]
      %v2030 = vld [vmem:[%s2021 + $0x20] sm:$0xf]
      %v2031 = vld [vmem:[%s2021 + $0x24] sm:$0xf]
      %v2032 = vld [vmem:[%s2021 + $0x28] sm:$0xf]
      %v2033 = vld [vmem:[%s2021 + $0x2c] sm:$0xf]
      %v2034 = vld [vmem:[%s2021 + $0x30] sm:$0xf]
      %v2035 = vld [vmem:[%s2021 + $0x34] sm:$0xf]
      %v2036 = vld [vmem:[%s2021 + $0x38] sm:$0xf]
      %v2037 = vld [vmem:[%s2021 + $0x3c] sm:$0xf]
      %v2038 = vld [vmem:[%s2021 + $0x40] sm:$0xf]
      %v2039 = vld [vmem:[%s2021 + $0x44] sm:$0xf]
      %v2040 = vld [vmem:[%s2021 + $0x48] sm:$0xf]
      %v2041 = vld [vmem:[%s2021 + $0x4c] sm:$0xf]
      %v2042 = vld [vmem:[%s2021 + $0x50] sm:$0xf]
      %v2043 = vld [vmem:[%s2021 + $0x54] sm:$0xf]
      %v2044 = vld [vmem:[%s2021 + $0x58] sm:$0xf]
      %v2045 = vld [vmem:[%s2021 + $0x5c] sm:$0xf]
      %v2046 = vld [vmem:[%s2021 + $0x60] sm:$0xf]
      %v2047 = vld [vmem:[%s2021 + $0x64] sm:$0xf]
      %v2048 = vld [vmem:[%s2021 + $0x68] sm:$0xf]
      %v2049 = vld [vmem:[%s2021 + $0x6c] sm:$0xf]
      %v2050 = vld [vmem:[%s2021 + $0x70] sm:$0xf]
      %v2051 = vld [vmem:[%s2021 + $0x74] sm:$0xf]
      %v2052 = vld [vmem:[%s2021 + $0x78] sm:$0xf]
      %v2053 = vld [vmem:[%s2021 + $0x7c] sm:$0xf]
      %v2055 = vshrl.u32 %v279, 16
      %v2057 = vrot.slane %v2055, 4
      %v2058 = vshll.u32 %v279, 16
      %v2060 = vrot.slane %v2058, 5
      %v2061 = vor.u32 %v2057, %v2060
      %v2062 = vrot.slane %v2061, 4
      %v2064 = vshll.u32 %v280, 16
      %v2066 = vrot.slane %v2064, 5
      %v2067 = vsel %vm348, %v2062, %v2066
      %v2068 = vunpack.c.l.b16 %v2067
      %v2069 = vunpack.c.h.b16 %v2067
      %v2070 = vpack.c.b16 %v2068, %v1400
      %v2071 = vpack.c.b16 %v2069, %v1401
      %v2106 = vunpack.c.l.b16 %v2022
      %v2107 = vunpack.c.l.b16 %v2023
      %v2108 = vunpack.c.l.b16 %v2024
      %v2109 = vunpack.c.l.b16 %v2025
      %v2110 = vunpack.c.l.b16 %v2026
      %v2111 = vunpack.c.l.b16 %v2027
      %v2112 = vunpack.c.l.b16 %v2028
      %v2113 = vunpack.c.l.b16 %v2029
      %v2114 = vunpack.c.l.b16 %v2030
      %v2115 = vunpack.c.l.b16 %v2031
      %v2116 = vunpack.c.l.b16 %v2032
      %v2117 = vunpack.c.l.b16 %v2033
      %v2118 = vunpack.c.l.b16 %v2034
      %v2119 = vunpack.c.l.b16 %v2035
      %v2120 = vunpack.c.l.b16 %v2036
      %v2121 = vunpack.c.l.b16 %v2037
      %v2122 = vunpack.c.l.b16 %v2038
      %v2123 = vunpack.c.l.b16 %v2039
      %v2124 = vunpack.c.l.b16 %v2040
      %v2125 = vunpack.c.l.b16 %v2041
      %v2126 = vunpack.c.l.b16 %v2042
      %v2127 = vunpack.c.l.b16 %v2043
      %v2128 = vunpack.c.l.b16 %v2044
      %v2129 = vunpack.c.l.b16 %v2045
      %v2130 = vunpack.c.l.b16 %v2046
      %v2131 = vunpack.c.l.b16 %v2047
      %v2132 = vunpack.c.l.b16 %v2048
      %v2133 = vunpack.c.l.b16 %v2049
      %v2134 = vunpack.c.l.b16 %v2050
      %v2135 = vunpack.c.l.b16 %v2051
      %v2136 = vunpack.c.l.b16 %v2052
      %v2137 = vunpack.c.l.b16 %v2053
      %v2138 = vpack.c.b16 %v2107, %v2106
      %v2139 = vpack.c.b16 %v2109, %v2108
      %v2140 = vpack.c.b16 %v2111, %v2110
      %v2141 = vpack.c.b16 %v2113, %v2112
      %v2142 = vpack.c.b16 %v2115, %v2114
      %v2143 = vpack.c.b16 %v2117, %v2116
      %v2144 = vpack.c.b16 %v2119, %v2118
      %v2145 = vpack.c.b16 %v2121, %v2120
      %v2146 = vpack.c.b16 %v2123, %v2122
      %v2147 = vpack.c.b16 %v2125, %v2124
      %v2148 = vpack.c.b16 %v2127, %v2126
      %v2149 = vpack.c.b16 %v2129, %v2128
      %v2150 = vpack.c.b16 %v2131, %v2130
      %v2151 = vpack.c.b16 %v2133, %v2132
      %v2152 = vpack.c.b16 %v2135, %v2134
      %v2153 = vpack.c.b16 %v2137, %v2136
      %2170 = vmatprep.subr.bf16.mxu0 0
      %2171 = vmatpush1.bf16.msra.mxu0 %v2138
      %2172 = vmatprep.subr.bf16.mxu0 0
      %2173 = vmatpush1.bf16.msra.mxu0 %v2139
      %2174 = vmatprep.subr.bf16.mxu0 0
      %2175 = vmatpush1.bf16.msra.mxu0 %v2140
      %2176 = vmatprep.subr.bf16.mxu0 0
      %2177 = vmatpush1.bf16.msra.mxu0 %v2141
      %2178 = vmatprep.subr.bf16.mxu0 0
      %2179 = vmatpush1.bf16.msra.mxu0 %v2142
      %2180 = vmatprep.subr.bf16.mxu0 0
      %2181 = vmatpush1.bf16.msra.mxu0 %v2143
      %2182 = vmatprep.subr.bf16.mxu0 0
      %2183 = vmatpush1.bf16.msra.mxu0 %v2144
      %2184 = vmatprep.subr.bf16.mxu0 0
      %2185 = vmatpush1.bf16.msra.mxu0 %v2145
      %2186 = vmatprep.subr.bf16.mxu0 0
      %2187 = vmatpush1.bf16.msra.mxu0 %v2146
      %2188 = vmatprep.subr.bf16.mxu0 0
      %2189 = vmatpush1.bf16.msra.mxu0 %v2147
      %2190 = vmatprep.subr.bf16.mxu0 0
      %2191 = vmatpush1.bf16.msra.mxu0 %v2148
      %2192 = vmatprep.subr.bf16.mxu0 0
      %2193 = vmatpush1.bf16.msra.mxu0 %v2149
      %2194 = vmatprep.subr.bf16.mxu0 0
      %2195 = vmatpush1.bf16.msra.mxu0 %v2150
      %2196 = vmatprep.subr.bf16.mxu0 0
      %2197 = vmatpush1.bf16.msra.mxu0 %v2151
      %2198 = vmatprep.subr.bf16.mxu0 0
      %2199 = vmatpush1.bf16.msra.mxu0 %v2152
      %2200 = vmatprep.subr.bf16.mxu0 0
      %2201 = vmatpush1.bf16.msra.mxu0 %v2153
      %2202 = vmatprep.mubr.bf16.mxu0 %v480
      %2203 = vmatmul.mubr.bf16.gmra.mrb[0].mxu0 %v479
      %v2204 = vpop.f32.mrb[0].mxu0
      %v2205 = vadd.f32 0.0, %v2204
      %v2206 = vpop.f32.mrb[0].mxu0
      %v2207 = vpop.f32.mrb[0].mxu0
      %v2208 = vadd.f32 0.0, %v2207
      %v2209 = vpop.f32.mrb[0].mxu0
      %2210 = vmatprep.mubr.bf16.mxu0 %v482
      %2211 = vmatmul.mubr.bf16.gmra.mrb[0].mxu0 %v481
      %v2212 = vpop.f32.mrb[0].mxu0
      %v2213 = vadd.f32 0.0, %v2212
      %v2214 = vpop.f32.mrb[0].mxu0
      %v2215 = vpop.f32.mrb[0].mxu0
      %v2216 = vadd.f32 0.0, %v2215
      %v2217 = vpop.f32.mrb[0].mxu0
      %2218 = vmatprep.mubr.bf16.mxu0 %v484
      %2219 = vmatmul.mubr.bf16.gmra.mrb[0].mxu0 %v483
      %v2220 = vpop.f32.mrb[0].mxu0
      %v2221 = vadd.f32 0.0, %v2220
      %v2222 = vpop.f32.mrb[0].mxu0
      %v2223 = vpop.f32.mrb[0].mxu0
      %v2224 = vadd.f32 0.0, %v2223
      %v2225 = vpop.f32.mrb[0].mxu0
      %2226 = vmatprep.mubr.bf16.mxu0 %v2071
      %2227 = vmatmul.mubr.bf16.gmra.mrb[0].mxu0 %v2070
      %v2228 = vpop.f32.mrb[0].mxu0
      %v2229 = vadd.f32 0.0, %v2228
      %v2230 = vpop.f32.mrb[0].mxu0
      %v2231 = vpop.f32.mrb[0].mxu0
      %v2232 = vadd.f32 0.0, %v2231
      %v2233 = vpop.f32.mrb[0].mxu0
      %2234 = vdwg.mxu0
      %v2235 = vadd.f32 %v2013, %v2205
      %v2236 = vadd.f32 %v2014, %v2208
      %v2237 = vadd.f32 %v2015, %v2213
      %v2238 = vadd.f32 %v2016, %v2216
      %v2239 = vadd.f32 %v2017, %v2221
      %v2240 = vadd.f32 %v2018, %v2224
      %v2241 = vadd.f32 %v2019, %v2229
      %v2242 = vadd.f32 %v2020, %v2232
      %s2243 = scalar_lea.vmem %s241, 1024
      %v2244 = vld [vmem:[%s2243] sm:$0xf]
      %v2245 = vld [vmem:[%s2243 + $0x4] sm:$0xf]
      %v2246 = vld [vmem:[%s2243 + $0x8] sm:$0xf]
      %v2247 = vld [vmem:[%s2243 + $0xc] sm:$0xf]
      %v2248 = vld [vmem:[%s2243 + $0x10] sm:$0xf]
      %v2249 = vld [vmem:[%s2243 + $0x14] sm:$0xf]
      %v2250 = vld [vmem:[%s2243 + $0x18] sm:$0xf]
      %v2251 = vld [vmem:[%s2243 + $0x1c] sm:$0xf]
      %v2252 = vld [vmem:[%s2243 + $0x20] sm:$0xf]
      %v2253 = vld [vmem:[%s2243 + $0x24] sm:$0xf]
      %v2254 = vld [vmem:[%s2243 + $0x28] sm:$0xf]
      %v2255 = vld [vmem:[%s2243 + $0x2c] sm:$0xf]
      %v2256 = vld [vmem:[%s2243 + $0x30] sm:$0xf]
      %v2257 = vld [vmem:[%s2243 + $0x34] sm:$0xf]
      %v2258 = vld [vmem:[%s2243 + $0x38] sm:$0xf]
      %v2259 = vld [vmem:[%s2243 + $0x3c] sm:$0xf]
      %v2260 = vld [vmem:[%s2243 + $0x40] sm:$0xf]
      %v2261 = vld [vmem:[%s2243 + $0x44] sm:$0xf]
      %v2262 = vld [vmem:[%s2243 + $0x48] sm:$0xf]
      %v2263 = vld [vmem:[%s2243 + $0x4c] sm:$0xf]
      %v2264 = vld [vmem:[%s2243 + $0x50] sm:$0xf]
      %v2265 = vld [vmem:[%s2243 + $0x54] sm:$0xf]
      %v2266 = vld [vmem:[%s2243 + $0x58] sm:$0xf]
      %v2267 = vld [vmem:[%s2243 + $0x5c] sm:$0xf]
      %v2268 = vld [vmem:[%s2243 + $0x60] sm:$0xf]
      %v2269 = vld [vmem:[%s2243 + $0x64] sm:$0xf]
      %v2270 = vld [vmem:[%s2243 + $0x68] sm:$0xf]
      %v2271 = vld [vmem:[%s2243 + $0x6c] sm:$0xf]
      %v2272 = vld [vmem:[%s2243 + $0x70] sm:$0xf]
      %v2273 = vld [vmem:[%s2243 + $0x74] sm:$0xf]
      %v2274 = vld [vmem:[%s2243 + $0x78] sm:$0xf]
      %v2275 = vld [vmem:[%s2243 + $0x7c] sm:$0xf]
      %v2277 = vrot.slane %v279, 5
      %v2278 = vrot.slane %v2277, 4
      %v2279 = vrot.slane %v280, 5
      %v2280 = vsel %vm898, %v2278, %v2279
      %v2281 = vunpack.c.l.b16 %v2280
      %v2282 = vunpack.c.h.b16 %v2280
      %v2283 = vpack.c.b16 %v2281, %v1625
      %v2284 = vpack.c.b16 %v2282, %v1626
      %v2319 = vunpack.c.l.b16 %v2244
      %v2320 = vunpack.c.l.b16 %v2245
      %v2321 = vunpack.c.l.b16 %v2246
      %v2322 = vunpack.c.l.b16 %v2247
      %v2323 = vunpack.c.l.b16 %v2248
      %v2324 = vunpack.c.l.b16 %v2249
      %v2325 = vunpack.c.l.b16 %v2250
      %v2326 = vunpack.c.l.b16 %v2251
      %v2327 = vunpack.c.l.b16 %v2252
      %v2328 = vunpack.c.l.b16 %v2253
      %v2329 = vunpack.c.l.b16 %v2254
      %v2330 = vunpack.c.l.b16 %v2255
      %v2331 = vunpack.c.l.b16 %v2256
      %v2332 = vunpack.c.l.b16 %v2257
      %v2333 = vunpack.c.l.b16 %v2258
      %v2334 = vunpack.c.l.b16 %v2259
      %v2335 = vunpack.c.l.b16 %v2260
      %v2336 = vunpack.c.l.b16 %v2261
      %v2337 = vunpack.c.l.b16 %v2262
      %v2338 = vunpack.c.l.b16 %v2263
      %v2339 = vunpack.c.l.b16 %v2264
      %v2340 = vunpack.c.l.b16 %v2265
      %v2341 = vunpack.c.l.b16 %v2266
      %v2342 = vunpack.c.l.b16 %v2267
      %v2343 = vunpack.c.l.b16 %v2268
      %v2344 = vunpack.c.l.b16 %v2269
      %v2345 = vunpack.c.l.b16 %v2270
      %v2346 = vunpack.c.l.b16 %v2271
      %v2347 = vunpack.c.l.b16 %v2272
      %v2348 = vunpack.c.l.b16 %v2273
      %v2349 = vunpack.c.l.b16 %v2274
      %v2350 = vunpack.c.l.b16 %v2275
      %v2351 = vpack.c.b16 %v2320, %v2319
      %v2352 = vpack.c.b16 %v2322, %v2321
      %v2353 = vpack.c.b16 %v2324, %v2323
      %v2354 = vpack.c.b16 %v2326, %v2325
      %v2355 = vpack.c.b16 %v2328, %v2327
      %v2356 = vpack.c.b16 %v2330, %v2329
      %v2357 = vpack.c.b16 %v2332, %v2331
      %v2358 = vpack.c.b16 %v2334, %v2333
      %v2359 = vpack.c.b16 %v2336, %v2335
      %v2360 = vpack.c.b16 %v2338, %v2337
      %v2361 = vpack.c.b16 %v2340, %v2339
      %v2362 = vpack.c.b16 %v2342, %v2341
      %v2363 = vpack.c.b16 %v2344, %v2343
      %v2364 = vpack.c.b16 %v2346, %v2345
      %v2365 = vpack.c.b16 %v2348, %v2347
      %v2366 = vpack.c.b16 %v2350, %v2349
      %2383 = vmatprep.subr.bf16.mxu0 0
      %2384 = vmatpush1.bf16.msra.mxu0 %v2351
      %2385 = vmatprep.subr.bf16.mxu0 0
      %2386 = vmatpush1.bf16.msra.mxu0 %v2352
      %2387 = vmatprep.subr.bf16.mxu0 0
      %2388 = vmatpush1.bf16.msra.mxu0 %v2353
      %2389 = vmatprep.subr.bf16.mxu0 0
      %2390 = vmatpush1.bf16.msra.mxu0 %v2354
      %2391 = vmatprep.subr.bf16.mxu0 0
      %2392 = vmatpush1.bf16.msra.mxu0 %v2355
      %2393 = vmatprep.subr.bf16.mxu0 0
      %2394 = vmatpush1.bf16.msra.mxu0 %v2356
      %2395 = vmatprep.subr.bf16.mxu0 0
      %2396 = vmatpush1.bf16.msra.mxu0 %v2357
      %2397 = vmatprep.subr.bf16.mxu0 0
      %2398 = vmatpush1.bf16.msra.mxu0 %v2358
      %2399 = vmatprep.subr.bf16.mxu0 0
      %2400 = vmatpush1.bf16.msra.mxu0 %v2359
      %2401 = vmatprep.subr.bf16.mxu0 0
      %2402 = vmatpush1.bf16.msra.mxu0 %v2360
      %2403 = vmatprep.subr.bf16.mxu0 0
      %2404 = vmatpush1.bf16.msra.mxu0 %v2361
      %2405 = vmatprep.subr.bf16.mxu0 0
      %2406 = vmatpush1.bf16.msra.mxu0 %v2362
      %2407 = vmatprep.subr.bf16.mxu0 0
      %2408 = vmatpush1.bf16.msra.mxu0 %v2363
      %2409 = vmatprep.subr.bf16.mxu0 0
      %2410 = vmatpush1.bf16.msra.mxu0 %v2364
      %2411 = vmatprep.subr.bf16.mxu0 0
      %2412 = vmatpush1.bf16.msra.mxu0 %v2365
      %2413 = vmatprep.subr.bf16.mxu0 0
      %2414 = vmatpush1.bf16.msra.mxu0 %v2366
      %2415 = vmatprep.mubr.bf16.mxu0 %v950
      %2416 = vmatmul.mubr.bf16.gmra.mrb[0].mxu0 %v949
      %v2417 = vpop.f32.mrb[0].mxu0
      %v2418 = vadd.f32 0.0, %v2417
      %v2419 = vpop.f32.mrb[0].mxu0
      %v2420 = vpop.f32.mrb[0].mxu0
      %v2421 = vadd.f32 0.0, %v2420
      %v2422 = vpop.f32.mrb[0].mxu0
      %2423 = vmatprep.mubr.bf16.mxu0 %v952
      %2424 = vmatmul.mubr.bf16.gmra.mrb[0].mxu0 %v951
      %v2425 = vpop.f32.mrb[0].mxu0
      %v2426 = vadd.f32 0.0, %v2425
      %v2427 = vpop.f32.mrb[0].mxu0
      %v2428 = vpop.f32.mrb[0].mxu0
      %v2429 = vadd.f32 0.0, %v2428
      %v2430 = vpop.f32.mrb[0].mxu0
      %2431 = vmatprep.mubr.bf16.mxu0 %v954
      %2432 = vmatmul.mubr.bf16.gmra.mrb[0].mxu0 %v953
      %v2433 = vpop.f32.mrb[0].mxu0
      %v2434 = vadd.f32 0.0, %v2433
      %v2435 = vpop.f32.mrb[0].mxu0
      %v2436 = vpop.f32.mrb[0].mxu0
      %v2437 = vadd.f32 0.0, %v2436
      %v2438 = vpop.f32.mrb[0].mxu0
      %2439 = vmatprep.mubr.bf16.mxu0 %v2284
      %2440 = vmatmul.mubr.bf16.gmra.mrb[0].mxu0 %v2283
      %v2441 = vpop.f32.mrb[0].mxu0
      %v2442 = vadd.f32 0.0, %v2441
      %v2443 = vpop.f32.mrb[0].mxu0
      %v2444 = vpop.f32.mrb[0].mxu0
      %v2445 = vadd.f32 0.0, %v2444
      %v2446 = vpop.f32.mrb[0].mxu0
      %2447 = vdwg.mxu0
      %v2448 = vadd.f32 %v2235, %v2418
      %v2449 = vadd.f32 %v2236, %v2421
      %v2450 = vadd.f32 %v2237, %v2426
      %v2451 = vadd.f32 %v2238, %v2429
      %v2452 = vadd.f32 %v2239, %v2434
      %v2453 = vadd.f32 %v2240, %v2437
      %v2454 = vadd.f32 %v2241, %v2442
      %v2455 = vadd.f32 %v2242, %v2445
      %v2456 = vld [vmem:[#allocation2] sm:$0xff]
      %v2457 = vld [vmem:[#allocation2 + $0x8] sm:$0xff]
      %v2458 = vld [vmem:[#allocation2 + $0x10] sm:$0xff]
      %v2459 = vld [vmem:[#allocation2 + $0x18] sm:$0xff]
      %v2460 = vld [vmem:[#allocation2 + $0x20] sm:$0xff]
      %v2461 = vld [vmem:[#allocation2 + $0x28] sm:$0xff]
      %v2462 = vld [vmem:[#allocation2 + $0x30] sm:$0xff]
      %v2463 = vld [vmem:[#allocation2 + $0x38] sm:$0xff]
      %v2464 = vadd.f32 %v2456, %v2448
      %v2465 = vadd.f32 %v2457, %v2449
      %v2466 = vadd.f32 %v2458, %v2450
      %v2467 = vadd.f32 %v2459, %v2451
      %v2468 = vadd.f32 %v2460, %v2452
      %v2469 = vadd.f32 %v2461, %v2453
      %v2470 = vadd.f32 %v2462, %v2454
      %v2471 = vadd.f32 %v2463, %v2455
      %2472 = vst [vmem:[#allocation2] sm:$0xff] %v2464
      %2473 = vst [vmem:[#allocation2 + $0x8] sm:$0xff] %v2465
      %2474 = vst [vmem:[#allocation2 + $0x10] sm:$0xff] %v2466
      %2475 = vst [vmem:[#allocation2 + $0x18] sm:$0xff] %v2467
      %2476 = vst [vmem:[#allocation2 + $0x20] sm:$0xff] %v2468
      %2477 = vst [vmem:[#allocation2 + $0x28] sm:$0xff] %v2469
      %2478 = vst [vmem:[#allocation2 + $0x30] sm:$0xff] %v2470
      %2479 = vst [vmem:[#allocation2 + $0x38] sm:$0xff] %v2471
      // Predicated region
      $region41: #{pointwise_spatial_attention.8} parent=35 // pred_check
        %p2480 = pneg %p249
      $region42: #{pointwise_spatial_attention.8} parent=35 // pred_check_branch
        %2482 = sbr.rel (%p2480) target = $region44
      $region43: #{pointwise_spatial_attention.8} parent=35 // pred_region
        %v2483 = vld [vmem:[#allocation2] sm:$0xff]
        %v2484 = vld [vmem:[#allocation2 + $0x8] sm:$0xff]
        %v2485 = vld [vmem:[#allocation2 + $0x10] sm:$0xff]
        %v2486 = vld [vmem:[#allocation2 + $0x18] sm:$0xff]
        %v2487 = vld [vmem:[#allocation2 + $0x20] sm:$0xff]
        %v2488 = vld [vmem:[#allocation2 + $0x28] sm:$0xff]
        %v2489 = vld [vmem:[#allocation2 + $0x30] sm:$0xff]
        %v2490 = vld [vmem:[#allocation2 + $0x38] sm:$0xff]
        %v2491 = vld [vmem:[%s2] sm:$0x1]
        %v2493 = vlaneseq
        %v2494 = vshrl.u32 %v2493, 7
        %v2495 = vsub.s32 0, %v2494
        %v2496 = vrot.slane %v2491, %v2495
        %v2498 = vmul.f32 %v2483, %v2496
        %v2499 = vmul.f32 %v2484, %v2496
        %v2500 = vmul.f32 %v2485, %v2496
        %v2501 = vmul.f32 %v2486, %v2496
        %v2502 = vmul.f32 %v2487, %v2496
        %v2503 = vmul.f32 %v2488, %v2496
        %v2504 = vmul.f32 %v2489, %v2496
        %v2505 = vmul.f32 %v2490, %v2496
        %v2506 = vld [vmem:[%s3] sm:$0x1]
        %v2508 = vlaneseq
        %v2509 = vshrl.u32 %v2508, 7
        %v2510 = vsub.s32 0, %v2509
        %v2511 = vrot.slane %v2506, %v2510
        %v2513 = vadd.f32 %v2498, %v2511
        %v2514 = vadd.f32 %v2499, %v2511
        %v2515 = vadd.f32 %v2500, %v2511
        %v2516 = vadd.f32 %v2501, %v2511
        %v2517 = vadd.f32 %v2502, %v2511
        %v2518 = vadd.f32 %v2503, %v2511
        %v2519 = vadd.f32 %v2504, %v2511
        %v2520 = vadd.f32 %v2505, %v2511
        %v2521 = vmax.f32 %v2513, 0.0
        %v2522 = vmax.f32 %v2514, 0.0
        %v2523 = vmax.f32 %v2515, 0.0
        %v2524 = vmax.f32 %v2516, 0.0
        %v2525 = vmax.f32 %v2517, 0.0
        %v2526 = vmax.f32 %v2518, 0.0
        %v2527 = vmax.f32 %v2519, 0.0
        %v2528 = vmax.f32 %v2520, 0.0
        %2529 = vst [vmem:[%s247] sm:$0xff] %v2521
        %2530 = vst [vmem:[%s247 + $0x8] sm:$0xff] %v2522
        %2531 = vst [vmem:[%s247 + $0x10] sm:$0xff] %v2523
        %2532 = vst [vmem:[%s247 + $0x18] sm:$0xff] %v2524
        %2533 = vst [vmem:[%s247 + $0x20] sm:$0xff] %v2525
        %2534 = vst [vmem:[%s247 + $0x28] sm:$0xff] %v2526
        %2535 = vst [vmem:[%s247 + $0x30] sm:$0xff] %v2527
        %2536 = vst [vmem:[%s247 + $0x38] sm:$0xff] %v2528
      $region44: #{pointwise_spatial_attention.8} parent=35 // pred_fallthru
        _
      %p2537 = scmp.lt.s32.totalorder %s19, 1
      %s2538 = scalar_select %p2537, %s19, 1
      %s2539 = smul.addr %s2538, 8
      %s2540 = smul.addr %s2539, 8
      %s2541 = scalar_lea.vmem %s4, %s2540
      // Predicated region
      $region45: #{pointwise_spatial_attention.8} parent=35 // pred_check
        %p2542 = pneg %p141
      $region46: #{pointwise_spatial_attention.8} parent=35 // pred_check_branch
        %2544 = sbr.rel (%p2542) target = $region48
      $region47: #{pointwise_spatial_attention.8} parent=35 // pred_region
        _
      $region48: #{pointwise_spatial_attention.8} parent=35 // pred_fallthru
        _
    $region36: #{pointwise_spatial_attention.8} parent=5 // pred_fallthru
      _
    %p2545 = scmp.le.s32.totalorder 2, %s10
    // Predicated region
    $region49: #{pointwise_spatial_attention.8} parent=5 // pred_check
      %p2546 = pneg %p2545
    $region50: #{pointwise_spatial_attention.8} parent=5 // pred_check_branch
      %2548 = sbr.rel (%p2546) target = $region52
    $region51: #{pointwise_spatial_attention.8} parent=5 // pred_region
      %s2549 = ssub.s32 %s10, 2
      // Predicated region
      $region53: #{pointwise_spatial_attention.8} parent=51 // pred_check
        %p2550 = pneg %p147
      $region54: #{pointwise_spatial_attention.8} parent=51 // pred_check_branch
        %2552 = sbr.rel (%p2550) target = $region56
      $region55: #{pointwise_spatial_attention.8} parent=51 // pred_region
        %p2553 = scmp.lt.s32.totalorder %s21, 1
        %s2554 = scalar_select %p2553, %s21, 1
        %s2555 = smul.addr %s2554, 8
        %s2556 = smul.addr %s2555, 8
        %s2557 = scalar_lea.vmem %s4, %s2556
      $region56: #{pointwise_spatial_attention.8} parent=51 // pred_fallthru
        _
    $region52: #{pointwise_spatial_attention.8} parent=5 // pred_fallthru
      _
  $region6: #{pointwise_spatial_attention.8} parent=0 // loop_footer
    %s14 = sadd.s32 1, %s10
  $region7: #{pointwise_spatial_attention.8} parent=0 // loop_footer_branch
    %9 = sbr.rel target = $region3
  $region8: #{pointwise_spatial_attention.8} parent=0 // loop_exit
    _

</llo_original>
